<compile_context>
chip_gen: v5e
topology: v5e:2x2
jax: 0.10.0
libtpu: 0.0.40
codegen_flags: <defaults>
</compile_context>

<pallas_src>
import math
from functools import partial

import jax
import jax.numpy as jnp
from jax import lax
from jax.experimental import pallas as pl
from jax.experimental.pallas import tpu as pltpu


# ----------------------------------------------------------------------------- VMEM budget
def _vmem_limit_bytes():
    # v5e/v6e: 128 MiB physical VMEM -> allow up to 96 MiB; v7x: 64 MiB -> cap at 48 MiB.
    try:
        cap = pltpu.get_tpu_info().vmem_capacity_bytes
    except Exception:
        cap = 64 * 1024 * 1024
    return int(min(96 * 1024 * 1024, cap * 3 // 4))


# ----------------------------------------------------------------------------- in-kernel helpers
def _layernorm(x, gamma, beta, eps=1e-12):
    # matches the repo's custom LayerNorm: mean / biased var over last dim, eps=1e-12 (f32 math)
    mean = jnp.mean(x, axis=-1, keepdims=True)
    var = jnp.mean(jnp.square(x - mean), axis=-1, keepdims=True)
    return gamma * ((x - mean) * lax.rsqrt(var + eps)) + beta


def _attention(q, k, v, bias, n_head):
    """q:[B,Tq,d] f32 (already scaled by 1/sqrt(dh) through the weights),
    k/v:[B,Tk,d] f32, bias:[B,Tq,Tk] f32 additive mask (== masked_fill(mask==0,-1e4)).
    Per-head lane slice, matmuls batched over the folded batch dim (MXU, f32 accumulate)."""
    d = q.shape[-1]
    dh = d // n_head
    q16 = q.astype(jnp.bfloat16)
    k16 = k.astype(jnp.bfloat16)
    v16 = v.astype(jnp.bfloat16)
    ctx = []
    # TODO(synk): when n_head is large, replace the per-head lane slices with one head-major
    #             relayout (pltpu.einshape) + a single batched dot_general over (batch*heads).
    for h in range(n_head):
        qh = q16[:, :, h * dh:(h + 1) * dh]
        kh = k16[:, :, h * dh:(h + 1) * dh]
        vh = v16[:, :, h * dh:(h + 1) * dh]
        s = jnp.einsum('btd,bsd->bts', qh, kh, preferred_element_type=jnp.float32)
        s = s + bias
        s = s - jnp.max(s, axis=-1, keepdims=True)
        p = jnp.exp(s)
        p = p * pl.reciprocal(jnp.sum(p, axis=-1, keepdims=True), approx=True)  # EUP reciprocal
        ctx.append(jnp.einsum('bts,bsd->btd', p.astype(jnp.bfloat16), vh,
                              preferred_element_type=jnp.float32))
    return jnp.concatenate(ctx, axis=-1)          # [B, Tq, d] f32


# ----------------------------------------------------------------------------- kernels
def decoder_stack_kernel(x_ref, enc_ref, tb_ref, sb_ref,
                         wqkv1, bqkv1, wo1,
                         wq2, wkv2, bkv2, wo2,
                         wf1, bf1, wf2, vecs,
                         out_ref, *, n_head):
    layer = pl.program_id(1)

    # activation is carried across the layer grid axis inside the resident output block
    @pl.when(layer == 0)
    def _():
        out_ref[...] = x_ref[...]

    x = out_ref[...]                       # [Bc, T, d] f32
    Bc, T, d = x.shape
    enc = enc_ref[...]                     # [Bc, S, d] f32
    S = enc.shape[1]
    tbias = tb_ref[...]                    # [Bc, T, T] additive mask bias
    sbias = sb_ref[...]                    # [Bc, T, S] additive mask bias
    vec = vecs[0]                          # [10, d]  packed small per-layer vectors

    # --- 1. masked self-attention + add & norm (dropout = identity) -------------------------
    xf = x.reshape(Bc * T, d).astype(jnp.bfloat16)
    qkv = jnp.dot(xf, wqkv1[0], preferred_element_type=jnp.float32) + bqkv1[0]   # [Bc*T, 3d]
    q = qkv[:, :d].reshape(Bc, T, d)
    k = qkv[:, d:2 * d].reshape(Bc, T, d)
    v = qkv[:, 2 * d:].reshape(Bc, T, d)
    ctx = _attention(q, k, v, tbias, n_head)
    a = jnp.dot(ctx.reshape(Bc * T, d).astype(jnp.bfloat16), wo1[0],
                preferred_element_type=jnp.float32) + vec[0:1]
    x = _layernorm(a.reshape(Bc, T, d) + x, vec[1:2], vec[2:3])

    # --- 2. encoder-decoder cross-attention + add & norm ------------------------------------
    xf = x.reshape(Bc * T, d).astype(jnp.bfloat16)
    q2 = (jnp.dot(xf, wq2[0], preferred_element_type=jnp.float32) + vec[3:4]).reshape(Bc, T, d)
    ef = enc.reshape(Bc * S, d).astype(jnp.bfloat16)
    kv = jnp.dot(ef, wkv2[0], preferred_element_type=jnp.float32) + bkv2[0]       # [Bc*S, 2d]
    k2 = kv[:, :d].reshape(Bc, S, d)
    v2 = kv[:, d:].reshape(Bc, S, d)
    ctx = _attention(q2, k2, v2, sbias, n_head)
    a = jnp.dot(ctx.reshape(Bc * T, d).astype(jnp.bfloat16), wo2[0],
                preferred_element_type=jnp.float32) + vec[4:5]
    x = _layernorm(a.reshape(Bc, T, d) + x, vec[5:6], vec[6:7])

    # --- 3. position-wise feed forward + add & norm ------------------------------------------
    xf = x.reshape(Bc * T, d).astype(jnp.bfloat16)
    h = jnp.dot(xf, wf1[0], preferred_element_type=jnp.float32) + bf1[0]
    h = jnp.maximum(h, 0.0)
    h = jnp.dot(h.astype(jnp.bfloat16), wf2[0], preferred_element_type=jnp.float32) + vec[7:8]
    x = _layernorm(h.reshape(Bc, T, d) + x, vec[8:9], vec[9:10])

    out_ref[...] = x
    # TODO(synk): for long sequences add a query-tile grid axis + online-softmax (flash-style)
    #             K/V loop so the [T,T] score tiles stay within v7x's 64 MiB VMEM.


def final_linear_kernel(x_ref, w_ref, b_ref, o_ref):
    x = x_ref[...].astype(jnp.bfloat16)                              # [M, d], resident
    o_ref[...] = jnp.dot(x, w_ref[...], preferred_element_type=jnp.float32) + b_ref[...]


# ----------------------------------------------------------------------------- wrappers
def decoder_stack(x, enc, tbias, sbias, stacked, n_head, batch_block=None):
    """All decoder layers in one pallas_call, grid = (batch_chunks, layer).
    Weights are stacked with a leading layer axis: DMA of layer l overlaps compute of l-1 and
    each layer's weights leave HBM once per batch chunk (once total with batch_block=None)."""
    B, T, d = x.shape
    S = enc.shape[1]
    L = stacked[0].shape[0]
    Bc = B if batch_block is None else batch_block   # v7x: use B//2 so both TCs get a chunk
    assert B % Bc == 0
    nb = B // Bc

    data_specs = [
        pl.BlockSpec((Bc, T, d), lambda b, l: (b, 0, 0)),   # x (consumed only at layer 0)
        pl.BlockSpec((Bc, S, d), lambda b, l: (b, 0, 0)),   # enc_src
        pl.BlockSpec((Bc, T, T), lambda b, l: (b, 0, 0)),   # self-attn additive bias
        pl.BlockSpec((Bc, T, S), lambda b, l: (b, 0, 0)),   # cross-attn additive bias
    ]
    w_specs = [pl.BlockSpec((1,) + p.shape[1:], lambda b, l: (l, 0, 0)) for p in stacked]

    return pl.pallas_call(
        partial(decoder_stack_kernel, n_head=n_head),
        out_shape=jax.ShapeDtypeStruct((B, T, d), jnp.float32),
        grid=(nb, L),
        in_specs=data_specs + w_specs,
        out_specs=pl.BlockSpec((Bc, T, d), lambda b, l: (b, 0, 0)),  # resident across layer axis
        compiler_params=pltpu.CompilerParams(
            dimension_semantics=("parallel", "arbitrary"),
            vmem_limit_bytes=_vmem_limit_bytes()),
    )(x, enc, tbias, sbias, *stacked)


def final_linear(x, w_p, b_p, vocab_size):
    """d_model -> vocab projection.  (B,T) flattened into the MXU M dim; grid only over the
    lane-padded vocab so each weight tile is DMA'd exactly once."""
    B, T, d = x.shape
    M = B * T
    Vp = w_p.shape[1]
    tn = 1024
    while Vp % tn != 0:                  # Vp is a multiple of 128, so tn >= 128
        tn //= 2

    xf = x.reshape(M, d)
    out = pl.pallas_call(
        final_linear_kernel,
        out_shape=jax.ShapeDtypeStruct((M, Vp), jnp.float32),
        grid=(Vp // tn,),
        in_specs=[pl.BlockSpec((M, d), lambda j: (0, 0)),    # activations resident
                  pl.BlockSpec((d, tn), lambda j: (0, j)),   # weight tile streamed once
                  pl.BlockSpec((1, tn), lambda j: (0, j))],
        out_specs=pl.BlockSpec((M, tn), lambda j: (0, j)),   # lane-dense stores
        compiler_params=pltpu.CompilerParams(
            dimension_semantics=("parallel",),
            vmem_limit_bytes=_vmem_limit_bytes()),
    )(xf, w_p, b_p)
    # TODO(synk): for very large B*T add an M-tile grid axis as well.
    return out.reshape(B, T, Vp)[:, :, :vocab_size]


# ----------------------------------------------------------------------------- parameters
def _dense(key, fan_in, fan_out):
    kw, kb = jax.random.split(key)
    w = jax.random.normal(kw, (fan_in, fan_out), jnp.float32) * 0.02
    b = jax.random.normal(kb, (1, fan_out), jnp.float32) * 0.02
    return w, b


def init_decoder_params(key, dec_voc_size, max_len, d_model, n_head, ffn_hidden, n_layers):
    k_emb, k_out, *k_layers = jax.random.split(key, 2 + n_layers)

    # token embedding (padding_idx = 1 -> zero row, as in nn.Embedding(padding_idx=1))
    emb = jax.random.normal(k_emb, (dec_voc_size, d_model), jnp.float32) * 0.02
    emb = emb.at[1].set(0.0)

    # sinusoidal positional encoding (non-trainable, same construction as the repo)
    pos = jnp.arange(max_len, dtype=jnp.float32)[:, None]
    two_i = jnp.arange(0, d_model, 2, dtype=jnp.float32)
    angle = pos / (10000.0 ** (two_i / d_model))
    pe = jnp.zeros((max_len, d_model), jnp.float32)
    pe = pe.at[:, 0::2].set(jnp.sin(angle))
    pe = pe.at[:, 1::2].set(jnp.cos(angle))

    scale = 1.0 / math.sqrt(d_model // n_head)
    ones = jnp.ones((1, d_model), jnp.float32)
    zeros = jnp.zeros((1, d_model), jnp.float32)

    per_layer = []
    for kl in k_layers:
        ks = jax.random.split(kl, 10)
        wq1, bq1 = _dense(ks[0], d_model, d_model)
        wk1, bk1 = _dense(ks[1], d_model, d_model)
        wv1, bv1 = _dense(ks[2], d_model, d_model)
        wo1, bo1 = _dense(ks[3], d_model, d_model)
        wq2, bq2 = _dense(ks[4], d_model, d_model)
        wk2, bk2 = _dense(ks[5], d_model, d_model)
        wv2, bv2 = _dense(ks[6], d_model, d_model)
        wo2, bo2 = _dense(ks[7], d_model, d_model)
        wf1, bf1 = _dense(ks[8], d_model, ffn_hidden)
        wf2, bf2 = _dense(ks[9], ffn_hidden, d_model)

        # fused QKV / KV projections; attention scale folded into the query weight AND bias
        w_qkv1 = jnp.concatenate([wq1 * scale, wk1, wv1], axis=1)       # [d, 3d]
        b_qkv1 = jnp.concatenate([bq1 * scale, bk1, bv1], axis=1)       # [1, 3d]
        w_kv2 = jnp.concatenate([wk2, wv2], axis=1)                     # [d, 2d]
        b_kv2 = jnp.concatenate([bk2, bv2], axis=1)                     # [1, 2d]
        # pack all d_model-wide per-layer vectors into one [10, d] tensor (fewer DMA refs)
        vec = jnp.concatenate([bo1, ones, zeros,                        # 0..2 self-attn
                               bq2 * scale, bo2, ones, zeros,           # 3..6 cross-attn
                               bf2, ones, zeros], axis=0)               # 7..9 ffn
        per_layer.append((w_qkv1, b_qkv1, wo1,
                          wq2 * scale, w_kv2, b_kv2, wo2,
                          wf1, bf1, wf2, vec))

    # stack each parameter with a leading layer axis; matmul weights -> bf16, rest stays f32
    bf16_idx = {0, 2, 3, 4, 6, 7, 9}
    stacked = []
    for idx in range(11):
        arr = jnp.stack([lp[idx] for lp in per_layer], axis=0)
        if idx in bf16_idx:
            arr = arr.astype(jnp.bfloat16)
        stacked.append(arr)

    # final projection: pad vocab to a lane multiple and cast ONCE here (not per forward)
    w_out, b_out = _dense(k_out, d_model, dec_voc_size)
    Vp = ((dec_voc_size + 127) // 128) * 128
    w_out_p = jnp.zeros((d_model, Vp), jnp.bfloat16).at[:, :dec_voc_size].set(
        w_out.astype(jnp.bfloat16))
    b_out_p = jnp.zeros((1, Vp), jnp.float32).at[:, :dec_voc_size].set(b_out)

    return emb, pe, stacked, w_out_p, b_out_p


# ----------------------------------------------------------------------------- forward
def decoder_forward(trg, enc_src, trg_mask, src_mask, params, n_head, batch_block=None):
    emb, pe, stacked, w_out_p, b_out_p = params
    T = trg.shape[1]
    # TransformerEmbedding: token gather + sinusoidal pos-enc (plain-JAX glue); dropout=identity
    x = jnp.take(emb, trg, axis=0) + pe[:T][None, :, :]
    # additive attention-mask biases computed ONCE per call (== masked_fill(mask==0, -1e4))
    tbias = (trg_mask - 1.0) * 10000.0
    sbias = (src_mask - 1.0) * 10000.0
    x = decoder_stack(x, enc_src, tbias, sbias, stacked, n_head, batch_block)
    return final_linear(x, w_out_p, b_out_p, emb.shape[0])


# ----------------------------------------------------------------------------- main
if __name__ == "__main__":
    B, T, S = 2, 8, 8
    # lane-aligned (128-multiple) feature dims, per TPU layout guidance
    d_model, n_head, ffn_hidden, n_layers = 128, 4, 256, 2
    dec_voc_size, max_len = 50, 16
    assert d_model % n_head == 0

    key = jax.random.PRNGKey(0)
    k_tok, k_enc, k_par = jax.random.split(key, 3)

    trg = jax.random.randint(k_tok, (B, T), 0, dec_voc_size, dtype=jnp.int32)
    enc_src = jax.random.normal(k_enc, (B, S, d_model), jnp.float32)
    trg_mask = jnp.broadcast_to(jnp.tril(jnp.ones((T, T), jnp.float32)), (B, T, T))  # causal
    src_mask = jnp.ones((B, T, S), jnp.float32)

    params = init_decoder_params(k_par, dec_voc_size, max_len, d_model,
                                 n_head, ffn_hidden, n_layers)

    out = decoder_forward(trg, enc_src, trg_mask, src_mask, params, n_head)
    out = jax.block_until_ready(out)
    assert out.shape == (B, T, dec_voc_size) and out.dtype == jnp.float32
    print("KERNEL_OK")
</pallas_src>

<mosaic_0001>
module attributes {stable_mosaic.version = 11 : i64} {
  func.func @decoder_stack_kernel(%arg0: i32, %arg1: i32, %arg2: memref<2x8x128xf32, #tpu.memory_space<vmem>>, %arg3: memref<2x8x128xf32, #tpu.memory_space<vmem>>, %arg4: memref<2x8x8xf32, #tpu.memory_space<vmem>>, %arg5: memref<2x8x8xf32, #tpu.memory_space<vmem>>, %arg6: memref<1x128x384xbf16, #tpu.memory_space<vmem>>, %arg7: memref<1x1x384xf32, #tpu.memory_space<vmem>>, %arg8: memref<1x128x128xbf16, #tpu.memory_space<vmem>>, %arg9: memref<1x128x128xbf16, #tpu.memory_space<vmem>>, %arg10: memref<1x128x256xbf16, #tpu.memory_space<vmem>>, %arg11: memref<1x1x256xf32, #tpu.memory_space<vmem>>, %arg12: memref<1x128x128xbf16, #tpu.memory_space<vmem>>, %arg13: memref<1x128x256xbf16, #tpu.memory_space<vmem>>, %arg14: memref<1x1x256xf32, #tpu.memory_space<vmem>>, %arg15: memref<1x256x128xbf16, #tpu.memory_space<vmem>>, %arg16: memref<1x10x128xf32, #tpu.memory_space<vmem>>, %arg17: memref<2x8x128xf32, #tpu.memory_space<vmem>>) attributes {dimension_semantics = [#tpu.dimension_semantics<parallel>, #tpu.dimension_semantics<arbitrary>], iteration_bounds = array<i64: 1, 2>, scalar_prefetch = 0 : i64, scratch_operands = 0 : i64, tpu.core_type = #tpu.core_type<tc>, window_params = [{transform_indices = @transform_0, window_bounds = array<i64: 2, 8, 128>}, {transform_indices = @transform_1, window_bounds = array<i64: 2, 8, 128>}, {transform_indices = @transform_2, window_bounds = array<i64: 2, 8, 8>}, {transform_indices = @transform_3, window_bounds = array<i64: 2, 8, 8>}, {transform_indices = @transform_4, window_bounds = array<i64: 1, 128, 384>}, {transform_indices = @transform_5, window_bounds = array<i64: 1, 1, 384>}, {transform_indices = @transform_6, window_bounds = array<i64: 1, 128, 128>}, {transform_indices = @transform_7, window_bounds = array<i64: 1, 128, 128>}, {transform_indices = @transform_8, window_bounds = array<i64: 1, 128, 256>}, {transform_indices = @transform_9, window_bounds = array<i64: 1, 1, 256>}, {transform_indices = @transform_10, window_bounds = array<i64: 1, 128, 128>}, {transform_indices = @transform_11, window_bounds = array<i64: 1, 128, 256>}, {transform_indices = @transform_12, window_bounds = array<i64: 1, 1, 256>}, {transform_indices = @transform_13, window_bounds = array<i64: 1, 256, 128>}, {transform_indices = @transform_14, window_bounds = array<i64: 1, 10, 128>}, {transform_indices = @transform_15, window_bounds = array<i64: 2, 8, 128>}]} {
    %c0_i32 = arith.constant 0 : i32
    %0 = arith.cmpi eq, %arg1, %c0_i32 : i32
    %1 = arith.extui %0 : i1 to i32
    %c0_i32_0 = arith.constant 0 : i32
    %2 = arith.cmpi ne, %1, %c0_i32_0 : i32
    scf.if %2 {
      %c0_102 = arith.constant 0 : index
      %c0_103 = arith.constant 0 : index
      %c0_104 = arith.constant 0 : index
      %309 = vector.load %arg2[%c0_102, %c0_103, %c0_104] : memref<2x8x128xf32, #tpu.memory_space<vmem>>, vector<2x8x128xf32>
      %c0_105 = arith.constant 0 : index
      %c0_106 = arith.constant 0 : index
      %c0_107 = arith.constant 0 : index
      %310 = vector.load %arg17[%c0_105, %c0_106, %c0_107] : memref<2x8x128xf32, #tpu.memory_space<vmem>>, vector<2x8x128xf32>
      tpu.vector_store %arg17[%c0_105, %c0_106, %c0_107], %309 {strides = array<i32>} : memref<2x8x128xf32, #tpu.memory_space<vmem>>, vector<2x8x128xf32>,
    } else {
    }
    %c0 = arith.constant 0 : index
    %c0_1 = arith.constant 0 : index
    %c0_2 = arith.constant 0 : index
    %3 = vector.load %arg17[%c0, %c0_1, %c0_2] : memref<2x8x128xf32, #tpu.memory_space<vmem>>, vector<2x8x128xf32>
    %c0_3 = arith.constant 0 : index
    %c0_4 = arith.constant 0 : index
    %c0_5 = arith.constant 0 : index
    %4 = vector.load %arg3[%c0_3, %c0_4, %c0_5] : memref<2x8x128xf32, #tpu.memory_space<vmem>>, vector<2x8x128xf32>
    %c0_6 = arith.constant 0 : index
    %c0_7 = arith.constant 0 : index
    %c0_8 = arith.constant 0 : index
    %5 = vector.load %arg4[%c0_6, %c0_7, %c0_8] : memref<2x8x8xf32, #tpu.memory_space<vmem>>, vector<2x8x8xf32>
    %c0_9 = arith.constant 0 : index
    %c0_10 = arith.constant 0 : index
    %c0_11 = arith.constant 0 : index
    %6 = vector.load %arg5[%c0_9, %c0_10, %c0_11] : memref<2x8x8xf32, #tpu.memory_space<vmem>>, vector<2x8x8xf32>
    %c0_12 = arith.constant 0 : index
    %c0_13 = arith.constant 0 : index
    %c0_14 = arith.constant 0 : index
    %7 = vector.load %arg16[%c0_12, %c0_13, %c0_14] : memref<1x10x128xf32, #tpu.memory_space<vmem>>, vector<1x10x128xf32>
    %8 = vector.shape_cast %7 : vector<1x10x128xf32> to vector<10x128xf32>
    %9 = vector.shape_cast %3 : vector<2x8x128xf32> to vector<16x128xf32>
    %10 = arith.truncf %9 : vector<16x128xf32> to vector<16x128xbf16>
    %c0_15 = arith.constant 0 : index
    %c0_16 = arith.constant 0 : index
    %c0_17 = arith.constant 0 : index
    %11 = vector.load %arg6[%c0_15, %c0_16, %c0_17] : memref<1x128x384xbf16, #tpu.memory_space<vmem>>, vector<1x128x384xbf16>
    %12 = vector.shape_cast %11 : vector<1x128x384xbf16> to vector<128x384xbf16>
    %cst = arith.constant dense<0.000000e+00> : vector<16x384xf32>
    %13 = tpu.matmul %10, %12, %cst {dimension_numbers = #tpu.dot_dimension_numbers<[1], [0], [0], [1], [0, 0, 1, 1], [], []>} : vector<16x128xbf16>, vector<128x384xbf16>, vector<16x384xf32> -> vector<16x384xf32>
    %c0_18 = arith.constant 0 : index
    %c0_19 = arith.constant 0 : index
    %c0_20 = arith.constant 0 : index
    %14 = vector.load %arg7[%c0_18, %c0_19, %c0_20] : memref<1x1x384xf32, #tpu.memory_space<vmem>>, vector<1x1x384xf32>
    %15 = vector.shape_cast %14 : vector<1x1x384xf32> to vector<1x384xf32>
    %16 = vector.broadcast %15 : vector<1x384xf32> to vector<16x384xf32>
    %17 = arith.addf %13, %16 : vector<16x384xf32>
    %18 = vector.extract_strided_slice %17 {offsets = [0, 0], sizes = [16, 128], strides = [1, 1]} : vector<16x384xf32> to vector<16x128xf32>
    %19 = vector.shape_cast %18 : vector<16x128xf32> to vector<2x8x128xf32>
    %20 = vector.extract_strided_slice %17 {offsets = [0, 128], sizes = [16, 128], strides = [1, 1]} : vector<16x384xf32> to vector<16x128xf32>
    %21 = vector.shape_cast %20 : vector<16x128xf32> to vector<2x8x128xf32>
    %22 = vector.extract_strided_slice %17 {offsets = [0, 256], sizes = [16, 128], strides = [1, 1]} : vector<16x384xf32> to vector<16x128xf32>
    %23 = vector.shape_cast %22 : vector<16x128xf32> to vector<2x8x128xf32>
    %24 = arith.truncf %19 : vector<2x8x128xf32> to vector<2x8x128xbf16>
    %25 = arith.truncf %21 : vector<2x8x128xf32> to vector<2x8x128xbf16>
    %26 = arith.truncf %23 : vector<2x8x128xf32> to vector<2x8x128xbf16>
    %27 = vector.extract_strided_slice %24 {offsets = [0, 0, 0], sizes = [2, 8, 32], strides = [1, 1, 1]} : vector<2x8x128xbf16> to vector<2x8x32xbf16>
    %28 = vector.extract_strided_slice %25 {offsets = [0, 0, 0], sizes = [2, 8, 32], strides = [1, 1, 1]} : vector<2x8x128xbf16> to vector<2x8x32xbf16>
    %29 = vector.extract_strided_slice %26 {offsets = [0, 0, 0], sizes = [2, 8, 32], strides = [1, 1, 1]} : vector<2x8x128xbf16> to vector<2x8x32xbf16>
    "tpu.trace_start"() <{level = 10 : i32, message = "btd,bsd->bts"}> : () -> ()
    %cst_21 = arith.constant dense<0.000000e+00> : vector<2x8x8xf32>
    %30 = tpu.matmul %27, %28, %cst_21 {dimension_numbers = #tpu.dot_dimension_numbers<[2], [2], [1], [1], [0, 0, 0, 1, 1, 1], [0], [0]>} : vector<2x8x32xbf16>, vector<2x8x32xbf16>, vector<2x8x8xf32> -> vector<2x8x8xf32>
    "tpu.trace_stop"() : () -> ()
    %31 = arith.addf %30, %5 : vector<2x8x8xf32>
    %cst_22 = arith.constant dense<0xFF800000> : vector<2x8xf32>
    %32 = vector.multi_reduction <maximumf>, %31, %cst_22 [2] : vector<2x8x8xf32> to vector<2x8xf32>
    %33 = vector.shape_cast %32 : vector<2x8xf32> to vector<2x8x1xf32>
    %34 = vector.broadcast %33 : vector<2x8x1xf32> to vector<2x8x8xf32>
    %35 = arith.subf %31, %34 : vector<2x8x8xf32>
    %36 = math.exp %35 : vector<2x8x8xf32>
    %cst_23 = arith.constant dense<0.000000e+00> : vector<2x8xf32>
    %37 = vector.multi_reduction <add>, %36, %cst_23 [2] : vector<2x8x8xf32> to vector<2x8xf32>
    %38 = vector.shape_cast %37 : vector<2x8xf32> to vector<2x8x1xf32>
    %39 = tpu.reciprocal %38 {approx = true} : vector<2x8x1xf32> -> vector<2x8x1xf32>
    %40 = vector.broadcast %39 : vector<2x8x1xf32> to vector<2x8x8xf32>
    %41 = arith.mulf %36, %40 : vector<2x8x8xf32>
    %42 = arith.truncf %41 : vector<2x8x8xf32> to vector<2x8x8xbf16>
    "tpu.trace_start"() <{level = 10 : i32, message = "bts,bsd->btd"}> : () -> ()
    %cst_24 = arith.constant dense<0.000000e+00> : vector<2x8x32xf32>
    %43 = tpu.matmul %42, %29, %cst_24 {dimension_numbers = #tpu.dot_dimension_numbers<[2], [1], [1], [2], [0, 0, 0, 1, 1, 2], [0], [0]>} : vector<2x8x8xbf16>, vector<2x8x32xbf16>, vector<2x8x32xf32> -> vector<2x8x32xf32>
    "tpu.trace_stop"() : () -> ()
    %44 = vector.extract_strided_slice %24 {offsets = [0, 0, 32], sizes = [2, 8, 32], strides = [1, 1, 1]} : vector<2x8x128xbf16> to vector<2x8x32xbf16>
    %45 = vector.extract_strided_slice %25 {offsets = [0, 0, 32], sizes = [2, 8, 32], strides = [1, 1, 1]} : vector<2x8x128xbf16> to vector<2x8x32xbf16>
    %46 = vector.extract_strided_slice %26 {offsets = [0, 0, 32], sizes = [2, 8, 32], strides = [1, 1, 1]} : vector<2x8x128xbf16> to vector<2x8x32xbf16>
    "tpu.trace_start"() <{level = 10 : i32, message = "btd,bsd->bts"}> : () -> ()
    %cst_25 = arith.constant dense<0.000000e+00> : vector<2x8x8xf32>
    %47 = tpu.matmul %44, %45, %cst_25 {dimension_numbers = #tpu.dot_dimension_numbers<[2], [2], [1], [1], [0, 0, 0, 1, 1, 1], [0], [0]>} : vector<2x8x32xbf16>, vector<2x8x32xbf16>, vector<2x8x8xf32> -> vector<2x8x8xf32>
    "tpu.trace_stop"() : () -> ()
    %48 = arith.addf %47, %5 : vector<2x8x8xf32>
    %cst_26 = arith.constant dense<0xFF800000> : vector<2x8xf32>
    %49 = vector.multi_reduction <maximumf>, %48, %cst_26 [2] : vector<2x8x8xf32> to vector<2x8xf32>
    %50 = vector.shape_cast %49 : vector<2x8xf32> to vector<2x8x1xf32>
    %51 = vector.broadcast %50 : vector<2x8x1xf32> to vector<2x8x8xf32>
    %52 = arith.subf %48, %51 : vector<2x8x8xf32>
    %53 = math.exp %52 : vector<2x8x8xf32>
    %cst_27 = arith.constant dense<0.000000e+00> : vector<2x8xf32>
    %54 = vector.multi_reduction <add>, %53, %cst_27 [2] : vector<2x8x8xf32> to vector<2x8xf32>
    %55 = vector.shape_cast %54 : vector<2x8xf32> to vector<2x8x1xf32>
    %56 = tpu.reciprocal %55 {approx = true} : vector<2x8x1xf32> -> vector<2x8x1xf32>
    %57 = vector.broadcast %56 : vector<2x8x1xf32> to vector<2x8x8xf32>
    %58 = arith.mulf %53, %57 : vector<2x8x8xf32>
    %59 = arith.truncf %58 : vector<2x8x8xf32> to vector<2x8x8xbf16>
    "tpu.trace_start"() <{level = 10 : i32, message = "bts,bsd->btd"}> : () -> ()
    %cst_28 = arith.constant dense<0.000000e+00> : vector<2x8x32xf32>
    %60 = tpu.matmul %59, %46, %cst_28 {dimension_numbers = #tpu.dot_dimension_numbers<[2], [1], [1], [2], [0, 0, 0, 1, 1, 2], [0], [0]>} : vector<2x8x8xbf16>, vector<2x8x32xbf16>, vector<2x8x32xf32> -> vector<2x8x32xf32>
    "tpu.trace_stop"() : () -> ()
    %61 = vector.extract_strided_slice %24 {offsets = [0, 0, 64], sizes = [2, 8, 32], strides = [1, 1, 1]} : vector<2x8x128xbf16> to vector<2x8x32xbf16>
    %62 = vector.extract_strided_slice %25 {offsets = [0, 0, 64], sizes = [2, 8, 32], strides = [1, 1, 1]} : vector<2x8x128xbf16> to vector<2x8x32xbf16>
    %63 = vector.extract_strided_slice %26 {offsets = [0, 0, 64], sizes = [2, 8, 32], strides = [1, 1, 1]} : vector<2x8x128xbf16> to vector<2x8x32xbf16>
    "tpu.trace_start"() <{level = 10 : i32, message = "btd,bsd->bts"}> : () -> ()
    %cst_29 = arith.constant dense<0.000000e+00> : vector<2x8x8xf32>
    %64 = tpu.matmul %61, %62, %cst_29 {dimension_numbers = #tpu.dot_dimension_numbers<[2], [2], [1], [1], [0, 0, 0, 1, 1, 1], [0], [0]>} : vector<2x8x32xbf16>, vector<2x8x32xbf16>, vector<2x8x8xf32> -> vector<2x8x8xf32>
    "tpu.trace_stop"() : () -> ()
    %65 = arith.addf %64, %5 : vector<2x8x8xf32>
    %cst_30 = arith.constant dense<0xFF800000> : vector<2x8xf32>
    %66 = vector.multi_reduction <maximumf>, %65, %cst_30 [2] : vector<2x8x8xf32> to vector<2x8xf32>
    %67 = vector.shape_cast %66 : vector<2x8xf32> to vector<2x8x1xf32>
    %68 = vector.broadcast %67 : vector<2x8x1xf32> to vector<2x8x8xf32>
    %69 = arith.subf %65, %68 : vector<2x8x8xf32>
    %70 = math.exp %69 : vector<2x8x8xf32>
    %cst_31 = arith.constant dense<0.000000e+00> : vector<2x8xf32>
    %71 = vector.multi_reduction <add>, %70, %cst_31 [2] : vector<2x8x8xf32> to vector<2x8xf32>
    %72 = vector.shape_cast %71 : vector<2x8xf32> to vector<2x8x1xf32>
    %73 = tpu.reciprocal %72 {approx = true} : vector<2x8x1xf32> -> vector<2x8x1xf32>
    %74 = vector.broadcast %73 : vector<2x8x1xf32> to vector<2x8x8xf32>
    %75 = arith.mulf %70, %74 : vector<2x8x8xf32>
    %76 = arith.truncf %75 : vector<2x8x8xf32> to vector<2x8x8xbf16>
    "tpu.trace_start"() <{level = 10 : i32, message = "bts,bsd->btd"}> : () -> ()
    %cst_32 = arith.constant dense<0.000000e+00> : vector<2x8x32xf32>
    %77 = tpu.matmul %76, %63, %cst_32 {dimension_numbers = #tpu.dot_dimension_numbers<[2], [1], [1], [2], [0, 0, 0, 1, 1, 2], [0], [0]>} : vector<2x8x8xbf16>, vector<2x8x32xbf16>, vector<2x8x32xf32> -> vector<2x8x32xf32>
    "tpu.trace_stop"() : () -> ()
    %78 = vector.extract_strided_slice %24 {offsets = [0, 0, 96], sizes = [2, 8, 32], strides = [1, 1, 1]} : vector<2x8x128xbf16> to vector<2x8x32xbf16>
    %79 = vector.extract_strided_slice %25 {offsets = [0, 0, 96], sizes = [2, 8, 32], strides = [1, 1, 1]} : vector<2x8x128xbf16> to vector<2x8x32xbf16>
    %80 = vector.extract_strided_slice %26 {offsets = [0, 0, 96], sizes = [2, 8, 32], strides = [1, 1, 1]} : vector<2x8x128xbf16> to vector<2x8x32xbf16>
    "tpu.trace_start"() <{level = 10 : i32, message = "btd,bsd->bts"}> : () -> ()
    %cst_33 = arith.constant dense<0.000000e+00> : vector<2x8x8xf32>
    %81 = tpu.matmul %78, %79, %cst_33 {dimension_numbers = #tpu.dot_dimension_numbers<[2], [2], [1], [1], [0, 0, 0, 1, 1, 1], [0], [0]>} : vector<2x8x32xbf16>, vector<2x8x32xbf16>, vector<2x8x8xf32> -> vector<2x8x8xf32>
    "tpu.trace_stop"() : () -> ()
    %82 = arith.addf %81, %5 : vector<2x8x8xf32>
    %cst_34 = arith.constant dense<0xFF800000> : vector<2x8xf32>
    %83 = vector.multi_reduction <maximumf>, %82, %cst_34 [2] : vector<2x8x8xf32> to vector<2x8xf32>
    %84 = vector.shape_cast %83 : vector<2x8xf32> to vector<2x8x1xf32>
    %85 = vector.broadcast %84 : vector<2x8x1xf32> to vector<2x8x8xf32>
    %86 = arith.subf %82, %85 : vector<2x8x8xf32>
    %87 = math.exp %86 : vector<2x8x8xf32>
    %cst_35 = arith.constant dense<0.000000e+00> : vector<2x8xf32>
    %88 = vector.multi_reduction <add>, %87, %cst_35 [2] : vector<2x8x8xf32> to vector<2x8xf32>
    %89 = vector.shape_cast %88 : vector<2x8xf32> to vector<2x8x1xf32>
    %90 = tpu.reciprocal %89 {approx = true} : vector<2x8x1xf32> -> vector<2x8x1xf32>
    %91 = vector.broadcast %90 : vector<2x8x1xf32> to vector<2x8x8xf32>
    %92 = arith.mulf %87, %91 : vector<2x8x8xf32>
    %93 = arith.truncf %92 : vector<2x8x8xf32> to vector<2x8x8xbf16>
    "tpu.trace_start"() <{level = 10 : i32, message = "bts,bsd->btd"}> : () -> ()
    %cst_36 = arith.constant dense<0.000000e+00> : vector<2x8x32xf32>
    %94 = tpu.matmul %93, %80, %cst_36 {dimension_numbers = #tpu.dot_dimension_numbers<[2], [1], [1], [2], [0, 0, 0, 1, 1, 2], [0], [0]>} : vector<2x8x8xbf16>, vector<2x8x32xbf16>, vector<2x8x32xf32> -> vector<2x8x32xf32>
    "tpu.trace_stop"() : () -> ()
    %95 = tpu.concatenate %43, %60, %77, %94 in 2 : vector<2x8x32xf32>, vector<2x8x32xf32>, vector<2x8x32xf32>, vector<2x8x32xf32> -> vector<2x8x128xf32>
    %96 = vector.shape_cast %95 : vector<2x8x128xf32> to vector<16x128xf32>
    %97 = arith.truncf %96 : vector<16x128xf32> to vector<16x128xbf16>
    %c0_37 = arith.constant 0 : index
    %c0_38 = arith.constant 0 : index
    %c0_39 = arith.constant 0 : index
    %98 = vector.load %arg8[%c0_37, %c0_38, %c0_39] : memref<1x128x128xbf16, #tpu.memory_space<vmem>>, vector<1x128x128xbf16>
    %99 = vector.shape_cast %98 : vector<1x128x128xbf16> to vector<128x128xbf16>
    %cst_40 = arith.constant dense<0.000000e+00> : vector<16x128xf32>
    %100 = tpu.matmul %97, %99, %cst_40 {dimension_numbers = #tpu.dot_dimension_numbers<[1], [0], [0], [1], [0, 0, 1, 1], [], []>} : vector<16x128xbf16>, vector<128x128xbf16>, vector<16x128xf32> -> vector<16x128xf32>
    %101 = vector.extract_strided_slice %8 {offsets = [0, 0], sizes = [1, 128], strides = [1, 1]} : vector<10x128xf32> to vector<1x128xf32>
    %102 = vector.broadcast %101 : vector<1x128xf32> to vector<16x128xf32>
    %103 = arith.addf %100, %102 : vector<16x128xf32>
    %104 = vector.shape_cast %103 : vector<16x128xf32> to vector<2x8x128xf32>
    %105 = arith.addf %104, %3 : vector<2x8x128xf32>
    %106 = vector.extract_strided_slice %8 {offsets = [1, 0], sizes = [1, 128], strides = [1, 1]} : vector<10x128xf32> to vector<1x128xf32>
    %107 = vector.extract_strided_slice %8 {offsets = [2, 0], sizes = [1, 128], strides = [1, 1]} : vector<10x128xf32> to vector<1x128xf32>
    %cst_41 = arith.constant dense<0.000000e+00> : vector<2x8xf32>
    %108 = vector.multi_reduction <add>, %105, %cst_41 [2] : vector<2x8x128xf32> to vector<2x8xf32>
    %109 = vector.shape_cast %108 : vector<2x8xf32> to vector<2x8x1xf32>
    %cst_42 = arith.constant 1.280000e+02 : f32
    %110 = vector.broadcast %cst_42 : f32 to vector<2x8x1xf32>
    %111 = arith.divf %109, %110 : vector<2x8x1xf32>
    %112 = vector.broadcast %111 : vector<2x8x1xf32> to vector<2x8x128xf32>
    %113 = arith.subf %105, %112 : vector<2x8x128xf32>
    %114 = arith.mulf %113, %113 : vector<2x8x128xf32>
    %cst_43 = arith.constant dense<0.000000e+00> : vector<2x8xf32>
    %115 = vector.multi_reduction <add>, %114, %cst_43 [2] : vector<2x8x128xf32> to vector<2x8xf32>
    %116 = vector.shape_cast %115 : vector<2x8xf32> to vector<2x8x1xf32>
    %cst_44 = arith.constant 1.280000e+02 : f32
    %117 = vector.broadcast %cst_44 : f32 to vector<2x8x1xf32>
    %118 = arith.divf %116, %117 : vector<2x8x1xf32>
    %119 = vector.broadcast %111 : vector<2x8x1xf32> to vector<2x8x128xf32>
    %120 = arith.subf %105, %119 : vector<2x8x128xf32>
    %cst_45 = arith.constant 9.99999996E-13 : f32
    %121 = vector.broadcast %cst_45 : f32 to vector<2x8x1xf32>
    %122 = arith.addf %118, %121 : vector<2x8x1xf32>
    %123 = math.rsqrt %122 : vector<2x8x1xf32>
    %124 = vector.broadcast %123 : vector<2x8x1xf32> to vector<2x8x128xf32>
    %125 = arith.mulf %120, %124 : vector<2x8x128xf32>
    %126 = vector.shape_cast %106 : vector<1x128xf32> to vector<1x1x128xf32>
    %127 = vector.broadcast %126 : vector<1x1x128xf32> to vector<2x8x128xf32>
    %128 = arith.mulf %127, %125 : vector<2x8x128xf32>
    %129 = vector.shape_cast %107 : vector<1x128xf32> to vector<1x1x128xf32>
    %130 = vector.broadcast %129 : vector<1x1x128xf32> to vector<2x8x128xf32>
    %131 = arith.addf %128, %130 : vector<2x8x128xf32>
    %132 = vector.shape_cast %131 : vector<2x8x128xf32> to vector<16x128xf32>
    %133 = arith.truncf %132 : vector<16x128xf32> to vector<16x128xbf16>
    %c0_46 = arith.constant 0 : index
    %c0_47 = arith.constant 0 : index
    %c0_48 = arith.constant 0 : index
    %134 = vector.load %arg9[%c0_46, %c0_47, %c0_48] : memref<1x128x128xbf16, #tpu.memory_space<vmem>>, vector<1x128x128xbf16>
    %135 = vector.shape_cast %134 : vector<1x128x128xbf16> to vector<128x128xbf16>
    %cst_49 = arith.constant dense<0.000000e+00> : vector<16x128xf32>
    %136 = tpu.matmul %133, %135, %cst_49 {dimension_numbers = #tpu.dot_dimension_numbers<[1], [0], [0], [1], [0, 0, 1, 1], [], []>} : vector<16x128xbf16>, vector<128x128xbf16>, vector<16x128xf32> -> vector<16x128xf32>
    %137 = vector.extract_strided_slice %8 {offsets = [3, 0], sizes = [1, 128], strides = [1, 1]} : vector<10x128xf32> to vector<1x128xf32>
    %138 = vector.broadcast %137 : vector<1x128xf32> to vector<16x128xf32>
    %139 = arith.addf %136, %138 : vector<16x128xf32>
    %140 = vector.shape_cast %139 : vector<16x128xf32> to vector<2x8x128xf32>
    %141 = vector.shape_cast %4 : vector<2x8x128xf32> to vector<16x128xf32>
    %142 = arith.truncf %141 : vector<16x128xf32> to vector<16x128xbf16>
    %c0_50 = arith.constant 0 : index
    %c0_51 = arith.constant 0 : index
    %c0_52 = arith.constant 0 : index
    %143 = vector.load %arg10[%c0_50, %c0_51, %c0_52] : memref<1x128x256xbf16, #tpu.memory_space<vmem>>, vector<1x128x256xbf16>
    %144 = vector.shape_cast %143 : vector<1x128x256xbf16> to vector<128x256xbf16>
    %cst_53 = arith.constant dense<0.000000e+00> : vector<16x256xf32>
    %145 = tpu.matmul %142, %144, %cst_53 {dimension_numbers = #tpu.dot_dimension_numbers<[1], [0], [0], [1], [0, 0, 1, 1], [], []>} : vector<16x128xbf16>, vector<128x256xbf16>, vector<16x256xf32> -> vector<16x256xf32>
    %c0_54 = arith.constant 0 : index
    %c0_55 = arith.constant 0 : index
    %c0_56 = arith.constant 0 : index
    %146 = vector.load %arg11[%c0_54, %c0_55, %c0_56] : memref<1x1x256xf32, #tpu.memory_space<vmem>>, vector<1x1x256xf32>
    %147 = vector.shape_cast %146 : vector<1x1x256xf32> to vector<1x256xf32>
    %148 = vector.broadcast %147 : vector<1x256xf32> to vector<16x256xf32>
    %149 = arith.addf %145, %148 : vector<16x256xf32>
    %150 = vector.extract_strided_slice %149 {offsets = [0, 0], sizes = [16, 128], strides = [1, 1]} : vector<16x256xf32> to vector<16x128xf32>
    %151 = vector.shape_cast %150 : vector<16x128xf32> to vector<2x8x128xf32>
    %152 = vector.extract_strided_slice %149 {offsets = [0, 128], sizes = [16, 128], strides = [1, 1]} : vector<16x256xf32> to vector<16x128xf32>
    %153 = vector.shape_cast %152 : vector<16x128xf32> to vector<2x8x128xf32>
    %154 = arith.truncf %140 : vector<2x8x128xf32> to vector<2x8x128xbf16>
    %155 = arith.truncf %151 : vector<2x8x128xf32> to vector<2x8x128xbf16>
    %156 = arith.truncf %153 : vector<2x8x128xf32> to vector<2x8x128xbf16>
    %157 = vector.extract_strided_slice %154 {offsets = [0, 0, 0], sizes = [2, 8, 32], strides = [1, 1, 1]} : vector<2x8x128xbf16> to vector<2x8x32xbf16>
    %158 = vector.extract_strided_slice %155 {offsets = [0, 0, 0], sizes = [2, 8, 32], strides = [1, 1, 1]} : vector<2x8x128xbf16> to vector<2x8x32xbf16>
    %159 = vector.extract_strided_slice %156 {offsets = [0, 0, 0], sizes = [2, 8, 32], strides = [1, 1, 1]} : vector<2x8x128xbf16> to vector<2x8x32xbf16>
    "tpu.trace_start"() <{level = 10 : i32, message = "btd,bsd->bts"}> : () -> ()
    %cst_57 = arith.constant dense<0.000000e+00> : vector<2x8x8xf32>
    %160 = tpu.matmul %157, %158, %cst_57 {dimension_numbers = #tpu.dot_dimension_numbers<[2], [2], [1], [1], [0, 0, 0, 1, 1, 1], [0], [0]>} : vector<2x8x32xbf16>, vector<2x8x32xbf16>, vector<2x8x8xf32> -> vector<2x8x8xf32>
    "tpu.trace_stop"() : () -> ()
    %161 = arith.addf %160, %6 : vector<2x8x8xf32>
    %cst_58 = arith.constant dense<0xFF800000> : vector<2x8xf32>
    %162 = vector.multi_reduction <maximumf>, %161, %cst_58 [2] : vector<2x8x8xf32> to vector<2x8xf32>
    %163 = vector.shape_cast %162 : vector<2x8xf32> to vector<2x8x1xf32>
    %164 = vector.broadcast %163 : vector<2x8x1xf32> to vector<2x8x8xf32>
    %165 = arith.subf %161, %164 : vector<2x8x8xf32>
    %166 = math.exp %165 : vector<2x8x8xf32>
    %cst_59 = arith.constant dense<0.000000e+00> : vector<2x8xf32>
    %167 = vector.multi_reduction <add>, %166, %cst_59 [2] : vector<2x8x8xf32> to vector<2x8xf32>
    %168 = vector.shape_cast %167 : vector<2x8xf32> to vector<2x8x1xf32>
    %169 = tpu.reciprocal %168 {approx = true} : vector<2x8x1xf32> -> vector<2x8x1xf32>
    %170 = vector.broadcast %169 : vector<2x8x1xf32> to vector<2x8x8xf32>
    %171 = arith.mulf %166, %170 : vector<2x8x8xf32>
    %172 = arith.truncf %171 : vector<2x8x8xf32> to vector<2x8x8xbf16>
    "tpu.trace_start"() <{level = 10 : i32, message = "bts,bsd->btd"}> : () -> ()
    %cst_60 = arith.constant dense<0.000000e+00> : vector<2x8x32xf32>
    %173 = tpu.matmul %172, %159, %cst_60 {dimension_numbers = #tpu.dot_dimension_numbers<[2], [1], [1], [2], [0, 0, 0, 1, 1, 2], [0], [0]>} : vector<2x8x8xbf16>, vector<2x8x32xbf16>, vector<2x8x32xf32> -> vector<2x8x32xf32>
    "tpu.trace_stop"() : () -> ()
    %174 = vector.extract_strided_slice %154 {offsets = [0, 0, 32], sizes = [2, 8, 32], strides = [1, 1, 1]} : vector<2x8x128xbf16> to vector<2x8x32xbf16>
    %175 = vector.extract_strided_slice %155 {offsets = [0, 0, 32], sizes = [2, 8, 32], strides = [1, 1, 1]} : vector<2x8x128xbf16> to vector<2x8x32xbf16>
    %176 = vector.extract_strided_slice %156 {offsets = [0, 0, 32], sizes = [2, 8, 32], strides = [1, 1, 1]} : vector<2x8x128xbf16> to vector<2x8x32xbf16>
    "tpu.trace_start"() <{level = 10 : i32, message = "btd,bsd->bts"}> : () -> ()
    %cst_61 = arith.constant dense<0.000000e+00> : vector<2x8x8xf32>
    %177 = tpu.matmul %174, %175, %cst_61 {dimension_numbers = #tpu.dot_dimension_numbers<[2], [2], [1], [1], [0, 0, 0, 1, 1, 1], [0], [0]>} : vector<2x8x32xbf16>, vector<2x8x32xbf16>, vector<2x8x8xf32> -> vector<2x8x8xf32>
    "tpu.trace_stop"() : () -> ()
    %178 = arith.addf %177, %6 : vector<2x8x8xf32>
    %cst_62 = arith.constant dense<0xFF800000> : vector<2x8xf32>
    %179 = vector.multi_reduction <maximumf>, %178, %cst_62 [2] : vector<2x8x8xf32> to vector<2x8xf32>
    %180 = vector.shape_cast %179 : vector<2x8xf32> to vector<2x8x1xf32>
    %181 = vector.broadcast %180 : vector<2x8x1xf32> to vector<2x8x8xf32>
    %182 = arith.subf %178, %181 : vector<2x8x8xf32>
    %183 = math.exp %182 : vector<2x8x8xf32>
    %cst_63 = arith.constant dense<0.000000e+00> : vector<2x8xf32>
    %184 = vector.multi_reduction <add>, %183, %cst_63 [2] : vector<2x8x8xf32> to vector<2x8xf32>
    %185 = vector.shape_cast %184 : vector<2x8xf32> to vector<2x8x1xf32>
    %186 = tpu.reciprocal %185 {approx = true} : vector<2x8x1xf32> -> vector<2x8x1xf32>
    %187 = vector.broadcast %186 : vector<2x8x1xf32> to vector<2x8x8xf32>
    %188 = arith.mulf %183, %187 : vector<2x8x8xf32>
    %189 = arith.truncf %188 : vector<2x8x8xf32> to vector<2x8x8xbf16>
    "tpu.trace_start"() <{level = 10 : i32, message = "bts,bsd->btd"}> : () -> ()
    %cst_64 = arith.constant dense<0.000000e+00> : vector<2x8x32xf32>
    %190 = tpu.matmul %189, %176, %cst_64 {dimension_numbers = #tpu.dot_dimension_numbers<[2], [1], [1], [2], [0, 0, 0, 1, 1, 2], [0], [0]>} : vector<2x8x8xbf16>, vector<2x8x32xbf16>, vector<2x8x32xf32> -> vector<2x8x32xf32>
    "tpu.trace_stop"() : () -> ()
    %191 = vector.extract_strided_slice %154 {offsets = [0, 0, 64], sizes = [2, 8, 32], strides = [1, 1, 1]} : vector<2x8x128xbf16> to vector<2x8x32xbf16>
    %192 = vector.extract_strided_slice %155 {offsets = [0, 0, 64], sizes = [2, 8, 32], strides = [1, 1, 1]} : vector<2x8x128xbf16> to vector<2x8x32xbf16>
    %193 = vector.extract_strided_slice %156 {offsets = [0, 0, 64], sizes = [2, 8, 32], strides = [1, 1, 1]} : vector<2x8x128xbf16> to vector<2x8x32xbf16>
    "tpu.trace_start"() <{level = 10 : i32, message = "btd,bsd->bts"}> : () -> ()
    %cst_65 = arith.constant dense<0.000000e+00> : vector<2x8x8xf32>
    %194 = tpu.matmul %191, %192, %cst_65 {dimension_numbers = #tpu.dot_dimension_numbers<[2], [2], [1], [1], [0, 0, 0, 1, 1, 1], [0], [0]>} : vector<2x8x32xbf16>, vector<2x8x32xbf16>, vector<2x8x8xf32> -> vector<2x8x8xf32>
    "tpu.trace_stop"() : () -> ()
    %195 = arith.addf %194, %6 : vector<2x8x8xf32>
    %cst_66 = arith.constant dense<0xFF800000> : vector<2x8xf32>
    %196 = vector.multi_reduction <maximumf>, %195, %cst_66 [2] : vector<2x8x8xf32> to vector<2x8xf32>
    %197 = vector.shape_cast %196 : vector<2x8xf32> to vector<2x8x1xf32>
    %198 = vector.broadcast %197 : vector<2x8x1xf32> to vector<2x8x8xf32>
    %199 = arith.subf %195, %198 : vector<2x8x8xf32>
    %200 = math.exp %199 : vector<2x8x8xf32>
    %cst_67 = arith.constant dense<0.000000e+00> : vector<2x8xf32>
    %201 = vector.multi_reduction <add>, %200, %cst_67 [2] : vector<2x8x8xf32> to vector<2x8xf32>
    %202 = vector.shape_cast %201 : vector<2x8xf32> to vector<2x8x1xf32>
    %203 = tpu.reciprocal %202 {approx = true} : vector<2x8x1xf32> -> vector<2x8x1xf32>
    %204 = vector.broadcast %203 : vector<2x8x1xf32> to vector<2x8x8xf32>
    %205 = arith.mulf %200, %204 : vector<2x8x8xf32>
    %206 = arith.truncf %205 : vector<2x8x8xf32> to vector<2x8x8xbf16>
    "tpu.trace_start"() <{level = 10 : i32, message = "bts,bsd->btd"}> : () -> ()
    %cst_68 = arith.constant dense<0.000000e+00> : vector<2x8x32xf32>
    %207 = tpu.matmul %206, %193, %cst_68 {dimension_numbers = #tpu.dot_dimension_numbers<[2], [1], [1], [2], [0, 0, 0, 1, 1, 2], [0], [0]>} : vector<2x8x8xbf16>, vector<2x8x32xbf16>, vector<2x8x32xf32> -> vector<2x8x32xf32>
    "tpu.trace_stop"() : () -> ()
    %208 = vector.extract_strided_slice %154 {offsets = [0, 0, 96], sizes = [2, 8, 32], strides = [1, 1, 1]} : vector<2x8x128xbf16> to vector<2x8x32xbf16>
    %209 = vector.extract_strided_slice %155 {offsets = [0, 0, 96], sizes = [2, 8, 32], strides = [1, 1, 1]} : vector<2x8x128xbf16> to vector<2x8x32xbf16>
    %210 = vector.extract_strided_slice %156 {offsets = [0, 0, 96], sizes = [2, 8, 32], strides = [1, 1, 1]} : vector<2x8x128xbf16> to vector<2x8x32xbf16>
    "tpu.trace_start"() <{level = 10 : i32, message = "btd,bsd->bts"}> : () -> ()
    %cst_69 = arith.constant dense<0.000000e+00> : vector<2x8x8xf32>
    %211 = tpu.matmul %208, %209, %cst_69 {dimension_numbers = #tpu.dot_dimension_numbers<[2], [2], [1], [1], [0, 0, 0, 1, 1, 1], [0], [0]>} : vector<2x8x32xbf16>, vector<2x8x32xbf16>, vector<2x8x8xf32> -> vector<2x8x8xf32>
    "tpu.trace_stop"() : () -> ()
    %212 = arith.addf %211, %6 : vector<2x8x8xf32>
    %cst_70 = arith.constant dense<0xFF800000> : vector<2x8xf32>
    %213 = vector.multi_reduction <maximumf>, %212, %cst_70 [2] : vector<2x8x8xf32> to vector<2x8xf32>
    %214 = vector.shape_cast %213 : vector<2x8xf32> to vector<2x8x1xf32>
    %215 = vector.broadcast %214 : vector<2x8x1xf32> to vector<2x8x8xf32>
    %216 = arith.subf %212, %215 : vector<2x8x8xf32>
    %217 = math.exp %216 : vector<2x8x8xf32>
    %cst_71 = arith.constant dense<0.000000e+00> : vector<2x8xf32>
    %218 = vector.multi_reduction <add>, %217, %cst_71 [2] : vector<2x8x8xf32> to vector<2x8xf32>
    %219 = vector.shape_cast %218 : vector<2x8xf32> to vector<2x8x1xf32>
    %220 = tpu.reciprocal %219 {approx = true} : vector<2x8x1xf32> -> vector<2x8x1xf32>
    %221 = vector.broadcast %220 : vector<2x8x1xf32> to vector<2x8x8xf32>
    %222 = arith.mulf %217, %221 : vector<2x8x8xf32>
    %223 = arith.truncf %222 : vector<2x8x8xf32> to vector<2x8x8xbf16>
    "tpu.trace_start"() <{level = 10 : i32, message = "bts,bsd->btd"}> : () -> ()
    %cst_72 = arith.constant dense<0.000000e+00> : vector<2x8x32xf32>
    %224 = tpu.matmul %223, %210, %cst_72 {dimension_numbers = #tpu.dot_dimension_numbers<[2], [1], [1], [2], [0, 0, 0, 1, 1, 2], [0], [0]>} : vector<2x8x8xbf16>, vector<2x8x32xbf16>, vector<2x8x32xf32> -> vector<2x8x32xf32>
    "tpu.trace_stop"() : () -> ()
    %225 = tpu.concatenate %173, %190, %207, %224 in 2 : vector<2x8x32xf32>, vector<2x8x32xf32>, vector<2x8x32xf32>, vector<2x8x32xf32> -> vector<2x8x128xf32>
    %226 = vector.shape_cast %225 : vector<2x8x128xf32> to vector<16x128xf32>
    %227 = arith.truncf %226 : vector<16x128xf32> to vector<16x128xbf16>
    %c0_73 = arith.constant 0 : index
    %c0_74 = arith.constant 0 : index
    %c0_75 = arith.constant 0 : index
    %228 = vector.load %arg12[%c0_73, %c0_74, %c0_75] : memref<1x128x128xbf16, #tpu.memory_space<vmem>>, vector<1x128x128xbf16>
    %229 = vector.shape_cast %228 : vector<1x128x128xbf16> to vector<128x128xbf16>
    %cst_76 = arith.constant dense<0.000000e+00> : vector<16x128xf32>
    %230 = tpu.matmul %227, %229, %cst_76 {dimension_numbers = #tpu.dot_dimension_numbers<[1], [0], [0], [1], [0, 0, 1, 1], [], []>} : vector<16x128xbf16>, vector<128x128xbf16>, vector<16x128xf32> -> vector<16x128xf32>
    %231 = vector.extract_strided_slice %8 {offsets = [4, 0], sizes = [1, 128], strides = [1, 1]} : vector<10x128xf32> to vector<1x128xf32>
    %232 = vector.broadcast %231 : vector<1x128xf32> to vector<16x128xf32>
    %233 = arith.addf %230, %232 : vector<16x128xf32>
    %234 = vector.shape_cast %233 : vector<16x128xf32> to vector<2x8x128xf32>
    %235 = arith.addf %234, %131 : vector<2x8x128xf32>
    %236 = vector.extract_strided_slice %8 {offsets = [5, 0], sizes = [1, 128], strides = [1, 1]} : vector<10x128xf32> to vector<1x128xf32>
    %237 = vector.extract_strided_slice %8 {offsets = [6, 0], sizes = [1, 128], strides = [1, 1]} : vector<10x128xf32> to vector<1x128xf32>
    %cst_77 = arith.constant dense<0.000000e+00> : vector<2x8xf32>
    %238 = vector.multi_reduction <add>, %235, %cst_77 [2] : vector<2x8x128xf32> to vector<2x8xf32>
    %239 = vector.shape_cast %238 : vector<2x8xf32> to vector<2x8x1xf32>
    %cst_78 = arith.constant 1.280000e+02 : f32
    %240 = vector.broadcast %cst_78 : f32 to vector<2x8x1xf32>
    %241 = arith.divf %239, %240 : vector<2x8x1xf32>
    %242 = vector.broadcast %241 : vector<2x8x1xf32> to vector<2x8x128xf32>
    %243 = arith.subf %235, %242 : vector<2x8x128xf32>
    %244 = arith.mulf %243, %243 : vector<2x8x128xf32>
    %cst_79 = arith.constant dense<0.000000e+00> : vector<2x8xf32>
    %245 = vector.multi_reduction <add>, %244, %cst_79 [2] : vector<2x8x128xf32> to vector<2x8xf32>
    %246 = vector.shape_cast %245 : vector<2x8xf32> to vector<2x8x1xf32>
    %cst_80 = arith.constant 1.280000e+02 : f32
    %247 = vector.broadcast %cst_80 : f32 to vector<2x8x1xf32>
    %248 = arith.divf %246, %247 : vector<2x8x1xf32>
    %249 = vector.broadcast %241 : vector<2x8x1xf32> to vector<2x8x128xf32>
    %250 = arith.subf %235, %249 : vector<2x8x128xf32>
    %cst_81 = arith.constant 9.99999996E-13 : f32
    %251 = vector.broadcast %cst_81 : f32 to vector<2x8x1xf32>
    %252 = arith.addf %248, %251 : vector<2x8x1xf32>
    %253 = math.rsqrt %252 : vector<2x8x1xf32>
    %254 = vector.broadcast %253 : vector<2x8x1xf32> to vector<2x8x128xf32>
    %255 = arith.mulf %250, %254 : vector<2x8x128xf32>
    %256 = vector.shape_cast %236 : vector<1x128xf32> to vector<1x1x128xf32>
    %257 = vector.broadcast %256 : vector<1x1x128xf32> to vector<2x8x128xf32>
    %258 = arith.mulf %257, %255 : vector<2x8x128xf32>
    %259 = vector.shape_cast %237 : vector<1x128xf32> to vector<1x1x128xf32>
    %260 = vector.broadcast %259 : vector<1x1x128xf32> to vector<2x8x128xf32>
    %261 = arith.addf %258, %260 : vector<2x8x128xf32>
    %262 = vector.shape_cast %261 : vector<2x8x128xf32> to vector<16x128xf32>
    %263 = arith.truncf %262 : vector<16x128xf32> to vector<16x128xbf16>
    %c0_82 = arith.constant 0 : index
    %c0_83 = arith.constant 0 : index
    %c0_84 = arith.constant 0 : index
    %264 = vector.load %arg13[%c0_82, %c0_83, %c0_84] : memref<1x128x256xbf16, #tpu.memory_space<vmem>>, vector<1x128x256xbf16>
    %265 = vector.shape_cast %264 : vector<1x128x256xbf16> to vector<128x256xbf16>
    %cst_85 = arith.constant dense<0.000000e+00> : vector<16x256xf32>
    %266 = tpu.matmul %263, %265, %cst_85 {dimension_numbers = #tpu.dot_dimension_numbers<[1], [0], [0], [1], [0, 0, 1, 1], [], []>} : vector<16x128xbf16>, vector<128x256xbf16>, vector<16x256xf32> -> vector<16x256xf32>
    %c0_86 = arith.constant 0 : index
    %c0_87 = arith.constant 0 : index
    %c0_88 = arith.constant 0 : index
    %267 = vector.load %arg14[%c0_86, %c0_87, %c0_88] : memref<1x1x256xf32, #tpu.memory_space<vmem>>, vector<1x1x256xf32>
    %268 = vector.shape_cast %267 : vector<1x1x256xf32> to vector<1x256xf32>
    %269 = vector.broadcast %268 : vector<1x256xf32> to vector<16x256xf32>
    %270 = arith.addf %266, %269 : vector<16x256xf32>
    %cst_89 = arith.constant 0.000000e+00 : f32
    %271 = vector.broadcast %cst_89 : f32 to vector<16x256xf32>
    %272 = arith.maximumf %270, %271 : vector<16x256xf32>
    %273 = arith.truncf %272 : vector<16x256xf32> to vector<16x256xbf16>
    %c0_90 = arith.constant 0 : index
    %c0_91 = arith.constant 0 : index
    %c0_92 = arith.constant 0 : index
    %274 = vector.load %arg15[%c0_90, %c0_91, %c0_92] : memref<1x256x128xbf16, #tpu.memory_space<vmem>>, vector<1x256x128xbf16>
    %275 = vector.shape_cast %274 : vector<1x256x128xbf16> to vector<256x128xbf16>
    %cst_93 = arith.constant dense<0.000000e+00> : vector<16x128xf32>
    %276 = tpu.matmul %273, %275, %cst_93 {dimension_numbers = #tpu.dot_dimension_numbers<[1], [0], [0], [1], [0, 0, 1, 1], [], []>} : vector<16x256xbf16>, vector<256x128xbf16>, vector<16x128xf32> -> vector<16x128xf32>
    %277 = vector.extract_strided_slice %8 {offsets = [7, 0], sizes = [1, 128], strides = [1, 1]} : vector<10x128xf32> to vector<1x128xf32>
    %278 = vector.broadcast %277 : vector<1x128xf32> to vector<16x128xf32>
    %279 = arith.addf %276, %278 : vector<16x128xf32>
    %280 = vector.shape_cast %279 : vector<16x128xf32> to vector<2x8x128xf32>
    %281 = arith.addf %280, %261 : vector<2x8x128xf32>
    %282 = vector.extract_strided_slice %8 {offsets = [8, 0], sizes = [1, 128], strides = [1, 1]} : vector<10x128xf32> to vector<1x128xf32>
    %283 = vector.extract_strided_slice %8 {offsets = [9, 0], sizes = [1, 128], strides = [1, 1]} : vector<10x128xf32> to vector<1x128xf32>
    %cst_94 = arith.constant dense<0.000000e+00> : vector<2x8xf32>
    %284 = vector.multi_reduction <add>, %281, %cst_94 [2] : vector<2x8x128xf32> to vector<2x8xf32>
    %285 = vector.shape_cast %284 : vector<2x8xf32> to vector<2x8x1xf32>
    %cst_95 = arith.constant 1.280000e+02 : f32
    %286 = vector.broadcast %cst_95 : f32 to vector<2x8x1xf32>
    %287 = arith.divf %285, %286 : vector<2x8x1xf32>
    %288 = vector.broadcast %287 : vector<2x8x1xf32> to vector<2x8x128xf32>
    %289 = arith.subf %281, %288 : vector<2x8x128xf32>
    %290 = arith.mulf %289, %289 : vector<2x8x128xf32>
    %cst_96 = arith.constant dense<0.000000e+00> : vector<2x8xf32>
    %291 = vector.multi_reduction <add>, %290, %cst_96 [2] : vector<2x8x128xf32> to vector<2x8xf32>
    %292 = vector.shape_cast %291 : vector<2x8xf32> to vector<2x8x1xf32>
    %cst_97 = arith.constant 1.280000e+02 : f32
    %293 = vector.broadcast %cst_97 : f32 to vector<2x8x1xf32>
    %294 = arith.divf %292, %293 : vector<2x8x1xf32>
    %295 = vector.broadcast %287 : vector<2x8x1xf32> to vector<2x8x128xf32>
    %296 = arith.subf %281, %295 : vector<2x8x128xf32>
    %cst_98 = arith.constant 9.99999996E-13 : f32
    %297 = vector.broadcast %cst_98 : f32 to vector<2x8x1xf32>
    %298 = arith.addf %294, %297 : vector<2x8x1xf32>
    %299 = math.rsqrt %298 : vector<2x8x1xf32>
    %300 = vector.broadcast %299 : vector<2x8x1xf32> to vector<2x8x128xf32>
    %301 = arith.mulf %296, %300 : vector<2x8x128xf32>
    %302 = vector.shape_cast %282 : vector<1x128xf32> to vector<1x1x128xf32>
    %303 = vector.broadcast %302 : vector<1x1x128xf32> to vector<2x8x128xf32>
    %304 = arith.mulf %303, %301 : vector<2x8x128xf32>
    %305 = vector.shape_cast %283 : vector<1x128xf32> to vector<1x1x128xf32>
    %306 = vector.broadcast %305 : vector<1x1x128xf32> to vector<2x8x128xf32>
    %307 = arith.addf %304, %306 : vector<2x8x128xf32>
    %c0_99 = arith.constant 0 : index
    %c0_100 = arith.constant 0 : index
    %c0_101 = arith.constant 0 : index
    %308 = vector.load %arg17[%c0_99, %c0_100, %c0_101] : memref<2x8x128xf32, #tpu.memory_space<vmem>>, vector<2x8x128xf32>
    tpu.vector_store %arg17[%c0_99, %c0_100, %c0_101], %307 {strides = array<i32>} : memref<2x8x128xf32, #tpu.memory_space<vmem>>, vector<2x8x128xf32>,
    return
  }
  func.func @transform_0(%arg0: i32, %arg1: i32) -> (i32, i32, i32) {
    %c0_i32 = arith.constant 0 : i32
    %c0_i32_0 = arith.constant 0 : i32
    %c0_i32_1 = arith.constant 0 : i32
    return %arg0, %c0_i32, %c0_i32_0 : i32, i32, i32
  }
  func.func @transform_1(%arg0: i32, %arg1: i32) -> (i32, i32, i32) {
    %c0_i32 = arith.constant 0 : i32
    %c0_i32_0 = arith.constant 0 : i32
    %c0_i32_1 = arith.constant 0 : i32
    return %arg0, %c0_i32, %c0_i32_0 : i32, i32, i32
  }
  func.func @transform_2(%arg0: i32, %arg1: i32) -> (i32, i32, i32) {
    %c0_i32 = arith.constant 0 : i32
    %c0_i32_0 = arith.constant 0 : i32
    %c0_i32_1 = arith.constant 0 : i32
    return %arg0, %c0_i32, %c0_i32_0 : i32, i32, i32
  }
  func.func @transform_3(%arg0: i32, %arg1: i32) -> (i32, i32, i32) {
    %c0_i32 = arith.constant 0 : i32
    %c0_i32_0 = arith.constant 0 : i32
    %c0_i32_1 = arith.constant 0 : i32
    return %arg0, %c0_i32, %c0_i32_0 : i32, i32, i32
  }
  func.func @transform_4(%arg0: i32, %arg1: i32) -> (i32, i32, i32) {
    %c0_i32 = arith.constant 0 : i32
    %c0_i32_0 = arith.constant 0 : i32
    %c0_i32_1 = arith.constant 0 : i32
    return %arg1, %c0_i32, %c0_i32_0 : i32, i32, i32
  }
  func.func @transform_5(%arg0: i32, %arg1: i32) -> (i32, i32, i32) {
    %c0_i32 = arith.constant 0 : i32
    %c0_i32_0 = arith.constant 0 : i32
    %c0_i32_1 = arith.constant 0 : i32
    return %arg1, %c0_i32, %c0_i32_0 : i32, i32, i32
  }
  func.func @transform_6(%arg0: i32, %arg1: i32) -> (i32, i32, i32) {
    %c0_i32 = arith.constant 0 : i32
    %c0_i32_0 = arith.constant 0 : i32
    %c0_i32_1 = arith.constant 0 : i32
    return %arg1, %c0_i32, %c0_i32_0 : i32, i32, i32
  }
  func.func @transform_7(%arg0: i32, %arg1: i32) -> (i32, i32, i32) {
    %c0_i32 = arith.constant 0 : i32
    %c0_i32_0 = arith.constant 0 : i32
    %c0_i32_1 = arith.constant 0 : i32
    return %arg1, %c0_i32, %c0_i32_0 : i32, i32, i32
  }
  func.func @transform_8(%arg0: i32, %arg1: i32) -> (i32, i32, i32) {
    %c0_i32 = arith.constant 0 : i32
    %c0_i32_0 = arith.constant 0 : i32
    %c0_i32_1 = arith.constant 0 : i32
    return %arg1, %c0_i32, %c0_i32_0 : i32, i32, i32
  }
  func.func @transform_9(%arg0: i32, %arg1: i32) -> (i32, i32, i32) {
    %c0_i32 = arith.constant 0 : i32
    %c0_i32_0 = arith.constant 0 : i32
    %c0_i32_1 = arith.constant 0 : i32
    return %arg1, %c0_i32, %c0_i32_0 : i32, i32, i32
  }
  func.func @transform_10(%arg0: i32, %arg1: i32) -> (i32, i32, i32) {
    %c0_i32 = arith.constant 0 : i32
    %c0_i32_0 = arith.constant 0 : i32
    %c0_i32_1 = arith.constant 0 : i32
    return %arg1, %c0_i32, %c0_i32_0 : i32, i32, i32
  }
  func.func @transform_11(%arg0: i32, %arg1: i32) -> (i32, i32, i32) {
    %c0_i32 = arith.constant 0 : i32
    %c0_i32_0 = arith.constant 0 : i32
    %c0_i32_1 = arith.constant 0 : i32
    return %arg1, %c0_i32, %c0_i32_0 : i32, i32, i32
  }
  func.func @transform_12(%arg0: i32, %arg1: i32) -> (i32, i32, i32) {
    %c0_i32 = arith.constant 0 : i32
    %c0_i32_0 = arith.constant 0 : i32
    %c0_i32_1 = arith.constant 0 : i32
    return %arg1, %c0_i32, %c0_i32_0 : i32, i32, i32
  }
  func.func @transform_13(%arg0: i32, %arg1: i32) -> (i32, i32, i32) {
    %c0_i32 = arith.constant 0 : i32
    %c0_i32_0 = arith.constant 0 : i32
    %c0_i32_1 = arith.constant 0 : i32
    return %arg1, %c0_i32, %c0_i32_0 : i32, i32, i32
  }
  func.func @transform_14(%arg0: i32, %arg1: i32) -> (i32, i32, i32) {
    %c0_i32 = arith.constant 0 : i32
    %c0_i32_0 = arith.constant 0 : i32
    %c0_i32_1 = arith.constant 0 : i32
    return %arg1, %c0_i32, %c0_i32_0 : i32, i32, i32
  }
  func.func @transform_15(%arg0: i32, %arg1: i32) -> (i32, i32, i32) {
    %c0_i32 = arith.constant 0 : i32
    %c0_i32_0 = arith.constant 0 : i32
    %c0_i32_1 = arith.constant 0 : i32
    return %arg0, %c0_i32, %c0_i32_0 : i32, i32, i32
  }
}

</mosaic_0001>

<llo_original>
// kernel: tpu_custom_call.1
$region0: #{tpu_custom_call.1}
  #allocation0 [shape = 'u32[]', space=smem, size = 0x4, offset = 0x4, fixed_abs, tag = 'smem constant byte address 0x4 - core index']
  #allocation1 [shape = 'u32[72,128]{1,0:T(1,128)}', space=vmem, size = 0x9000, scoped, tag = 'internal scratch']
  %s0 = inlined_call_operand.vmem [shape: f32[2,8,128], index: 0, kind: input, shape index: {}]
  %s1 = inlined_call_operand.vmem [shape: f32[2,8,128], index: 1, kind: input, shape index: {}]
  %s2 = inlined_call_operand.vmem [shape: f32[2,8,8], index: 2, kind: input, shape index: {}]
  %s3 = inlined_call_operand.hbm [shape: f32[2,8,8], index: 3, kind: input, shape index: {}]
  %s4 = inlined_call_operand.hbm [shape: bf16[2,128,384], index: 4, kind: input, shape index: {}]
  %s5 = inlined_call_operand.vmem [shape: f32[2,1,384], index: 5, kind: input, shape index: {}]
  %s6 = inlined_call_operand.hbm [shape: bf16[2,128,128], index: 6, kind: input, shape index: {}]
  %s7 = inlined_call_operand.hbm [shape: bf16[2,128,128], index: 7, kind: input, shape index: {}]
  %s8 = inlined_call_operand.hbm [shape: bf16[2,128,256], index: 8, kind: input, shape index: {}]
  %s9 = inlined_call_operand.vmem [shape: f32[2,1,256], index: 9, kind: input, shape index: {}]
  %s10 = inlined_call_operand.hbm [shape: bf16[2,128,128], index: 10, kind: input, shape index: {}]
  %s11 = inlined_call_operand.hbm [shape: bf16[2,128,256], index: 11, kind: input, shape index: {}]
  %s12 = inlined_call_operand.vmem [shape: f32[2,1,256], index: 12, kind: input, shape index: {}]
  %s13 = inlined_call_operand.hbm [shape: bf16[2,256,128], index: 13, kind: input, shape index: {}]
  %s14 = inlined_call_operand.vmem [shape: f32[2,10,128], index: 14, kind: input, shape index: {}]
  %s15 = inlined_call_operand.hbm [shape: f32[2,8,128], index: 15, kind: output, shape index: {}]
  %s16 = sld [smem:[#allocation0]]
  $region129: #{tpu_custom_call.1} parent=0
    _
  %s18 = ssub.s32 1, %s16
  %s19 = scalar_select 0, %s18, %s16
  $region1: #{tpu_custom_call.1} parent=0
    #allocation2 [shape = 'u8[8192]{0}', space=vmem, size = 0x2000, scoped, tag = 'input window, operand 3, single buffered']
    #allocation3 [shape = 's32[2]{0}', space=sflag, size = 0x8, scoped, tag = 'scoped memory for tpu_custom_call.1']
    #allocation4 [shape = 's32[2]{0}', space=sflag, size = 0x8, scoped, tag = 'scoped memory for tpu_custom_call.1']
    #allocation5 [shape = 'u8[196608]{0}', space=vmem, size = 0x30000, scoped, tag = 'input window, operand 4']
    #allocation6 [shape = 's32[2]{0}', space=sflag, size = 0x8, scoped, tag = 'scoped memory for tpu_custom_call.1']
    #allocation7 [shape = 'u8[65536]{0}', space=vmem, size = 0x10000, scoped, tag = 'input window, operand 6']
    #allocation8 [shape = 'u8[65536]{0}', space=vmem, size = 0x10000, scoped, tag = 'input window, operand 7']
    #allocation9 [shape = 's32[2]{0}', space=sflag, size = 0x8, scoped, tag = 'scoped memory for tpu_custom_call.1']
    #allocation10 [shape = 'u8[131072]{0}', space=vmem, size = 0x20000, scoped, tag = 'input window, operand 8']
    #allocation11 [shape = 'u8[65536]{0}', space=vmem, size = 0x10000, scoped, tag = 'input window, operand 10']
    #allocation12 [shape = 's32[2]{0}', space=sflag, size = 0x8, scoped, tag = 'scoped memory for tpu_custom_call.1']
    #allocation13 [shape = 'u8[131072]{0}', space=vmem, size = 0x20000, scoped, tag = 'input window, operand 11']
    #allocation14 [shape = 'u8[131072]{0}', space=vmem, size = 0x20000, scoped, tag = 'input window, operand 13']
    #allocation15 [shape = 's32[2]{0}', space=sflag, size = 0x8, scoped, tag = 'scoped memory for tpu_custom_call.1']
    #allocation16 [shape = 'u8[8192]{0}', space=vmem, size = 0x2000, scoped, tag = 'output window, operand 0, single buffered']
    %20 = vsyncpa [#allocation3], 0
    %21 = vsyncpa [#allocation6], 0
    %s22 = scalar_lea.sflag [#allocation6], 1
    %23 = vsyncpa %s22, 0
    %24 = vsyncpa [#allocation9], 0
    %s25 = scalar_lea.sflag [#allocation9], 1
    %26 = vsyncpa %s25, 0
    %27 = vsyncpa [#allocation12], 0
    %s28 = scalar_lea.sflag [#allocation12], 1
    %29 = vsyncpa %s28, 0
    %30 = vsyncpa [#allocation15], 0
    %s31 = scalar_lea.sflag [#allocation15], 1
    %32 = vsyncpa %s31, 0
    %33 = vsyncpa [#allocation4], 0
    loop: start=0, step=1, limit=4
    $region2: #{tpu_custom_call.1} parent=1 // loop_pre_header
      _
    $region3: #{tpu_custom_call.1} parent=1 // loop_header
      %s35 = sphi 0, %s39
      %p36 = scmp.ge.s32.totalorder %s35, 4
      %s42 = sphi 0, %s54
      %s43 = sphi 0, %s50
      %s44 = sphi 0, %s42
      %s45 = sphi 0, %s43
      %s46 = sphi 0, %s44
      %s47 = sphi 0, %s45
      %s57 = sphi 0, %s59
      %s60 = sphi 0, %s57
      %s61 = sphi 0, %s60
      %s77 = sphi 0, %s61
      %s83 = sphi 0, %s85
      %s86 = sphi 0, %s83
      %s87 = sphi 0, %s86
      %s103 = sphi 0, %s87
      %s109 = sphi 0, %s111
      %s112 = sphi 0, %s109
      %s113 = sphi 0, %s112
      %s129 = sphi 0, %s113
      %s135 = sphi 0, %s137
      %s138 = sphi 0, %s135
      %s139 = sphi 0, %s138
      %s155 = sphi 0, %s139
      %s161 = sphi 0, %s163
      %s164 = sphi 0, %s161
      %s165 = sphi 0, %s164
      %s181 = sphi 0, %s165
      %s187 = sphi 0, %s189
      %s190 = sphi 0, %s187
      %s191 = sphi 0, %s190
      %s207 = sphi 0, %s191
      %s213 = sphi 0, %s215
      %s216 = sphi 0, %s213
      %s217 = sphi 0, %s216
      %s233 = sphi 0, %s217
      %s239 = sphi 0, %s241
      %s242 = sphi 0, %s239
      %s243 = sphi 0, %s242
      %s259 = sphi 0, %s243
      %s265 = sphi 0, %s267
      %s268 = sphi 0, %s265
      %s269 = sphi 0, %s268
      %s285 = sphi 0, %s269
      %s291 = sphi 0, %s293
      %s294 = sphi 0, %s291
      %s295 = sphi 0, %s294
      %s311 = sphi 0, %s295
      %s317 = sphi 0, %s319
      %s320 = sphi 0, %s317
      %s321 = sphi 0, %s320
      %s337 = sphi 0, %s321
      %s343 = sphi 0, %s345
      %s346 = sphi 0, %s343
      %s347 = sphi 0, %s346
      %s363 = sphi 0, %s347
      %s369 = sphi 0, %s371
      %s372 = sphi 0, %s369
      %s373 = sphi 0, %s372
      %s389 = sphi 0, %s373
      %s395 = sphi 0, %s397
      %s398 = sphi 0, %s395
      %s399 = sphi 0, %s398
      %s415 = sphi 0, %s399
      %s421 = sphi 0, %s423
      %s424 = sphi 0, %s421
      %s425 = sphi 0, %s424
      %s441 = sphi 0, %s425
      %s447 = sphi 0, %s449
      %s450 = sphi 0, %s447
      %s451 = sphi 0, %s450
      %s467 = sphi 0, %s451
    $region4: #{tpu_custom_call.1} parent=1 // loop_header_branch
      %38 = sbr.rel (%p36) target = $region8
    $region5: #{tpu_custom_call.1} parent=1 // loop_body
      %s40 = ssub.s32 %s35, 1
      %s41 = ssub.s32 %s35, 2
      %s48 = sadd.s32 1, %s43
      %p49 = scmp.ge.s32.totalorder %s48, 2
      %s50 = scalar_select %p49, 0, %s48
      %s51 = sadd.s32 1, %s42
      %s52 = scalar_select %p49, %s51, %s42
      %p53 = scmp.ge.s32.totalorder %s52, 1
      %s54 = scalar_select %p53, 0, %s52
      %s55 = ssub.s32 %s42, %s54
      %p56 = scmp.eq.s32.totalorder %s55, 0
      %s58 = sadd.s32 %s57, 1
      %s59 = scalar_select %p56, %s57, %s58
      %p62 = pneg %p56
      %p63 = scmp.eq.s32.totalorder %s35, 1
      %p64 = por %p62, %p63
      %p65 = scmp.ne.s32.totalorder %s57, %s60
      %p66 = scmp.eq.s32.totalorder %s35, 0
      %p67 = por %p65, %p66
      %p68 = scmp.ne.s32.totalorder %s57, %s60
      %p69 = scmp.eq.s32.totalorder %s40, 1
      %p70 = por %p68, %p69
      %p71 = scmp.ne.s32.totalorder %s60, %s61
      %p72 = scmp.eq.s32.totalorder %s40, 0
      %p73 = por %p71, %p72
      %p74 = scmp.ne.s32.totalorder %s60, %s61
      %p75 = scmp.eq.s32.totalorder %s41, 1
      %p76 = por %p74, %p75
      %p78 = scmp.ne.s32.totalorder %s61, %s77
      %p79 = scmp.eq.s32.totalorder %s41, 0
      %p80 = por %p78, %p79
      %s81 = ssub.s32 %s42, %s54
      %p82 = scmp.eq.s32.totalorder %s81, 0
      %s84 = sadd.s32 %s83, 1
      %s85 = scalar_select %p82, %s83, %s84
      %p88 = pneg %p82
      %p89 = scmp.eq.s32.totalorder %s35, 1
      %p90 = por %p88, %p89
      %p91 = scmp.ne.s32.totalorder %s83, %s86
      %p92 = scmp.eq.s32.totalorder %s35, 0
      %p93 = por %p91, %p92
      %p94 = scmp.ne.s32.totalorder %s83, %s86
      %p95 = scmp.eq.s32.totalorder %s40, 1
      %p96 = por %p94, %p95
      %p97 = scmp.ne.s32.totalorder %s86, %s87
      %p98 = scmp.eq.s32.totalorder %s40, 0
      %p99 = por %p97, %p98
      %p100 = scmp.ne.s32.totalorder %s86, %s87
      %p101 = scmp.eq.s32.totalorder %s41, 1
      %p102 = por %p100, %p101
      %p104 = scmp.ne.s32.totalorder %s87, %s103
      %p105 = scmp.eq.s32.totalorder %s41, 0
      %p106 = por %p104, %p105
      %s107 = ssub.s32 %s42, %s54
      %p108 = scmp.eq.s32.totalorder %s107, 0
      %s110 = sadd.s32 %s109, 1
      %s111 = scalar_select %p108, %s109, %s110
      %p114 = pneg %p108
      %p115 = scmp.eq.s32.totalorder %s35, 1
      %p116 = por %p114, %p115
      %p117 = scmp.ne.s32.totalorder %s109, %s112
      %p118 = scmp.eq.s32.totalorder %s35, 0
      %p119 = por %p117, %p118
      %p120 = scmp.ne.s32.totalorder %s109, %s112
      %p121 = scmp.eq.s32.totalorder %s40, 1
      %p122 = por %p120, %p121
      %p123 = scmp.ne.s32.totalorder %s112, %s113
      %p124 = scmp.eq.s32.totalorder %s40, 0
      %p125 = por %p123, %p124
      %p126 = scmp.ne.s32.totalorder %s112, %s113
      %p127 = scmp.eq.s32.totalorder %s41, 1
      %p128 = por %p126, %p127
      %p130 = scmp.ne.s32.totalorder %s113, %s129
      %p131 = scmp.eq.s32.totalorder %s41, 0
      %p132 = por %p130, %p131
      %s133 = ssub.s32 %s42, %s54
      %p134 = scmp.eq.s32.totalorder %s133, 0
      %s136 = sadd.s32 %s135, 1
      %s137 = scalar_select %p134, %s135, %s136
      %p140 = pneg %p134
      %p141 = scmp.eq.s32.totalorder %s35, 1
      %p142 = por %p140, %p141
      %p143 = scmp.ne.s32.totalorder %s135, %s138
      %p144 = scmp.eq.s32.totalorder %s35, 0
      %p145 = por %p143, %p144
      %p146 = scmp.ne.s32.totalorder %s135, %s138
      %p147 = scmp.eq.s32.totalorder %s40, 1
      %p148 = por %p146, %p147
      %p149 = scmp.ne.s32.totalorder %s138, %s139
      %p150 = scmp.eq.s32.totalorder %s40, 0
      %p151 = por %p149, %p150
      %p152 = scmp.ne.s32.totalorder %s138, %s139
      %p153 = scmp.eq.s32.totalorder %s41, 1
      %p154 = por %p152, %p153
      %p156 = scmp.ne.s32.totalorder %s139, %s155
      %p157 = scmp.eq.s32.totalorder %s41, 0
      %p158 = por %p156, %p157
      %s159 = ssub.s32 %s43, %s50
      %p160 = scmp.eq.s32.totalorder %s159, 0
      %s162 = sadd.s32 %s161, 1
      %s163 = scalar_select %p160, %s161, %s162
      %p166 = pneg %p160
      %p167 = scmp.eq.s32.totalorder %s35, 1
      %p168 = por %p166, %p167
      %p169 = scmp.ne.s32.totalorder %s161, %s164
      %p170 = scmp.eq.s32.totalorder %s35, 0
      %p171 = por %p169, %p170
      %p172 = scmp.ne.s32.totalorder %s161, %s164
      %p173 = scmp.eq.s32.totalorder %s40, 1
      %p174 = por %p172, %p173
      %p175 = scmp.ne.s32.totalorder %s164, %s165
      %p176 = scmp.eq.s32.totalorder %s40, 0
      %p177 = por %p175, %p176
      %p178 = scmp.ne.s32.totalorder %s164, %s165
      %p179 = scmp.eq.s32.totalorder %s41, 1
      %p180 = por %p178, %p179
      %p182 = scmp.ne.s32.totalorder %s165, %s181
      %p183 = scmp.eq.s32.totalorder %s41, 0
      %p184 = por %p182, %p183
      %s185 = ssub.s32 %s43, %s50
      %p186 = scmp.eq.s32.totalorder %s185, 0
      %s188 = sadd.s32 %s187, 1
      %s189 = scalar_select %p186, %s187, %s188
      %p192 = pneg %p186
      %p193 = scmp.eq.s32.totalorder %s35, 1
      %p194 = por %p192, %p193
      %p195 = scmp.ne.s32.totalorder %s187, %s190
      %p196 = scmp.eq.s32.totalorder %s35, 0
      %p197 = por %p195, %p196
      %p198 = scmp.ne.s32.totalorder %s187, %s190
      %p199 = scmp.eq.s32.totalorder %s40, 1
      %p200 = por %p198, %p199
      %p201 = scmp.ne.s32.totalorder %s190, %s191
      %p202 = scmp.eq.s32.totalorder %s40, 0
      %p203 = por %p201, %p202
      %p204 = scmp.ne.s32.totalorder %s190, %s191
      %p205 = scmp.eq.s32.totalorder %s41, 1
      %p206 = por %p204, %p205
      %p208 = scmp.ne.s32.totalorder %s191, %s207
      %p209 = scmp.eq.s32.totalorder %s41, 0
      %p210 = por %p208, %p209
      %s211 = ssub.s32 %s43, %s50
      %p212 = scmp.eq.s32.totalorder %s211, 0
      %s214 = sadd.s32 %s213, 1
      %s215 = scalar_select %p212, %s213, %s214
      %p218 = pneg %p212
      %p219 = scmp.eq.s32.totalorder %s35, 1
      %p220 = por %p218, %p219
      %p221 = scmp.ne.s32.totalorder %s213, %s216
      %p222 = scmp.eq.s32.totalorder %s35, 0
      %p223 = por %p221, %p222
      %p224 = scmp.ne.s32.totalorder %s213, %s216
      %p225 = scmp.eq.s32.totalorder %s40, 1
      %p226 = por %p224, %p225
      %p227 = scmp.ne.s32.totalorder %s216, %s217
      %p228 = scmp.eq.s32.totalorder %s40, 0
      %p229 = por %p227, %p228
      %p230 = scmp.ne.s32.totalorder %s216, %s217
      %p231 = scmp.eq.s32.totalorder %s41, 1
      %p232 = por %p230, %p231
      %p234 = scmp.ne.s32.totalorder %s217, %s233
      %p235 = scmp.eq.s32.totalorder %s41, 0
      %p236 = por %p234, %p235
      %s237 = ssub.s32 %s43, %s50
      %p238 = scmp.eq.s32.totalorder %s237, 0
      %s240 = sadd.s32 %s239, 1
      %s241 = scalar_select %p238, %s239, %s240
      %p244 = pneg %p238
      %p245 = scmp.eq.s32.totalorder %s35, 1
      %p246 = por %p244, %p245
      %p247 = scmp.ne.s32.totalorder %s239, %s242
      %p248 = scmp.eq.s32.totalorder %s35, 0
      %p249 = por %p247, %p248
      %p250 = scmp.ne.s32.totalorder %s239, %s242
      %p251 = scmp.eq.s32.totalorder %s40, 1
      %p252 = por %p250, %p251
      %p253 = scmp.ne.s32.totalorder %s242, %s243
      %p254 = scmp.eq.s32.totalorder %s40, 0
      %p255 = por %p253, %p254
      %p256 = scmp.ne.s32.totalorder %s242, %s243
      %p257 = scmp.eq.s32.totalorder %s41, 1
      %p258 = por %p256, %p257
      %p260 = scmp.ne.s32.totalorder %s243, %s259
      %p261 = scmp.eq.s32.totalorder %s41, 0
      %p262 = por %p260, %p261
      %s263 = ssub.s32 %s43, %s50
      %p264 = scmp.eq.s32.totalorder %s263, 0
      %s266 = sadd.s32 %s265, 1
      %s267 = scalar_select %p264, %s265, %s266
      %p270 = pneg %p264
      %p271 = scmp.eq.s32.totalorder %s35, 1
      %p272 = por %p270, %p271
      %p273 = scmp.ne.s32.totalorder %s265, %s268
      %p274 = scmp.eq.s32.totalorder %s35, 0
      %p275 = por %p273, %p274
      %p276 = scmp.ne.s32.totalorder %s265, %s268
      %p277 = scmp.eq.s32.totalorder %s40, 1
      %p278 = por %p276, %p277
      %p279 = scmp.ne.s32.totalorder %s268, %s269
      %p280 = scmp.eq.s32.totalorder %s40, 0
      %p281 = por %p279, %p280
      %p282 = scmp.ne.s32.totalorder %s268, %s269
      %p283 = scmp.eq.s32.totalorder %s41, 1
      %p284 = por %p282, %p283
      %p286 = scmp.ne.s32.totalorder %s269, %s285
      %p287 = scmp.eq.s32.totalorder %s41, 0
      %p288 = por %p286, %p287
      %s289 = ssub.s32 %s43, %s50
      %p290 = scmp.eq.s32.totalorder %s289, 0
      %s292 = sadd.s32 %s291, 1
      %s293 = scalar_select %p290, %s291, %s292
      %p296 = pneg %p290
      %p297 = scmp.eq.s32.totalorder %s35, 1
      %p298 = por %p296, %p297
      %p299 = scmp.ne.s32.totalorder %s291, %s294
      %p300 = scmp.eq.s32.totalorder %s35, 0
      %p301 = por %p299, %p300
      %p302 = scmp.ne.s32.totalorder %s291, %s294
      %p303 = scmp.eq.s32.totalorder %s40, 1
      %p304 = por %p302, %p303
      %p305 = scmp.ne.s32.totalorder %s294, %s295
      %p306 = scmp.eq.s32.totalorder %s40, 0
      %p307 = por %p305, %p306
      %p308 = scmp.ne.s32.totalorder %s294, %s295
      %p309 = scmp.eq.s32.totalorder %s41, 1
      %p310 = por %p308, %p309
      %p312 = scmp.ne.s32.totalorder %s295, %s311
      %p313 = scmp.eq.s32.totalorder %s41, 0
      %p314 = por %p312, %p313
      %s315 = ssub.s32 %s43, %s50
      %p316 = scmp.eq.s32.totalorder %s315, 0
      %s318 = sadd.s32 %s317, 1
      %s319 = scalar_select %p316, %s317, %s318
      %p322 = pneg %p316
      %p323 = scmp.eq.s32.totalorder %s35, 1
      %p324 = por %p322, %p323
      %p325 = scmp.ne.s32.totalorder %s317, %s320
      %p326 = scmp.eq.s32.totalorder %s35, 0
      %p327 = por %p325, %p326
      %p328 = scmp.ne.s32.totalorder %s317, %s320
      %p329 = scmp.eq.s32.totalorder %s40, 1
      %p330 = por %p328, %p329
      %p331 = scmp.ne.s32.totalorder %s320, %s321
      %p332 = scmp.eq.s32.totalorder %s40, 0
      %p333 = por %p331, %p332
      %p334 = scmp.ne.s32.totalorder %s320, %s321
      %p335 = scmp.eq.s32.totalorder %s41, 1
      %p336 = por %p334, %p335
      %p338 = scmp.ne.s32.totalorder %s321, %s337
      %p339 = scmp.eq.s32.totalorder %s41, 0
      %p340 = por %p338, %p339
      %s341 = ssub.s32 %s43, %s50
      %p342 = scmp.eq.s32.totalorder %s341, 0
      %s344 = sadd.s32 %s343, 1
      %s345 = scalar_select %p342, %s343, %s344
      %p348 = pneg %p342
      %p349 = scmp.eq.s32.totalorder %s35, 1
      %p350 = por %p348, %p349
      %p351 = scmp.ne.s32.totalorder %s343, %s346
      %p352 = scmp.eq.s32.totalorder %s35, 0
      %p353 = por %p351, %p352
      %p354 = scmp.ne.s32.totalorder %s343, %s346
      %p355 = scmp.eq.s32.totalorder %s40, 1
      %p356 = por %p354, %p355
      %p357 = scmp.ne.s32.totalorder %s346, %s347
      %p358 = scmp.eq.s32.totalorder %s40, 0
      %p359 = por %p357, %p358
      %p360 = scmp.ne.s32.totalorder %s346, %s347
      %p361 = scmp.eq.s32.totalorder %s41, 1
      %p362 = por %p360, %p361
      %p364 = scmp.ne.s32.totalorder %s347, %s363
      %p365 = scmp.eq.s32.totalorder %s41, 0
      %p366 = por %p364, %p365
      %s367 = ssub.s32 %s43, %s50
      %p368 = scmp.eq.s32.totalorder %s367, 0
      %s370 = sadd.s32 %s369, 1
      %s371 = scalar_select %p368, %s369, %s370
      %p374 = pneg %p368
      %p375 = scmp.eq.s32.totalorder %s35, 1
      %p376 = por %p374, %p375
      %p377 = scmp.ne.s32.totalorder %s369, %s372
      %p378 = scmp.eq.s32.totalorder %s35, 0
      %p379 = por %p377, %p378
      %p380 = scmp.ne.s32.totalorder %s369, %s372
      %p381 = scmp.eq.s32.totalorder %s40, 1
      %p382 = por %p380, %p381
      %p383 = scmp.ne.s32.totalorder %s372, %s373
      %p384 = scmp.eq.s32.totalorder %s40, 0
      %p385 = por %p383, %p384
      %p386 = scmp.ne.s32.totalorder %s372, %s373
      %p387 = scmp.eq.s32.totalorder %s41, 1
      %p388 = por %p386, %p387
      %p390 = scmp.ne.s32.totalorder %s373, %s389
      %p391 = scmp.eq.s32.totalorder %s41, 0
      %p392 = por %p390, %p391
      %s393 = ssub.s32 %s43, %s50
      %p394 = scmp.eq.s32.totalorder %s393, 0
      %s396 = sadd.s32 %s395, 1
      %s397 = scalar_select %p394, %s395, %s396
      %p400 = pneg %p394
      %p401 = scmp.eq.s32.totalorder %s35, 1
      %p402 = por %p400, %p401
      %p403 = scmp.ne.s32.totalorder %s395, %s398
      %p404 = scmp.eq.s32.totalorder %s35, 0
      %p405 = por %p403, %p404
      %p406 = scmp.ne.s32.totalorder %s395, %s398
      %p407 = scmp.eq.s32.totalorder %s40, 1
      %p408 = por %p406, %p407
      %p409 = scmp.ne.s32.totalorder %s398, %s399
      %p410 = scmp.eq.s32.totalorder %s40, 0
      %p411 = por %p409, %p410
      %p412 = scmp.ne.s32.totalorder %s398, %s399
      %p413 = scmp.eq.s32.totalorder %s41, 1
      %p414 = por %p412, %p413
      %p416 = scmp.ne.s32.totalorder %s399, %s415
      %p417 = scmp.eq.s32.totalorder %s41, 0
      %p418 = por %p416, %p417
      %s419 = ssub.s32 %s43, %s50
      %p420 = scmp.eq.s32.totalorder %s419, 0
      %s422 = sadd.s32 %s421, 1
      %s423 = scalar_select %p420, %s421, %s422
      %p426 = pneg %p420
      %p427 = scmp.eq.s32.totalorder %s35, 1
      %p428 = por %p426, %p427
      %p429 = scmp.ne.s32.totalorder %s421, %s424
      %p430 = scmp.eq.s32.totalorder %s35, 0
      %p431 = por %p429, %p430
      %p432 = scmp.ne.s32.totalorder %s421, %s424
      %p433 = scmp.eq.s32.totalorder %s40, 1
      %p434 = por %p432, %p433
      %p435 = scmp.ne.s32.totalorder %s424, %s425
      %p436 = scmp.eq.s32.totalorder %s40, 0
      %p437 = por %p435, %p436
      %p438 = scmp.ne.s32.totalorder %s424, %s425
      %p439 = scmp.eq.s32.totalorder %s41, 1
      %p440 = por %p438, %p439
      %p442 = scmp.ne.s32.totalorder %s425, %s441
      %p443 = scmp.eq.s32.totalorder %s41, 0
      %p444 = por %p442, %p443
      %s445 = ssub.s32 %s42, %s54
      %p446 = scmp.eq.s32.totalorder %s445, 0
      %s448 = sadd.s32 %s447, 1
      %s449 = scalar_select %p446, %s447, %s448
      %p452 = pneg %p446
      %p453 = scmp.eq.s32.totalorder %s35, 1
      %p454 = por %p452, %p453
      %p455 = scmp.ne.s32.totalorder %s447, %s450
      %p456 = scmp.eq.s32.totalorder %s35, 0
      %p457 = por %p455, %p456
      %p458 = scmp.ne.s32.totalorder %s447, %s450
      %p459 = scmp.eq.s32.totalorder %s40, 1
      %p460 = por %p458, %p459
      %p461 = scmp.ne.s32.totalorder %s450, %s451
      %p462 = scmp.eq.s32.totalorder %s40, 0
      %p463 = por %p461, %p462
      %p464 = scmp.ne.s32.totalorder %s450, %s451
      %p465 = scmp.eq.s32.totalorder %s41, 1
      %p466 = por %p464, %p465
      %p468 = scmp.ne.s32.totalorder %s451, %s467
      %p469 = scmp.eq.s32.totalorder %s41, 0
      %p470 = por %p468, %p469
      %p471 = scmp.le.s32.totalorder 1, %s35
      %p472 = scmp.lt.s32.totalorder %s35, 3
      %p473 = pnand %p471, %p472
      %p474 = pneg %p473
      // Predicated region
      $region9: #{tpu_custom_call.1} parent=5 // pred_check
        _
      $region10: #{tpu_custom_call.1} parent=5 // pred_check_branch
        %476 = sbr.rel (%p473) target = $region12
      $region11: #{tpu_custom_call.1} parent=5 // pred_region
        %s477 = ssub.s32 %s35, 1
        // Predicated region
        $region13: #{tpu_custom_call.1} parent=11 // pred_check
          %p478 = pneg %p73
        $region14: #{tpu_custom_call.1} parent=11 // pred_check_branch
          %480 = sbr.rel (%p478) target = $region16
        $region15: #{tpu_custom_call.1} parent=11 // pred_region
          %s481 = smul.u32 2, %s44
          %p482 = scmp.lt.s32.totalorder %s481, 1
          %s483 = scalar_select %p482, %s481, 1
          %s484 = smul.addr %s483, 8
          %s485 = scalar_lea.vmem %s0, %s484
          %s486 = smul.u32 2, %s44
        $region16: #{tpu_custom_call.1} parent=11 // pred_fallthru
          _
        // Predicated region
        $region17: #{tpu_custom_call.1} parent=11 // pred_check
          %p487 = pneg %p99
        $region18: #{tpu_custom_call.1} parent=11 // pred_check_branch
          %489 = sbr.rel (%p487) target = $region20
        $region19: #{tpu_custom_call.1} parent=11 // pred_region
          %s490 = smul.u32 2, %s44
          %p491 = scmp.lt.s32.totalorder %s490, 1
          %s492 = scalar_select %p491, %s490, 1
          %s493 = smul.addr %s492, 8
          %s494 = scalar_lea.vmem %s1, %s493
          %s495 = smul.u32 2, %s44
        $region20: #{tpu_custom_call.1} parent=11 // pred_fallthru
          _
        // Predicated region
        $region21: #{tpu_custom_call.1} parent=11 // pred_check
          %p496 = pneg %p125
        $region22: #{tpu_custom_call.1} parent=11 // pred_check_branch
          %498 = sbr.rel (%p496) target = $region24
        $region23: #{tpu_custom_call.1} parent=11 // pred_region
          %s499 = smul.u32 2, %s44
          %p500 = scmp.lt.s32.totalorder %s499, 1
          %s501 = scalar_select %p500, %s499, 1
          %s502 = smul.addr %s501, 8
          %s503 = scalar_lea.vmem %s2, %s502
          %s504 = smul.u32 2, %s44
        $region24: #{tpu_custom_call.1} parent=11 // pred_fallthru
          _
        // Predicated region
        $region25: #{tpu_custom_call.1} parent=11 // pred_check
          %p505 = pneg %p151
        $region26: #{tpu_custom_call.1} parent=11 // pred_check_branch
          %507 = sbr.rel (%p505) target = $region28
        $region27: #{tpu_custom_call.1} parent=11 // pred_region
          %s508 = smul.u32 2, %s44
          %510 = vsyncadd [#allocation3], 0
          %s511 = smul.addr %s508, 8
          %s512 = scalar_lea.hbm %s3, %s511
          %s513 = sshll.u32 %s512, 4
          %s514 = int_to_ptr.hbm [resolvable:$true] %s513
          %s515 = sshll.u32 [#allocation2], 4
          %s516 = int_to_ptr.vmem [resolvable:$true] %s515
          %521 = dma.hbm_to_vmem [thread:$0]  %s514, 256, %s516, [#allocation3], 128, 128, 8
        $region28: #{tpu_custom_call.1} parent=11 // pred_fallthru
          _
      $region12: #{tpu_custom_call.1} parent=5 // pred_fallthru
        _
      %p522 = scmp.lt.s32.totalorder %s35, 2
      // Predicated region
      $region29: #{tpu_custom_call.1} parent=5 // pred_check
        %p523 = pneg %p522
      $region30: #{tpu_custom_call.1} parent=5 // pred_check_branch
        %525 = sbr.rel (%p523) target = $region32
      $region31: #{tpu_custom_call.1} parent=5 // pred_region
        // Predicated region
        $region33: #{tpu_custom_call.1} parent=31 // pred_check
          %p526 = pneg %p171
        $region34: #{tpu_custom_call.1} parent=31 // pred_check_branch
          %528 = sbr.rel (%p526) target = $region36
        $region35: #{tpu_custom_call.1} parent=31 // pred_region
          %s529 = sand.u32 %s35, 1
          %s530 = scalar_lea.sflag [#allocation6], %s529
          %s531 = sand.u32 %s161, 1
          %s532 = smul.addr %s531, 192
          %s533 = scalar_lea.vmem [#allocation5], %s532
          %535 = vsyncadd %s530, 0
          %s536 = smul.addr %s43, 48
          %s537 = smul.addr %s536, 4
          %s538 = scalar_lea.hbm %s4, %s537
          %s539 = sshll.u32 %s538, 4
          %s540 = int_to_ptr.hbm [resolvable:$true] %s539
          %s541 = sshll.u32 %s533, 4
          %s542 = int_to_ptr.vmem [resolvable:$true] %s541
          %547 = dma.hbm_to_vmem [thread:$0]  %s540, 3072, %s542, %s530, 192, 192, 12
        $region36: #{tpu_custom_call.1} parent=31 // pred_fallthru
          _
        // Predicated region
        $region37: #{tpu_custom_call.1} parent=31 // pred_check
          %p548 = pneg %p197
        $region38: #{tpu_custom_call.1} parent=31 // pred_check_branch
          %550 = sbr.rel (%p548) target = $region40
        $region39: #{tpu_custom_call.1} parent=31 // pred_region
          %p551 = scmp.lt.s32.totalorder %s43, 1
          %s552 = scalar_select %p551, %s43, 1
          %s553 = smul.addr %s552, 3
          %s554 = scalar_lea.vmem %s5, %s553
        $region40: #{tpu_custom_call.1} parent=31 // pred_fallthru
          _
        // Predicated region
        $region41: #{tpu_custom_call.1} parent=31 // pred_check
          %p555 = pneg %p223
        $region42: #{tpu_custom_call.1} parent=31 // pred_check_branch
          %557 = sbr.rel (%p555) target = $region44
        $region43: #{tpu_custom_call.1} parent=31 // pred_region
          %s558 = sand.u32 %s35, 1
          %s559 = scalar_lea.sflag [#allocation6], %s558
          %s560 = sand.u32 %s213, 1
          %s561 = smul.addr %s560, 64
          %s562 = scalar_lea.vmem [#allocation7], %s561
          %564 = vsyncadd %s559, 0
          %s565 = smul.addr %s43, 16
          %s566 = smul.addr %s565, 4
          %s567 = scalar_lea.hbm %s6, %s566
          %s568 = sshll.u32 %s567, 4
          %s569 = int_to_ptr.hbm [resolvable:$true] %s568
          %s570 = sshll.u32 %s562, 4
          %s571 = int_to_ptr.vmem [resolvable:$true] %s570
          %576 = dma.hbm_to_vmem [thread:$0]  %s569, 1024, %s571, %s559, 64, 64, 4
        $region44: #{tpu_custom_call.1} parent=31 // pred_fallthru
          _
        // Predicated region
        $region45: #{tpu_custom_call.1} parent=31 // pred_check
          %p577 = pneg %p249
        $region46: #{tpu_custom_call.1} parent=31 // pred_check_branch
          %579 = sbr.rel (%p577) target = $region48
        $region47: #{tpu_custom_call.1} parent=31 // pred_region
          %s580 = sand.u32 %s35, 1
          %s581 = scalar_lea.sflag [#allocation9], %s580
          %s582 = sand.u32 %s239, 1
          %s583 = smul.addr %s582, 64
          %s584 = scalar_lea.vmem [#allocation8], %s583
          %586 = vsyncadd %s581, 0
          %s587 = smul.addr %s43, 16
          %s588 = smul.addr %s587, 4
          %s589 = scalar_lea.hbm %s7, %s588
          %s590 = sshll.u32 %s589, 4
          %s591 = int_to_ptr.hbm [resolvable:$true] %s590
          %s592 = sshll.u32 %s584, 4
          %s593 = int_to_ptr.vmem [resolvable:$true] %s592
          %598 = dma.hbm_to_vmem [thread:$0]  %s591, 1024, %s593, %s581, 64, 64, 4
        $region48: #{tpu_custom_call.1} parent=31 // pred_fallthru
          _
        // Predicated region
        $region49: #{tpu_custom_call.1} parent=31 // pred_check
          %p599 = pneg %p275
        $region50: #{tpu_custom_call.1} parent=31 // pred_check_branch
          %601 = sbr.rel (%p599) target = $region52
        $region51: #{tpu_custom_call.1} parent=31 // pred_region
          %s602 = sand.u32 %s35, 1
          %s603 = scalar_lea.sflag [#allocation9], %s602
          %s604 = sand.u32 %s265, 1
          %s605 = smul.addr %s604, 128
          %s606 = scalar_lea.vmem [#allocation10], %s605
          %608 = vsyncadd %s603, 0
          %s609 = smul.addr %s43, 32
          %s610 = smul.addr %s609, 4
          %s611 = scalar_lea.hbm %s8, %s610
          %s612 = sshll.u32 %s611, 4
          %s613 = int_to_ptr.hbm [resolvable:$true] %s612
          %s614 = sshll.u32 %s606, 4
          %s615 = int_to_ptr.vmem [resolvable:$true] %s614
          %620 = dma.hbm_to_vmem [thread:$0]  %s613, 2048, %s615, %s603, 128, 128, 8
        $region52: #{tpu_custom_call.1} parent=31 // pred_fallthru
          _
        // Predicated region
        $region53: #{tpu_custom_call.1} parent=31 // pred_check
          %p621 = pneg %p301
        $region54: #{tpu_custom_call.1} parent=31 // pred_check_branch
          %623 = sbr.rel (%p621) target = $region56
        $region55: #{tpu_custom_call.1} parent=31 // pred_region
          %p624 = scmp.lt.s32.totalorder %s43, 1
          %s625 = scalar_select %p624, %s43, 1
          %s626 = smul.addr %s625, 2
          %s627 = scalar_lea.vmem %s9, %s626
        $region56: #{tpu_custom_call.1} parent=31 // pred_fallthru
          _
        // Predicated region
        $region57: #{tpu_custom_call.1} parent=31 // pred_check
          %p628 = pneg %p327
        $region58: #{tpu_custom_call.1} parent=31 // pred_check_branch
          %630 = sbr.rel (%p628) target = $region60
        $region59: #{tpu_custom_call.1} parent=31 // pred_region
          %s631 = sand.u32 %s35, 1
          %s632 = scalar_lea.sflag [#allocation12], %s631
          %s633 = sand.u32 %s317, 1
          %s634 = smul.addr %s633, 64
          %s635 = scalar_lea.vmem [#allocation11], %s634
          %637 = vsyncadd %s632, 0
          %s638 = smul.addr %s43, 16
          %s639 = smul.addr %s638, 4
          %s640 = scalar_lea.hbm %s10, %s639
          %s641 = sshll.u32 %s640, 4
          %s642 = int_to_ptr.hbm [resolvable:$true] %s641
          %s643 = sshll.u32 %s635, 4
          %s644 = int_to_ptr.vmem [resolvable:$true] %s643
          %649 = dma.hbm_to_vmem [thread:$0]  %s642, 1024, %s644, %s632, 64, 64, 4
        $region60: #{tpu_custom_call.1} parent=31 // pred_fallthru
          _
        // Predicated region
        $region61: #{tpu_custom_call.1} parent=31 // pred_check
          %p650 = pneg %p353
        $region62: #{tpu_custom_call.1} parent=31 // pred_check_branch
          %652 = sbr.rel (%p650) target = $region64
        $region63: #{tpu_custom_call.1} parent=31 // pred_region
          %s653 = sand.u32 %s35, 1
          %s654 = scalar_lea.sflag [#allocation12], %s653
          %s655 = sand.u32 %s343, 1
          %s656 = smul.addr %s655, 128
          %s657 = scalar_lea.vmem [#allocation13], %s656
          %659 = vsyncadd %s654, 0
          %s660 = smul.addr %s43, 32
          %s661 = smul.addr %s660, 4
          %s662 = scalar_lea.hbm %s11, %s661
          %s663 = sshll.u32 %s662, 4
          %s664 = int_to_ptr.hbm [resolvable:$true] %s663
          %s665 = sshll.u32 %s657, 4
          %s666 = int_to_ptr.vmem [resolvable:$true] %s665
          %671 = dma.hbm_to_vmem [thread:$0]  %s664, 2048, %s666, %s654, 128, 128, 8
        $region64: #{tpu_custom_call.1} parent=31 // pred_fallthru
          _
        // Predicated region
        $region65: #{tpu_custom_call.1} parent=31 // pred_check
          %p672 = pneg %p379
        $region66: #{tpu_custom_call.1} parent=31 // pred_check_branch
          %674 = sbr.rel (%p672) target = $region68
        $region67: #{tpu_custom_call.1} parent=31 // pred_region
          %p675 = scmp.lt.s32.totalorder %s43, 1
          %s676 = scalar_select %p675, %s43, 1
          %s677 = smul.addr %s676, 2
          %s678 = scalar_lea.vmem %s12, %s677
        $region68: #{tpu_custom_call.1} parent=31 // pred_fallthru
          _
        // Predicated region
        $region69: #{tpu_custom_call.1} parent=31 // pred_check
          %p679 = pneg %p405
        $region70: #{tpu_custom_call.1} parent=31 // pred_check_branch
          %681 = sbr.rel (%p679) target = $region72
        $region71: #{tpu_custom_call.1} parent=31 // pred_region
          %s682 = sand.u32 %s395, 1
          %s683 = scalar_lea.sflag [#allocation15], %s682
          %s684 = sand.u32 %s395, 1
          %s685 = smul.addr %s684, 128
          %s686 = scalar_lea.vmem [#allocation14], %s685
          %688 = vsyncadd %s683, 0
          %s689 = smul.addr %s43, 32
          %s690 = smul.addr %s689, 4
          %s691 = scalar_lea.hbm %s13, %s690
          %s692 = sshll.u32 %s691, 4
          %s693 = int_to_ptr.hbm [resolvable:$true] %s692
          %s694 = sshll.u32 %s686, 4
          %s695 = int_to_ptr.vmem [resolvable:$true] %s694
          %700 = dma.hbm_to_vmem [thread:$0]  %s693, 2048, %s695, %s683, 64, 64, 4
        $region72: #{tpu_custom_call.1} parent=31 // pred_fallthru
          _
        // Predicated region
        $region73: #{tpu_custom_call.1} parent=31 // pred_check
          %p701 = pneg %p431
        $region74: #{tpu_custom_call.1} parent=31 // pred_check_branch
          %703 = sbr.rel (%p701) target = $region76
        $region75: #{tpu_custom_call.1} parent=31 // pred_region
          %p704 = scmp.lt.s32.totalorder %s43, 1
          %s705 = scalar_select %p704, %s43, 1
          %s706 = smul.addr %s705, 2
          %s707 = smul.addr %s706, 8
          %s708 = scalar_lea.vmem %s14, %s707
        $region76: #{tpu_custom_call.1} parent=31 // pred_fallthru
          _
      $region32: #{tpu_custom_call.1} parent=5 // pred_fallthru
        _
      %p709 = scmp.le.s32.totalorder 1, %s35
      %p710 = scmp.lt.s32.totalorder %s35, 3
      %p711 = pnand %p709, %p710
      %p712 = pneg %p711
      // Predicated region
      $region77: #{tpu_custom_call.1} parent=5 // pred_check
        _
      $region78: #{tpu_custom_call.1} parent=5 // pred_check_branch
        %714 = sbr.rel (%p711) target = $region80
      $region79: #{tpu_custom_call.1} parent=5 // pred_region
        %s715 = ssub.s32 %s35, 1
        // Predicated region
        $region81: #{tpu_custom_call.1} parent=79 // pred_check
          %p716 = pneg %p151
        $region82: #{tpu_custom_call.1} parent=79 // pred_check_branch
          %718 = sbr.rel (%p716) target = $region84
        $region83: #{tpu_custom_call.1} parent=79 // pred_region
          %720 = dma.done [#allocation3], 256
        $region84: #{tpu_custom_call.1} parent=79 // pred_fallthru
          _
        %s721 = sand.u32 %s40, 1
        %s722 = scalar_lea.sflag [#allocation6], %s721
        %s723 = sand.u32 %s164, 1
        %s724 = smul.addr %s723, 192
        %s725 = scalar_lea.vmem [#allocation5], %s724
        // Predicated region
        $region85: #{tpu_custom_call.1} parent=79 // pred_check
          %p726 = pneg %p177
        $region86: #{tpu_custom_call.1} parent=79 // pred_check_branch
          %728 = sbr.rel (%p726) target = $region88
        $region87: #{tpu_custom_call.1} parent=79 // pred_region
          %730 = dma.done %s722, 3072
        $region88: #{tpu_custom_call.1} parent=79 // pred_fallthru
          _
        %s731 = sand.u32 %s40, 1
        %s732 = scalar_lea.sflag [#allocation6], %s731
        %s733 = sand.u32 %s216, 1
        %s734 = smul.addr %s733, 64
        %s735 = scalar_lea.vmem [#allocation7], %s734
        // Predicated region
        $region89: #{tpu_custom_call.1} parent=79 // pred_check
          %p736 = pneg %p229
        $region90: #{tpu_custom_call.1} parent=79 // pred_check_branch
          %738 = sbr.rel (%p736) target = $region92
        $region91: #{tpu_custom_call.1} parent=79 // pred_region
          %740 = dma.done %s732, 1024
        $region92: #{tpu_custom_call.1} parent=79 // pred_fallthru
          _
        %s741 = sand.u32 %s40, 1
        %s742 = scalar_lea.sflag [#allocation9], %s741
        %s743 = sand.u32 %s242, 1
        %s744 = smul.addr %s743, 64
        %s745 = scalar_lea.vmem [#allocation8], %s744
        // Predicated region
        $region93: #{tpu_custom_call.1} parent=79 // pred_check
          %p746 = pneg %p255
        $region94: #{tpu_custom_call.1} parent=79 // pred_check_branch
          %748 = sbr.rel (%p746) target = $region96
        $region95: #{tpu_custom_call.1} parent=79 // pred_region
          %750 = dma.done %s742, 1024
        $region96: #{tpu_custom_call.1} parent=79 // pred_fallthru
          _
        %s751 = sand.u32 %s40, 1
        %s752 = scalar_lea.sflag [#allocation9], %s751
        %s753 = sand.u32 %s268, 1
        %s754 = smul.addr %s753, 128
        %s755 = scalar_lea.vmem [#allocation10], %s754
        // Predicated region
        $region97: #{tpu_custom_call.1} parent=79 // pred_check
          %p756 = pneg %p281
        $region98: #{tpu_custom_call.1} parent=79 // pred_check_branch
          %758 = sbr.rel (%p756) target = $region100
        $region99: #{tpu_custom_call.1} parent=79 // pred_region
          %760 = dma.done %s752, 2048
        $region100: #{tpu_custom_call.1} parent=79 // pred_fallthru
          _
        %s761 = sand.u32 %s40, 1
        %s762 = scalar_lea.sflag [#allocation12], %s761
        %s763 = sand.u32 %s320, 1
        %s764 = smul.addr %s763, 64
        %s765 = scalar_lea.vmem [#allocation11], %s764
        // Predicated region
        $region101: #{tpu_custom_call.1} parent=79 // pred_check
          %p766 = pneg %p333
        $region102: #{tpu_custom_call.1} parent=79 // pred_check_branch
          %768 = sbr.rel (%p766) target = $region104
        $region103: #{tpu_custom_call.1} parent=79 // pred_region
          %770 = dma.done %s762, 1024
        $region104: #{tpu_custom_call.1} parent=79 // pred_fallthru
          _
        %s771 = sand.u32 %s40, 1
        %s772 = scalar_lea.sflag [#allocation12], %s771
        %s773 = sand.u32 %s346, 1
        %s774 = smul.addr %s773, 128
        %s775 = scalar_lea.vmem [#allocation13], %s774
        // Predicated region
        $region105: #{tpu_custom_call.1} parent=79 // pred_check
          %p776 = pneg %p359
        $region106: #{tpu_custom_call.1} parent=79 // pred_check_branch
          %778 = sbr.rel (%p776) target = $region108
        $region107: #{tpu_custom_call.1} parent=79 // pred_region
          %780 = dma.done %s772, 2048
        $region108: #{tpu_custom_call.1} parent=79 // pred_fallthru
          _
        %s781 = sand.u32 %s398, 1
        %s782 = scalar_lea.sflag [#allocation15], %s781
        %s783 = sand.u32 %s398, 1
        %s784 = smul.addr %s783, 128
        %s785 = scalar_lea.vmem [#allocation14], %s784
        // Predicated region
        $region109: #{tpu_custom_call.1} parent=79 // pred_check
          %p786 = pneg %p411
        $region110: #{tpu_custom_call.1} parent=79 // pred_check_branch
          %788 = sbr.rel (%p786) target = $region112
        $region111: #{tpu_custom_call.1} parent=79 // pred_region
          %790 = dma.done %s782, 2048
        $region112: #{tpu_custom_call.1} parent=79 // pred_fallthru
          _
        %s791 = smul.u32 2, %s44
        %p792 = scmp.lt.s32.totalorder %s791, 1
        %s793 = scalar_select %p792, %s791, 1
        %s794 = smul.addr %s793, 8
        %s795 = scalar_lea.vmem %s0, %s794
        %p796 = pneg %p73
        %p797 = pneg %p70
        %s798 = smul.u32 2, %s44
        %p799 = scmp.lt.s32.totalorder %s798, 1
        %s800 = scalar_select %p799, %s798, 1
        %s801 = smul.addr %s800, 8
        %s802 = scalar_lea.vmem %s1, %s801
        %p803 = pneg %p99
        %p804 = pneg %p96
        %s805 = smul.u32 2, %s44
        %p806 = scmp.lt.s32.totalorder %s805, 1
        %s807 = scalar_select %p806, %s805, 1
        %s808 = smul.addr %s807, 8
        %s809 = scalar_lea.vmem %s2, %s808
        %p810 = pneg %p125
        %p811 = pneg %p122
        %p812 = pneg %p151
        %p813 = pneg %p148
        %s814 = sand.u32 %s40, 1
        %s815 = scalar_lea.sflag [#allocation6], %s814
        %s816 = sand.u32 %s164, 1
        %s817 = smul.addr %s816, 192
        %s818 = scalar_lea.vmem [#allocation5], %s817
        %p819 = pneg %p177
        %p820 = pneg %p174
        %p821 = scmp.lt.s32.totalorder %s45, 1
        %s822 = scalar_select %p821, %s45, 1
        %s823 = smul.addr %s822, 3
        %s824 = scalar_lea.vmem %s5, %s823
        %p825 = pneg %p203
        %p826 = pneg %p200
        %s827 = sand.u32 %s40, 1
        %s828 = scalar_lea.sflag [#allocation6], %s827
        %s829 = sand.u32 %s216, 1
        %s830 = smul.addr %s829, 64
        %s831 = scalar_lea.vmem [#allocation7], %s830
        %p832 = pneg %p229
        %p833 = pneg %p226
        %s834 = sand.u32 %s40, 1
        %s835 = scalar_lea.sflag [#allocation9], %s834
        %s836 = sand.u32 %s242, 1
        %s837 = smul.addr %s836, 64
        %s838 = scalar_lea.vmem [#allocation8], %s837
        %p839 = pneg %p255
        %p840 = pneg %p252
        %s841 = sand.u32 %s40, 1
        %s842 = scalar_lea.sflag [#allocation9], %s841
        %s843 = sand.u32 %s268, 1
        %s844 = smul.addr %s843, 128
        %s845 = scalar_lea.vmem [#allocation10], %s844
        %p846 = pneg %p281
        %p847 = pneg %p278
        %p848 = scmp.lt.s32.totalorder %s45, 1
        %s849 = scalar_select %p848, %s45, 1
        %s850 = smul.addr %s849, 2
        %s851 = scalar_lea.vmem %s9, %s850
        %p852 = pneg %p307
        %p853 = pneg %p304
        %s854 = sand.u32 %s40, 1
        %s855 = scalar_lea.sflag [#allocation12], %s854
        %s856 = sand.u32 %s320, 1
        %s857 = smul.addr %s856, 64
        %s858 = scalar_lea.vmem [#allocation11], %s857
        %p859 = pneg %p333
        %p860 = pneg %p330
        %s861 = sand.u32 %s40, 1
        %s862 = scalar_lea.sflag [#allocation12], %s861
        %s863 = sand.u32 %s346, 1
        %s864 = smul.addr %s863, 128
        %s865 = scalar_lea.vmem [#allocation13], %s864
        %p866 = pneg %p359
        %p867 = pneg %p356
        %p868 = scmp.lt.s32.totalorder %s45, 1
        %s869 = scalar_select %p868, %s45, 1
        %s870 = smul.addr %s869, 2
        %s871 = scalar_lea.vmem %s12, %s870
        %p872 = pneg %p385
        %p873 = pneg %p382
        %s874 = sand.u32 %s398, 1
        %s875 = scalar_lea.sflag [#allocation15], %s874
        %s876 = sand.u32 %s398, 1
        %s877 = smul.addr %s876, 128
        %s878 = scalar_lea.vmem [#allocation14], %s877
        %p879 = pneg %p411
        %p880 = pneg %p408
        %p881 = scmp.lt.s32.totalorder %s45, 1
        %s882 = scalar_select %p881, %s45, 1
        %s883 = smul.addr %s882, 2
        %s884 = smul.addr %s883, 8
        %s885 = scalar_lea.vmem %s14, %s884
        %p886 = pneg %p437
        %p887 = pneg %p434
        %p888 = pneg %p463
        %p889 = pneg %p460
        %s890 = smul.u32 2, %s44
        %p891 = scmp.lt.s32.totalorder %s890, 1
        %s892 = scalar_select %p891, %s890, 1
        %s893 = smul.addr %s892, 8
        %s894 = scalar_lea.vmem %s0, %s893
        %s895 = smul.u32 2, %s44
        %s896 = smul.u32 2, %s44
        %p897 = scmp.lt.s32.totalorder %s896, 1
        %s898 = scalar_select %p897, %s896, 1
        %s899 = smul.addr %s898, 8
        %s900 = scalar_lea.vmem %s1, %s899
        %s901 = smul.u32 2, %s44
        %s902 = smul.u32 2, %s44
        %p903 = scmp.lt.s32.totalorder %s902, 1
        %s904 = scalar_select %p903, %s902, 1
        %s905 = smul.addr %s904, 8
        %s906 = scalar_lea.vmem %s2, %s905
        %s907 = smul.u32 2, %s44
        %s908 = smul.u32 2, %s44
        %p909 = scmp.lt.s32.totalorder %s45, 1
        %s910 = scalar_select %p909, %s45, 1
        %s911 = smul.addr %s910, 3
        %s912 = scalar_lea.vmem %s5, %s911
        %p913 = scmp.lt.s32.totalorder %s45, 1
        %s914 = scalar_select %p913, %s45, 1
        %s915 = smul.addr %s914, 2
        %s916 = scalar_lea.vmem %s9, %s915
        %p917 = scmp.lt.s32.totalorder %s45, 1
        %s918 = scalar_select %p917, %s45, 1
        %s919 = smul.addr %s918, 2
        %s920 = scalar_lea.vmem %s12, %s919
        %p921 = scmp.lt.s32.totalorder %s45, 1
        %s922 = scalar_select %p921, %s45, 1
        %s923 = smul.addr %s922, 2
        %s924 = smul.addr %s923, 8
        %s925 = scalar_lea.vmem %s14, %s924
        %s926 = smul.u32 2, %s44
        %p928 = scmp.eq.s32.totalorder %s45, 0
        // Predicated region
        $region113: #{tpu_custom_call.1} parent=79 // pred_check
          %p929 = pneg %p928
        $region114: #{tpu_custom_call.1} parent=79 // pred_check_branch
          %931 = sbr.rel (%p929) target = $region116
        $region115: #{tpu_custom_call.1} parent=79 // pred_region
          %v932 = vld [vmem:[%s894] sm:$0xff]
          %v933 = vld [vmem:[%s894 + $0x8] sm:$0xff]
          %934 = vst [vmem:[#allocation16] sm:$0xff] %v932
          %935 = vst [vmem:[#allocation16 + $0x8] sm:$0xff] %v933
        $region116: #{tpu_custom_call.1} parent=79 // pred_fallthru
          _
        %v936 = vld [vmem:[#allocation16] sm:$0xff]
        %v937 = vld [vmem:[#allocation16 + $0x8] sm:$0xff]
        %v938 = vld [vmem:[%s900] sm:$0xff]
        %v939 = vld [vmem:[%s900 + $0x8] sm:$0xff]
        %v940 = vld [vmem:[%s906] sm:$0xff]
        %v941 = vld [vmem:[%s906 + $0x8] sm:$0xff]
        %v942 = vld [vmem:[#allocation2] sm:$0xff]
        %v943 = vld [vmem:[#allocation2 + $0x8] sm:$0xff]
        %v944 = vld [vmem:[%s925] sm:$0xff]
        %v945 = vld [vmem:[%s925 + $0x8] sm:$0x3]
        %v946 = vpack.c.bf16 %v937, %v936
        %v947 = vld [vmem:[%s725] sm:$0xff]
        %v948 = vld [vmem:[%s725 + $0x8] sm:$0xf]
        %v949 = vld [vmem:[%s725 + $0xc] sm:$0xff]
        %v950 = vld [vmem:[%s725 + $0x14] sm:$0xf]
        %v951 = vld [vmem:[%s725 + $0x18] sm:$0xff]
        %v952 = vld [vmem:[%s725 + $0x20] sm:$0xf]
        %v953 = vld [vmem:[%s725 + $0x24] sm:$0xff]
        %v954 = vld [vmem:[%s725 + $0x2c] sm:$0xf]
        %v955 = vld [vmem:[%s725 + $0x30] sm:$0xff]
        %v956 = vld [vmem:[%s725 + $0x38] sm:$0xf]
        %v957 = vld [vmem:[%s725 + $0x3c] sm:$0xff]
        %v958 = vld [vmem:[%s725 + $0x44] sm:$0xf]
        %v959 = vld [vmem:[%s725 + $0x48] sm:$0xff]
        %v960 = vld [vmem:[%s725 + $0x50] sm:$0xf]
        %v961 = vld [vmem:[%s725 + $0x54] sm:$0xff]
        %v962 = vld [vmem:[%s725 + $0x5c] sm:$0xf]
        %v963 = vld [vmem:[%s725 + $0x60] sm:$0xff]
        %v964 = vld [vmem:[%s725 + $0x68] sm:$0xf]
        %v965 = vld [vmem:[%s725 + $0x6c] sm:$0xff]
        %v966 = vld [vmem:[%s725 + $0x74] sm:$0xf]
        %v967 = vld [vmem:[%s725 + $0x78] sm:$0xff]
        %v968 = vld [vmem:[%s725 + $0x80] sm:$0xf]
        %v969 = vld [vmem:[%s725 + $0x84] sm:$0xff]
        %v970 = vld [vmem:[%s725 + $0x8c] sm:$0xf]
        %v971 = vld [vmem:[%s725 + $0x90] sm:$0xff]
        %v972 = vld [vmem:[%s725 + $0x98] sm:$0xf]
        %v973 = vld [vmem:[%s725 + $0x9c] sm:$0xff]
        %v974 = vld [vmem:[%s725 + $0xa4] sm:$0xf]
        %v975 = vld [vmem:[%s725 + $0xa8] sm:$0xff]
        %v976 = vld [vmem:[%s725 + $0xb0] sm:$0xf]
        %v977 = vld [vmem:[%s725 + $0xb4] sm:$0xff]
        %v978 = vld [vmem:[%s725 + $0xbc] sm:$0xf]
        %v979 = vld [vmem:[%s912] sm:$0x7]
        %v981 = vperm.slane %v979, 0
        %v982 = vperm.slane %v979, 1
        %v983 = vperm.slane %v979, 2
        %v1019 = vunpack.c.l.b16 %v947
        %v1020 = vunpack.c.h.b16 %v947
        %v1021 = vunpack.c.l.b16 %v948
        %v1022 = vunpack.c.l.b16 %v949
        %v1023 = vunpack.c.h.b16 %v949
        %v1024 = vunpack.c.l.b16 %v950
        %v1025 = vunpack.c.l.b16 %v951
        %v1026 = vunpack.c.h.b16 %v951
        %v1027 = vunpack.c.l.b16 %v952
        %v1028 = vunpack.c.l.b16 %v953
        %v1029 = vunpack.c.h.b16 %v953
        %v1030 = vunpack.c.l.b16 %v954
        %v1031 = vunpack.c.l.b16 %v955
        %v1032 = vunpack.c.h.b16 %v955
        %v1033 = vunpack.c.l.b16 %v956
        %v1034 = vunpack.c.l.b16 %v957
        %v1035 = vunpack.c.h.b16 %v957
        %v1036 = vunpack.c.l.b16 %v958
        %v1037 = vunpack.c.l.b16 %v959
        %v1038 = vunpack.c.h.b16 %v959
        %v1039 = vunpack.c.l.b16 %v960
        %v1040 = vunpack.c.l.b16 %v961
        %v1041 = vunpack.c.h.b16 %v961
        %v1042 = vunpack.c.l.b16 %v962
        %v1043 = vunpack.c.l.b16 %v963
        %v1044 = vunpack.c.h.b16 %v963
        %v1045 = vunpack.c.l.b16 %v964
        %v1046 = vunpack.c.l.b16 %v965
        %v1047 = vunpack.c.h.b16 %v965
        %v1048 = vunpack.c.l.b16 %v966
        %v1049 = vunpack.c.l.b16 %v967
        %v1050 = vunpack.c.h.b16 %v967
        %v1051 = vunpack.c.l.b16 %v968
        %v1052 = vunpack.c.l.b16 %v969
        %v1053 = vunpack.c.h.b16 %v969
        %v1054 = vunpack.c.l.b16 %v970
        %v1055 = vunpack.c.l.b16 %v971
        %v1056 = vunpack.c.h.b16 %v971
        %v1057 = vunpack.c.l.b16 %v972
        %v1058 = vunpack.c.l.b16 %v973
        %v1059 = vunpack.c.h.b16 %v973
        %v1060 = vunpack.c.l.b16 %v974
        %v1061 = vunpack.c.l.b16 %v975
        %v1062 = vunpack.c.h.b16 %v975
        %v1063 = vunpack.c.l.b16 %v976
        %v1064 = vunpack.c.l.b16 %v977
        %v1065 = vunpack.c.h.b16 %v977
        %v1066 = vunpack.c.l.b16 %v978
        %v1067 = vpack.c.b16 %v1022, %v1019
        %v1068 = vpack.c.b16 %v1023, %v1020
        %v1069 = vpack.c.b16 %v1024, %v1021
        %v1070 = vpack.c.b16 %v1028, %v1025
        %v1071 = vpack.c.b16 %v1029, %v1026
        %v1072 = vpack.c.b16 %v1030, %v1027
        %v1073 = vpack.c.b16 %v1034, %v1031
        %v1074 = vpack.c.b16 %v1035, %v1032
        %v1075 = vpack.c.b16 %v1036, %v1033
        %v1076 = vpack.c.b16 %v1040, %v1037
        %v1077 = vpack.c.b16 %v1041, %v1038
        %v1078 = vpack.c.b16 %v1042, %v1039
        %v1079 = vpack.c.b16 %v1046, %v1043
        %v1080 = vpack.c.b16 %v1047, %v1044
        %v1081 = vpack.c.b16 %v1048, %v1045
        %v1082 = vpack.c.b16 %v1052, %v1049
        %v1083 = vpack.c.b16 %v1053, %v1050
        %v1084 = vpack.c.b16 %v1054, %v1051
        %v1085 = vpack.c.b16 %v1058, %v1055
        %v1086 = vpack.c.b16 %v1059, %v1056
        %v1087 = vpack.c.b16 %v1060, %v1057
        %v1088 = vpack.c.b16 %v1064, %v1061
        %v1089 = vpack.c.b16 %v1065, %v1062
        %v1090 = vpack.c.b16 %v1066, %v1063
        %1115 = vmatpush.bf16.msra.mxu0 %v1088
        %1116 = vmatpush.bf16.msra.mxu0 %v1085
        %1117 = vmatpush.bf16.msra.mxu0 %v1082
        %1118 = vmatpush.bf16.msra.mxu0 %v1079
        %1119 = vmatpush.bf16.msra.mxu0 %v1076
        %1120 = vmatpush.bf16.msra.mxu0 %v1073
        %1121 = vmatpush.bf16.msra.mxu0 %v1070
        %1122 = vmatpush.bf16.msra.mxu0 %v1067
        %1123 = vmatmul.bf16.gmra.mxu0 %v946
        %v1124 = vpop.f32.mrf.mxu0
        %v1125 = vadd.f32 %v981, %v1124
        %v1126 = vpop.f32.mrf.mxu0
        %v1127 = vadd.f32 %v981, %v1126
        %1128 = vdwg.mxu0
        %1129 = vmatpush.bf16.msra.mxu0 %v1089
        %1130 = vmatpush.bf16.msra.mxu0 %v1086
        %1131 = vmatpush.bf16.msra.mxu0 %v1083
        %1132 = vmatpush.bf16.msra.mxu0 %v1080
        %1133 = vmatpush.bf16.msra.mxu0 %v1077
        %1134 = vmatpush.bf16.msra.mxu0 %v1074
        %1135 = vmatpush.bf16.msra.mxu0 %v1071
        %1136 = vmatpush.bf16.msra.mxu0 %v1068
        %1137 = vmatmul.bf16.gmra.mxu0 %v946
        %v1138 = vpop.f32.mrf.mxu0
        %v1139 = vadd.f32 %v982, %v1138
        %v1140 = vpop.f32.mrf.mxu0
        %v1141 = vadd.f32 %v982, %v1140
        %1142 = vdwg.mxu0
        %1143 = vmatpush.bf16.msra.mxu0 %v1090
        %1144 = vmatpush.bf16.msra.mxu0 %v1087
        %1145 = vmatpush.bf16.msra.mxu0 %v1084
        %1146 = vmatpush.bf16.msra.mxu0 %v1081
        %1147 = vmatpush.bf16.msra.mxu0 %v1078
        %1148 = vmatpush.bf16.msra.mxu0 %v1075
        %1149 = vmatpush.bf16.msra.mxu0 %v1072
        %1150 = vmatpush.bf16.msra.mxu0 %v1069
        %1151 = vmatmul.bf16.gmra.mxu0 %v946
        %v1152 = vpop.f32.mrf.mxu0
        %v1153 = vadd.f32 %v983, %v1152
        %v1154 = vpop.f32.mrf.mxu0
        %v1155 = vadd.f32 %v983, %v1154
        %1156 = vdwg.mxu0
        %v1157 = vpack.c.bf16 %v1125, %v1125
        %v1158 = vpack.c.bf16 %v1127, %v1127
        %v1159 = vpack.c.bf16 %v1139, %v1139
        %v1160 = vpack.c.bf16 %v1141, %v1141
        %v1161 = vpack.c.bf16 %v1153, %v1153
        %v1162 = vpack.c.bf16 %v1155, %v1155
        %vm1163 = vcmask 261120
        %v1165 = vsel %vm1163, %v1157, 0
        %v1168 = vsel %vm1163, %v1159, 0
        %1170 = vmatpush.bf16.xpose.msra.mxu0 0
        %1171 = vmatpush.bf16.xpose.msra.mxu0 0
        %1172 = vmatpush.bf16.xpose.msra.mxu0 0
        %1173 = vmatpush.bf16.xpose.msra.mxu0 0
        %1174 = vmatpush.bf16.xpose.msra.mxu0 0
        %1175 = vmatpush.bf16.xpose.msra.mxu0 0
        %1176 = vmatpush.bf16.xpose.msra.mxu0 0
        %1177 = vmatpush.bf16.xpose.msra.mxu0 %v1168
        %1178 = vmatmul.bf16.gmra.mxu0 %v1165
        %v1179 = vpop.f32.mrf.mxu0
        %v1180 = vadd.f32 %v940, %v1179
        %v1181 = vpop.f32.mrf.mxu0
        %1182 = vdwg.mxu0
        %v1184 = vsel %vm1163, %v1158, 0
        %v1187 = vsel %vm1163, %v1160, 0
        %1189 = vmatpush.bf16.xpose.msra.mxu0 0
        %1190 = vmatpush.bf16.xpose.msra.mxu0 0
        %1191 = vmatpush.bf16.xpose.msra.mxu0 0
        %1192 = vmatpush.bf16.xpose.msra.mxu0 0
        %1193 = vmatpush.bf16.xpose.msra.mxu0 0
        %1194 = vmatpush.bf16.xpose.msra.mxu0 0
        %1195 = vmatpush.bf16.xpose.msra.mxu0 0
        %1196 = vmatpush.bf16.xpose.msra.mxu0 %v1187
        %1197 = vmatmul.bf16.gmra.mxu0 %v1184
        %v1198 = vpop.f32.mrf.mxu0
        %v1199 = vadd.f32 %v941, %v1198
        %v1200 = vpop.f32.mrf.mxu0
        %1201 = vdwg.mxu0
        %vm1202 = vcmask 64512
        %v1203 = vsel %vm1202, %v1180, -inf
        %1204 = vmax.xlane.f32.xlu0 %v1203
        %v1205 = vpop.xlane.xlu0 %1204
        %v1206 = vsel %vm1202, %v1199, -inf
        %1207 = vmax.xlane.f32.xlu0 %v1206
        %v1208 = vpop.xlane.xlu0 %1207
        %v1209 = vsub.f32 %v1180, %v1205
        %v1210 = vsub.f32 %v1199, %v1208
        %v1211 = vmul.f32 %v1209, 1.442695
        %v1212 = vpow.pop %v1211
        %v1213 = vmul.f32 %v1210, 1.442695
        %v1214 = vpow.pop %v1213
        %v1215 = vsel %vm1202, %v1212, 0.0
        %1216 = vadd.xlane.f32.xlu0 %v1215
        %v1217 = vpop.xlane.xlu0 %1216
        %v1218 = vsel %vm1202, %v1214, 0.0
        %1219 = vadd.xlane.f32.xlu0 %v1218
        %v1220 = vpop.xlane.xlu0 %1219
        %v1221 = vrcp.pop %v1217
        %v1222 = vrcp.pop %v1220
        %v1223 = vmul.f32 %v1212, %v1221
        %v1224 = vmul.f32 %v1214, %v1222
        %v1225 = vpack.c.bf16 %v1223, %v1223
        %v1226 = vpack.c.bf16 %v1224, %v1224
        %v1228 = vsel %vm1202, %v1225, 0
        %vm1230 = vcmask 1043456
        %v1232 = vsel %vm1230, %v1161, 0
        %1234 = vmatpush.bf16.msra.mxu0 0
        %1235 = vmatpush.bf16.msra.mxu0 0
        %1236 = vmatpush.bf16.msra.mxu0 0
        %1237 = vmatpush.bf16.msra.mxu0 0
        %1238 = vmatpush.bf16.msra.mxu0 0
        %1239 = vmatpush.bf16.msra.mxu0 0
        %1240 = vmatpush.bf16.msra.mxu0 0
        %1241 = vmatpush.bf16.msra.mxu0 %v1232
        %1242 = vmatmul.bf16.gmra.mxu0 %v1228
        %v1243 = vpop.f32.mrf.mxu0
        %v1244 = vadd.f32 0.0, %v1243
        %v1245 = vpop.f32.mrf.mxu0
        %1246 = vdwg.mxu0
        %v1248 = vsel %vm1202, %v1226, 0
        %v1251 = vsel %vm1230, %v1162, 0
        %1253 = vmatpush.bf16.msra.mxu0 0
        %1254 = vmatpush.bf16.msra.mxu0 0
        %1255 = vmatpush.bf16.msra.mxu0 0
        %1256 = vmatpush.bf16.msra.mxu0 0
        %1257 = vmatpush.bf16.msra.mxu0 0
        %1258 = vmatpush.bf16.msra.mxu0 0
        %1259 = vmatpush.bf16.msra.mxu0 0
        %1260 = vmatpush.bf16.msra.mxu0 %v1251
        %1261 = vmatmul.bf16.gmra.mxu0 %v1248
        %v1262 = vpop.f32.mrf.mxu0
        %v1263 = vadd.f32 0.0, %v1262
        %v1264 = vpop.f32.mrf.mxu0
        %1265 = vdwg.mxu0
        %v1267 = vunpack.c.l.b16 %v1157
        %v1268 = vpack.c.b16 %v1267, %v1267
        %1269 = vrot.lane.b32.xlu0 %v1268, 96
        %v1270 = vpop.permute.xlu0 %1269
        %v1272 = vunpack.c.l.b16 %v1159
        %v1273 = vpack.c.b16 %v1272, %v1272
        %1274 = vrot.lane.b32.xlu0 %v1273, 96
        %v1275 = vpop.permute.xlu0 %1274
        %v1277 = vsel %vm1163, %v1270, 0
        %v1280 = vsel %vm1163, %v1275, 0
        %1282 = vmatpush.bf16.xpose.msra.mxu0 0
        %1283 = vmatpush.bf16.xpose.msra.mxu0 0
        %1284 = vmatpush.bf16.xpose.msra.mxu0 0
        %1285 = vmatpush.bf16.xpose.msra.mxu0 0
        %1286 = vmatpush.bf16.xpose.msra.mxu0 0
        %1287 = vmatpush.bf16.xpose.msra.mxu0 0
        %1288 = vmatpush.bf16.xpose.msra.mxu0 0
        %1289 = vmatpush.bf16.xpose.msra.mxu0 %v1280
        %1290 = vmatmul.bf16.gmra.mxu0 %v1277
        %v1291 = vpop.f32.mrf.mxu0
        %v1292 = vadd.f32 %v940, %v1291
        %v1293 = vpop.f32.mrf.mxu0
        %1294 = vdwg.mxu0
        %v1296 = vunpack.c.l.b16 %v1158
        %v1297 = vpack.c.b16 %v1296, %v1296
        %1298 = vrot.lane.b32.xlu0 %v1297, 96
        %v1299 = vpop.permute.xlu0 %1298
        %v1301 = vunpack.c.l.b16 %v1160
        %v1302 = vpack.c.b16 %v1301, %v1301
        %1303 = vrot.lane.b32.xlu0 %v1302, 96
        %v1304 = vpop.permute.xlu0 %1303
        %v1306 = vsel %vm1163, %v1299, 0
        %v1309 = vsel %vm1163, %v1304, 0
        %1311 = vmatpush.bf16.xpose.msra.mxu0 0
        %1312 = vmatpush.bf16.xpose.msra.mxu0 0
        %1313 = vmatpush.bf16.xpose.msra.mxu0 0
        %1314 = vmatpush.bf16.xpose.msra.mxu0 0
        %1315 = vmatpush.bf16.xpose.msra.mxu0 0
        %1316 = vmatpush.bf16.xpose.msra.mxu0 0
        %1317 = vmatpush.bf16.xpose.msra.mxu0 0
        %1318 = vmatpush.bf16.xpose.msra.mxu0 %v1309
        %1319 = vmatmul.bf16.gmra.mxu0 %v1306
        %v1320 = vpop.f32.mrf.mxu0
        %v1321 = vadd.f32 %v941, %v1320
        %v1322 = vpop.f32.mrf.mxu0
        %1323 = vdwg.mxu0
        %v1324 = vsel %vm1202, %v1292, -inf
        %1325 = vmax.xlane.f32.xlu0 %v1324
        %v1326 = vpop.xlane.xlu0 %1325
        %v1327 = vsel %vm1202, %v1321, -inf
        %1328 = vmax.xlane.f32.xlu0 %v1327
        %v1329 = vpop.xlane.xlu0 %1328
        %v1330 = vsub.f32 %v1292, %v1326
        %v1331 = vsub.f32 %v1321, %v1329
        %v1332 = vmul.f32 %v1330, 1.442695
        %v1333 = vpow.pop %v1332
        %v1334 = vmul.f32 %v1331, 1.442695
        %v1335 = vpow.pop %v1334
        %v1336 = vsel %vm1202, %v1333, 0.0
        %1337 = vadd.xlane.f32.xlu0 %v1336
        %v1338 = vpop.xlane.xlu0 %1337
        %v1339 = vsel %vm1202, %v1335, 0.0
        %1340 = vadd.xlane.f32.xlu0 %v1339
        %v1341 = vpop.xlane.xlu0 %1340
        %v1342 = vrcp.pop %v1338
        %v1343 = vrcp.pop %v1341
        %v1344 = vmul.f32 %v1333, %v1342
        %v1345 = vmul.f32 %v1335, %v1343
        %v1346 = vpack.c.bf16 %v1344, %v1344
        %v1347 = vpack.c.bf16 %v1345, %v1345
        %v1349 = vunpack.c.l.b16 %v1161
        %v1350 = vpack.c.b16 %v1349, %v1349
        %1351 = vrot.lane.b32.xlu0 %v1350, 96
        %v1352 = vpop.permute.xlu0 %1351
        %v1354 = vsel %vm1202, %v1346, 0
        %v1357 = vsel %vm1230, %v1352, 0
        %1359 = vmatpush.bf16.msra.mxu0 0
        %1360 = vmatpush.bf16.msra.mxu0 0
        %1361 = vmatpush.bf16.msra.mxu0 0
        %1362 = vmatpush.bf16.msra.mxu0 0
        %1363 = vmatpush.bf16.msra.mxu0 0
        %1364 = vmatpush.bf16.msra.mxu0 0
        %1365 = vmatpush.bf16.msra.mxu0 0
        %1366 = vmatpush.bf16.msra.mxu0 %v1357
        %1367 = vmatmul.bf16.gmra.mxu0 %v1354
        %v1368 = vpop.f32.mrf.mxu0
        %v1369 = vadd.f32 0.0, %v1368
        %v1370 = vpop.f32.mrf.mxu0
        %1371 = vdwg.mxu0
        %v1373 = vunpack.c.l.b16 %v1162
        %v1374 = vpack.c.b16 %v1373, %v1373
        %1375 = vrot.lane.b32.xlu0 %v1374, 96
        %v1376 = vpop.permute.xlu0 %1375
        %v1378 = vsel %vm1202, %v1347, 0
        %v1381 = vsel %vm1230, %v1376, 0
        %1383 = vmatpush.bf16.msra.mxu0 0
        %1384 = vmatpush.bf16.msra.mxu0 0
        %1385 = vmatpush.bf16.msra.mxu0 0
        %1386 = vmatpush.bf16.msra.mxu0 0
        %1387 = vmatpush.bf16.msra.mxu0 0
        %1388 = vmatpush.bf16.msra.mxu0 0
        %1389 = vmatpush.bf16.msra.mxu0 0
        %1390 = vmatpush.bf16.msra.mxu0 %v1381
        %1391 = vmatmul.bf16.gmra.mxu0 %v1378
        %v1392 = vpop.f32.mrf.mxu0
        %v1393 = vadd.f32 0.0, %v1392
        %v1394 = vpop.f32.mrf.mxu0
        %1395 = vdwg.mxu0
        %1396 = vrot.lane.b32.xlu0 %v1268, 64
        %v1397 = vpop.permute.xlu0 %1396
        %1398 = vrot.lane.b32.xlu0 %v1273, 64
        %v1399 = vpop.permute.xlu0 %1398
        %v1401 = vsel %vm1163, %v1397, 0
        %v1404 = vsel %vm1163, %v1399, 0
        %1406 = vmatpush.bf16.xpose.msra.mxu0 0
        %1407 = vmatpush.bf16.xpose.msra.mxu0 0
        %1408 = vmatpush.bf16.xpose.msra.mxu0 0
        %1409 = vmatpush.bf16.xpose.msra.mxu0 0
        %1410 = vmatpush.bf16.xpose.msra.mxu0 0
        %1411 = vmatpush.bf16.xpose.msra.mxu0 0
        %1412 = vmatpush.bf16.xpose.msra.mxu0 0
        %1413 = vmatpush.bf16.xpose.msra.mxu0 %v1404
        %1414 = vmatmul.bf16.gmra.mxu0 %v1401
        %v1415 = vpop.f32.mrf.mxu0
        %v1416 = vadd.f32 %v940, %v1415
        %v1417 = vpop.f32.mrf.mxu0
        %1418 = vdwg.mxu0
        %1419 = vrot.lane.b32.xlu0 %v1297, 64
        %v1420 = vpop.permute.xlu0 %1419
        %1421 = vrot.lane.b32.xlu0 %v1302, 64
        %v1422 = vpop.permute.xlu0 %1421
        %v1424 = vsel %vm1163, %v1420, 0
        %v1427 = vsel %vm1163, %v1422, 0
        %1429 = vmatpush.bf16.xpose.msra.mxu0 0
        %1430 = vmatpush.bf16.xpose.msra.mxu0 0
        %1431 = vmatpush.bf16.xpose.msra.mxu0 0
        %1432 = vmatpush.bf16.xpose.msra.mxu0 0
        %1433 = vmatpush.bf16.xpose.msra.mxu0 0
        %1434 = vmatpush.bf16.xpose.msra.mxu0 0
        %1435 = vmatpush.bf16.xpose.msra.mxu0 0
        %1436 = vmatpush.bf16.xpose.msra.mxu0 %v1427
        %1437 = vmatmul.bf16.gmra.mxu0 %v1424
        %v1438 = vpop.f32.mrf.mxu0
        %v1439 = vadd.f32 %v941, %v1438
        %v1440 = vpop.f32.mrf.mxu0
        %1441 = vdwg.mxu0
        %v1442 = vsel %vm1202, %v1416, -inf
        %1443 = vmax.xlane.f32.xlu0 %v1442
        %v1444 = vpop.xlane.xlu0 %1443
        %v1445 = vsel %vm1202, %v1439, -inf
        %1446 = vmax.xlane.f32.xlu0 %v1445
        %v1447 = vpop.xlane.xlu0 %1446
        %v1448 = vsub.f32 %v1416, %v1444
        %v1449 = vsub.f32 %v1439, %v1447
        %v1450 = vmul.f32 %v1448, 1.442695
        %v1451 = vpow.pop %v1450
        %v1452 = vmul.f32 %v1449, 1.442695
        %v1453 = vpow.pop %v1452
        %v1454 = vsel %vm1202, %v1451, 0.0
        %1455 = vadd.xlane.f32.xlu0 %v1454
        %v1456 = vpop.xlane.xlu0 %1455
        %v1457 = vsel %vm1202, %v1453, 0.0
        %1458 = vadd.xlane.f32.xlu0 %v1457
        %v1459 = vpop.xlane.xlu0 %1458
        %v1460 = vrcp.pop %v1456
        %v1461 = vrcp.pop %v1459
        %v1462 = vmul.f32 %v1451, %v1460
        %v1463 = vmul.f32 %v1453, %v1461
        %v1464 = vpack.c.bf16 %v1462, %v1462
        %v1465 = vpack.c.bf16 %v1463, %v1463
        %1466 = vrot.lane.b32.xlu0 %v1350, 64
        %v1467 = vpop.permute.xlu0 %1466
        %v1469 = vsel %vm1202, %v1464, 0
        %v1472 = vsel %vm1230, %v1467, 0
        %1474 = vmatpush.bf16.msra.mxu0 0
        %1475 = vmatpush.bf16.msra.mxu0 0
        %1476 = vmatpush.bf16.msra.mxu0 0
        %1477 = vmatpush.bf16.msra.mxu0 0
        %1478 = vmatpush.bf16.msra.mxu0 0
        %1479 = vmatpush.bf16.msra.mxu0 0
        %1480 = vmatpush.bf16.msra.mxu0 0
        %1481 = vmatpush.bf16.msra.mxu0 %v1472
        %1482 = vmatmul.bf16.gmra.mxu0 %v1469
        %v1483 = vpop.f32.mrf.mxu0
        %v1484 = vadd.f32 0.0, %v1483
        %v1485 = vpop.f32.mrf.mxu0
        %1486 = vdwg.mxu0
        %1487 = vrot.lane.b32.xlu0 %v1374, 64
        %v1488 = vpop.permute.xlu0 %1487
        %v1490 = vsel %vm1202, %v1465, 0
        %v1493 = vsel %vm1230, %v1488, 0
        %1495 = vmatpush.bf16.msra.mxu0 0
        %1496 = vmatpush.bf16.msra.mxu0 0
        %1497 = vmatpush.bf16.msra.mxu0 0
        %1498 = vmatpush.bf16.msra.mxu0 0
        %1499 = vmatpush.bf16.msra.mxu0 0
        %1500 = vmatpush.bf16.msra.mxu0 0
        %1501 = vmatpush.bf16.msra.mxu0 0
        %1502 = vmatpush.bf16.msra.mxu0 %v1493
        %1503 = vmatmul.bf16.gmra.mxu0 %v1490
        %v1504 = vpop.f32.mrf.mxu0
        %v1505 = vadd.f32 0.0, %v1504
        %v1506 = vpop.f32.mrf.mxu0
        %1507 = vdwg.mxu0
        %1508 = vrot.lane.b32.xlu0 %v1268, 32
        %v1509 = vpop.permute.xlu0 %1508
        %1510 = vrot.lane.b32.xlu0 %v1273, 32
        %v1511 = vpop.permute.xlu0 %1510
        %v1513 = vsel %vm1163, %v1509, 0
        %v1516 = vsel %vm1163, %v1511, 0
        %1518 = vmatpush.bf16.xpose.msra.mxu0 0
        %1519 = vmatpush.bf16.xpose.msra.mxu0 0
        %1520 = vmatpush.bf16.xpose.msra.mxu0 0
        %1521 = vmatpush.bf16.xpose.msra.mxu0 0
        %1522 = vmatpush.bf16.xpose.msra.mxu0 0
        %1523 = vmatpush.bf16.xpose.msra.mxu0 0
        %1524 = vmatpush.bf16.xpose.msra.mxu0 0
        %1525 = vmatpush.bf16.xpose.msra.mxu0 %v1516
        %1526 = vmatmul.bf16.gmra.mxu0 %v1513
        %v1527 = vpop.f32.mrf.mxu0
        %v1528 = vadd.f32 %v940, %v1527
        %v1529 = vpop.f32.mrf.mxu0
        %1530 = vdwg.mxu0
        %1531 = vrot.lane.b32.xlu0 %v1297, 32
        %v1532 = vpop.permute.xlu0 %1531
        %1533 = vrot.lane.b32.xlu0 %v1302, 32
        %v1534 = vpop.permute.xlu0 %1533
        %v1536 = vsel %vm1163, %v1532, 0
        %v1539 = vsel %vm1163, %v1534, 0
        %1541 = vmatpush.bf16.xpose.msra.mxu0 0
        %1542 = vmatpush.bf16.xpose.msra.mxu0 0
        %1543 = vmatpush.bf16.xpose.msra.mxu0 0
        %1544 = vmatpush.bf16.xpose.msra.mxu0 0
        %1545 = vmatpush.bf16.xpose.msra.mxu0 0
        %1546 = vmatpush.bf16.xpose.msra.mxu0 0
        %1547 = vmatpush.bf16.xpose.msra.mxu0 0
        %1548 = vmatpush.bf16.xpose.msra.mxu0 %v1539
        %1549 = vmatmul.bf16.gmra.mxu0 %v1536
        %v1550 = vpop.f32.mrf.mxu0
        %v1551 = vadd.f32 %v941, %v1550
        %v1552 = vpop.f32.mrf.mxu0
        %1553 = vdwg.mxu0
        %v1554 = vsel %vm1202, %v1528, -inf
        %1555 = vmax.xlane.f32.xlu0 %v1554
        %v1556 = vpop.xlane.xlu0 %1555
        %v1557 = vsel %vm1202, %v1551, -inf
        %1558 = vmax.xlane.f32.xlu0 %v1557
        %v1559 = vpop.xlane.xlu0 %1558
        %v1560 = vsub.f32 %v1528, %v1556
        %v1561 = vsub.f32 %v1551, %v1559
        %v1562 = vmul.f32 %v1560, 1.442695
        %v1563 = vpow.pop %v1562
        %v1564 = vmul.f32 %v1561, 1.442695
        %v1565 = vpow.pop %v1564
        %v1566 = vsel %vm1202, %v1563, 0.0
        %1567 = vadd.xlane.f32.xlu0 %v1566
        %v1568 = vpop.xlane.xlu0 %1567
        %v1569 = vsel %vm1202, %v1565, 0.0
        %1570 = vadd.xlane.f32.xlu0 %v1569
        %v1571 = vpop.xlane.xlu0 %1570
        %v1572 = vrcp.pop %v1568
        %v1573 = vrcp.pop %v1571
        %v1574 = vmul.f32 %v1563, %v1572
        %v1575 = vmul.f32 %v1565, %v1573
        %v1576 = vpack.c.bf16 %v1574, %v1574
        %v1577 = vpack.c.bf16 %v1575, %v1575
        %1578 = vrot.lane.b32.xlu0 %v1350, 32
        %v1579 = vpop.permute.xlu0 %1578
        %v1581 = vsel %vm1202, %v1576, 0
        %v1584 = vsel %vm1230, %v1579, 0
        %1586 = vmatpush.bf16.msra.mxu0 0
        %1587 = vmatpush.bf16.msra.mxu0 0
        %1588 = vmatpush.bf16.msra.mxu0 0
        %1589 = vmatpush.bf16.msra.mxu0 0
        %1590 = vmatpush.bf16.msra.mxu0 0
        %1591 = vmatpush.bf16.msra.mxu0 0
        %1592 = vmatpush.bf16.msra.mxu0 0
        %1593 = vmatpush.bf16.msra.mxu0 %v1584
        %1594 = vmatmul.bf16.gmra.mxu0 %v1581
        %v1595 = vpop.f32.mrf.mxu0
        %v1596 = vadd.f32 0.0, %v1595
        %v1597 = vpop.f32.mrf.mxu0
        %1598 = vdwg.mxu0
        %1599 = vrot.lane.b32.xlu0 %v1374, 32
        %v1600 = vpop.permute.xlu0 %1599
        %v1602 = vsel %vm1202, %v1577, 0
        %v1605 = vsel %vm1230, %v1600, 0
        %1607 = vmatpush.bf16.msra.mxu0 0
        %1608 = vmatpush.bf16.msra.mxu0 0
        %1609 = vmatpush.bf16.msra.mxu0 0
        %1610 = vmatpush.bf16.msra.mxu0 0
        %1611 = vmatpush.bf16.msra.mxu0 0
        %1612 = vmatpush.bf16.msra.mxu0 0
        %1613 = vmatpush.bf16.msra.mxu0 0
        %1614 = vmatpush.bf16.msra.mxu0 %v1605
        %1615 = vmatmul.bf16.gmra.mxu0 %v1602
        %v1616 = vpop.f32.mrf.mxu0
        %v1617 = vadd.f32 0.0, %v1616
        %v1618 = vpop.f32.mrf.mxu0
        %1619 = vdwg.mxu0
        %1622 = vrot.lane.b32.xlu0 %v1369, 32
        %v1623 = vpop.permute.xlu0 %1622
        %1624 = vrot.lane.b32.xlu0 %v1393, 32
        %v1625 = vpop.permute.xlu0 %1624
        %1630 = vrot.lane.b32.xlu0 %v1484, 64
        %v1631 = vpop.permute.xlu0 %1630
        %1632 = vrot.lane.b32.xlu0 %v1505, 64
        %v1633 = vpop.permute.xlu0 %1632
        %1638 = vrot.lane.b32.xlu0 %v1596, 96
        %v1639 = vpop.permute.xlu0 %1638
        %1640 = vrot.lane.b32.xlu0 %v1617, 96
        %v1641 = vpop.permute.xlu0 %1640
        %v1644 = vsel %vm1163, %v1244, %v1623
        %v1645 = vsel %vm1163, %v1263, %v1625
        %vm1646 = vcmask 523264
        %v1647 = vsel %vm1646, %v1644, %v1631
        %v1648 = vsel %vm1646, %v1645, %v1633
        %vm1649 = vcmask 785408
        %v1650 = vsel %vm1649, %v1647, %v1639
        %v1651 = vsel %vm1649, %v1648, %v1641
        %v1652 = vpack.c.bf16 %v1651, %v1650
        %v1653 = vld [vmem:[%s735] sm:$0xf]
        %v1654 = vld [vmem:[%s735 + $0x4] sm:$0xf]
        %v1655 = vld [vmem:[%s735 + $0x8] sm:$0xf]
        %v1656 = vld [vmem:[%s735 + $0xc] sm:$0xf]
        %v1657 = vld [vmem:[%s735 + $0x10] sm:$0xf]
        %v1658 = vld [vmem:[%s735 + $0x14] sm:$0xf]
        %v1659 = vld [vmem:[%s735 + $0x18] sm:$0xf]
        %v1660 = vld [vmem:[%s735 + $0x1c] sm:$0xf]
        %v1661 = vld [vmem:[%s735 + $0x20] sm:$0xf]
        %v1662 = vld [vmem:[%s735 + $0x24] sm:$0xf]
        %v1663 = vld [vmem:[%s735 + $0x28] sm:$0xf]
        %v1664 = vld [vmem:[%s735 + $0x2c] sm:$0xf]
        %v1665 = vld [vmem:[%s735 + $0x30] sm:$0xf]
        %v1666 = vld [vmem:[%s735 + $0x34] sm:$0xf]
        %v1667 = vld [vmem:[%s735 + $0x38] sm:$0xf]
        %v1668 = vld [vmem:[%s735 + $0x3c] sm:$0xf]
        %v1669 = vperm.slane %v944, 0
        %v1686 = vunpack.c.l.b16 %v1653
        %v1687 = vunpack.c.l.b16 %v1654
        %v1688 = vunpack.c.l.b16 %v1655
        %v1689 = vunpack.c.l.b16 %v1656
        %v1690 = vunpack.c.l.b16 %v1657
        %v1691 = vunpack.c.l.b16 %v1658
        %v1692 = vunpack.c.l.b16 %v1659
        %v1693 = vunpack.c.l.b16 %v1660
        %v1694 = vunpack.c.l.b16 %v1661
        %v1695 = vunpack.c.l.b16 %v1662
        %v1696 = vunpack.c.l.b16 %v1663
        %v1697 = vunpack.c.l.b16 %v1664
        %v1698 = vunpack.c.l.b16 %v1665
        %v1699 = vunpack.c.l.b16 %v1666
        %v1700 = vunpack.c.l.b16 %v1667
        %v1701 = vunpack.c.l.b16 %v1668
        %v1702 = vpack.c.b16 %v1687, %v1686
        %v1703 = vpack.c.b16 %v1689, %v1688
        %v1704 = vpack.c.b16 %v1691, %v1690
        %v1705 = vpack.c.b16 %v1693, %v1692
        %v1706 = vpack.c.b16 %v1695, %v1694
        %v1707 = vpack.c.b16 %v1697, %v1696
        %v1708 = vpack.c.b16 %v1699, %v1698
        %v1709 = vpack.c.b16 %v1701, %v1700
        %1718 = vmatpush.bf16.msra.mxu0 %v1709
        %1719 = vmatpush.bf16.msra.mxu0 %v1708
        %1720 = vmatpush.bf16.msra.mxu0 %v1707
        %1721 = vmatpush.bf16.msra.mxu0 %v1706
        %1722 = vmatpush.bf16.msra.mxu0 %v1705
        %1723 = vmatpush.bf16.msra.mxu0 %v1704
        %1724 = vmatpush.bf16.msra.mxu0 %v1703
        %1725 = vmatpush.bf16.msra.mxu0 %v1702
        %1726 = vmatmul.bf16.gmra.mxu0 %v1652
        %v1727 = vpop.f32.mrf.mxu0
        %v1728 = vadd.f32 %v1669, %v1727
        %v1729 = vpop.f32.mrf.mxu0
        %v1730 = vadd.f32 %v1669, %v1729
        %1731 = vdwg.mxu0
        %v1732 = vadd.f32 %v1728, %v936
        %v1733 = vadd.f32 %v1730, %v937
        %1734 = vadd.xlane.f32.xlu0 %v1732
        %v1735 = vpop.xlane.xlu0 %1734
        %1736 = vadd.xlane.f32.xlu0 %v1733
        %v1737 = vpop.xlane.xlu0 %1736
        %v1738 = vrcp.pop 128.0
        %v1739 = vmul.f32 128.0, %v1738
        %v1740 = vsub.f32 1.0, %v1739
        %v1741 = vmul.f32 %v1738, %v1740
        %v1742 = vadd.f32 %v1738, %v1741
        %vm1743 = vweird.f32 %v1738
        %v1744 = vsel %vm1743, %v1738, %v1742
        %v1745 = vmul.f32 %v1735, %v1744
        %v1746 = vmul.f32 %v1737, %v1744
        %v1747 = vsub.f32 %v1732, %v1745
        %v1748 = vsub.f32 %v1733, %v1746
        %v1749 = vmul.f32 %v1747, %v1747
        %v1750 = vmul.f32 %v1748, %v1748
        %1751 = vadd.xlane.f32.xlu0 %v1749
        %v1752 = vpop.xlane.xlu0 %1751
        %1753 = vadd.xlane.f32.xlu0 %v1750
        %v1754 = vpop.xlane.xlu0 %1753
        %v1755 = vmul.f32 %v1752, %v1744
        %v1756 = vmul.f32 %v1754, %v1744
        %v1757 = vadd.f32 %v1755, 1e-12
        %v1758 = vadd.f32 %v1756, 1e-12
        %v1759 = vrsqrt.pop %v1757
        %v1760 = vmul.f32 %v1759, %v1757
        %v1761 = vmul.f32 %v1760, %v1759
        %v1762 = vmul.f32 0.5, %v1761
        %v1763 = vsub.f32 1.5, %v1762
        %v1764 = vmul.f32 %v1759, %v1763
        %vm1765 = vweird.f32 %v1757
        %vm1766 = vweird.f32 %v1759
        %vm1767 = vmor %vm1765, %vm1766
        %v1768 = vsel %vm1767, %v1759, %v1764
        %v1769 = vrsqrt.pop %v1758
        %v1770 = vmul.f32 %v1769, %v1758
        %v1771 = vmul.f32 %v1770, %v1769
        %v1772 = vmul.f32 0.5, %v1771
        %v1773 = vsub.f32 1.5, %v1772
        %v1774 = vmul.f32 %v1769, %v1773
        %vm1775 = vweird.f32 %v1758
        %vm1776 = vweird.f32 %v1769
        %vm1777 = vmor %vm1775, %vm1776
        %v1778 = vsel %vm1777, %v1769, %v1774
        %v1779 = vmul.f32 %v1747, %v1768
        %v1780 = vmul.f32 %v1748, %v1778
        %v1781 = vperm.slane %v944, 1
        %v1782 = vmul.f32 %v1781, %v1779
        %v1783 = vmul.f32 %v1781, %v1780
        %v1784 = vperm.slane %v944, 2
        %v1785 = vadd.f32 %v1782, %v1784
        %v1786 = vadd.f32 %v1783, %v1784
        %v1787 = vpack.c.bf16 %v1786, %v1785
        %v1788 = vld [vmem:[%s745] sm:$0xf]
        %v1789 = vld [vmem:[%s745 + $0x4] sm:$0xf]
        %v1790 = vld [vmem:[%s745 + $0x8] sm:$0xf]
        %v1791 = vld [vmem:[%s745 + $0xc] sm:$0xf]
        %v1792 = vld [vmem:[%s745 + $0x10] sm:$0xf]
        %v1793 = vld [vmem:[%s745 + $0x14] sm:$0xf]
        %v1794 = vld [vmem:[%s745 + $0x18] sm:$0xf]
        %v1795 = vld [vmem:[%s745 + $0x1c] sm:$0xf]
        %v1796 = vld [vmem:[%s745 + $0x20] sm:$0xf]
        %v1797 = vld [vmem:[%s745 + $0x24] sm:$0xf]
        %v1798 = vld [vmem:[%s745 + $0x28] sm:$0xf]
        %v1799 = vld [vmem:[%s745 + $0x2c] sm:$0xf]
        %v1800 = vld [vmem:[%s745 + $0x30] sm:$0xf]
        %v1801 = vld [vmem:[%s745 + $0x34] sm:$0xf]
        %v1802 = vld [vmem:[%s745 + $0x38] sm:$0xf]
        %v1803 = vld [vmem:[%s745 + $0x3c] sm:$0xf]
        %v1804 = vperm.slane %v944, 3
        %v1821 = vunpack.c.l.b16 %v1788
        %v1822 = vunpack.c.l.b16 %v1789
        %v1823 = vunpack.c.l.b16 %v1790
        %v1824 = vunpack.c.l.b16 %v1791
        %v1825 = vunpack.c.l.b16 %v1792
        %v1826 = vunpack.c.l.b16 %v1793
        %v1827 = vunpack.c.l.b16 %v1794
        %v1828 = vunpack.c.l.b16 %v1795
        %v1829 = vunpack.c.l.b16 %v1796
        %v1830 = vunpack.c.l.b16 %v1797
        %v1831 = vunpack.c.l.b16 %v1798
        %v1832 = vunpack.c.l.b16 %v1799
        %v1833 = vunpack.c.l.b16 %v1800
        %v1834 = vunpack.c.l.b16 %v1801
        %v1835 = vunpack.c.l.b16 %v1802
        %v1836 = vunpack.c.l.b16 %v1803
        %v1837 = vpack.c.b16 %v1822, %v1821
        %v1838 = vpack.c.b16 %v1824, %v1823
        %v1839 = vpack.c.b16 %v1826, %v1825
        %v1840 = vpack.c.b16 %v1828, %v1827
        %v1841 = vpack.c.b16 %v1830, %v1829
        %v1842 = vpack.c.b16 %v1832, %v1831
        %v1843 = vpack.c.b16 %v1834, %v1833
        %v1844 = vpack.c.b16 %v1836, %v1835
        %1853 = vmatpush.bf16.msra.mxu0 %v1844
        %1854 = vmatpush.bf16.msra.mxu0 %v1843
        %1855 = vmatpush.bf16.msra.mxu0 %v1842
        %1856 = vmatpush.bf16.msra.mxu0 %v1841
        %1857 = vmatpush.bf16.msra.mxu0 %v1840
        %1858 = vmatpush.bf16.msra.mxu0 %v1839
        %1859 = vmatpush.bf16.msra.mxu0 %v1838
        %1860 = vmatpush.bf16.msra.mxu0 %v1837
        %1861 = vmatmul.bf16.gmra.mxu0 %v1787
        %v1862 = vpop.f32.mrf.mxu0
        %v1863 = vadd.f32 %v1804, %v1862
        %v1864 = vpop.f32.mrf.mxu0
        %v1865 = vadd.f32 %v1804, %v1864
        %1866 = vdwg.mxu0
        %v1867 = vpack.c.bf16 %v939, %v938
        %v1868 = vld [vmem:[%s755] sm:$0xff]
        %v1869 = vld [vmem:[%s755 + $0x8] sm:$0xff]
        %v1870 = vld [vmem:[%s755 + $0x10] sm:$0xff]
        %v1871 = vld [vmem:[%s755 + $0x18] sm:$0xff]
        %v1872 = vld [vmem:[%s755 + $0x20] sm:$0xff]
        %v1873 = vld [vmem:[%s755 + $0x28] sm:$0xff]
        %v1874 = vld [vmem:[%s755 + $0x30] sm:$0xff]
        %v1875 = vld [vmem:[%s755 + $0x38] sm:$0xff]
        %v1876 = vld [vmem:[%s755 + $0x40] sm:$0xff]
        %v1877 = vld [vmem:[%s755 + $0x48] sm:$0xff]
        %v1878 = vld [vmem:[%s755 + $0x50] sm:$0xff]
        %v1879 = vld [vmem:[%s755 + $0x58] sm:$0xff]
        %v1880 = vld [vmem:[%s755 + $0x60] sm:$0xff]
        %v1881 = vld [vmem:[%s755 + $0x68] sm:$0xff]
        %v1882 = vld [vmem:[%s755 + $0x70] sm:$0xff]
        %v1883 = vld [vmem:[%s755 + $0x78] sm:$0xff]
        %v1884 = vld [vmem:[%s916] sm:$0x3]
        %v1886 = vperm.slane %v1884, 0
        %v1887 = vperm.slane %v1884, 1
        %v1906 = vunpack.c.l.b16 %v1868
        %v1907 = vunpack.c.h.b16 %v1868
        %v1908 = vunpack.c.l.b16 %v1869
        %v1909 = vunpack.c.h.b16 %v1869
        %v1910 = vunpack.c.l.b16 %v1870
        %v1911 = vunpack.c.h.b16 %v1870
        %v1912 = vunpack.c.l.b16 %v1871
        %v1913 = vunpack.c.h.b16 %v1871
        %v1914 = vunpack.c.l.b16 %v1872
        %v1915 = vunpack.c.h.b16 %v1872
        %v1916 = vunpack.c.l.b16 %v1873
        %v1917 = vunpack.c.h.b16 %v1873
        %v1918 = vunpack.c.l.b16 %v1874
        %v1919 = vunpack.c.h.b16 %v1874
        %v1920 = vunpack.c.l.b16 %v1875
        %v1921 = vunpack.c.h.b16 %v1875
        %v1922 = vunpack.c.l.b16 %v1876
        %v1923 = vunpack.c.h.b16 %v1876
        %v1924 = vunpack.c.l.b16 %v1877
        %v1925 = vunpack.c.h.b16 %v1877
        %v1926 = vunpack.c.l.b16 %v1878
        %v1927 = vunpack.c.h.b16 %v1878
        %v1928 = vunpack.c.l.b16 %v1879
        %v1929 = vunpack.c.h.b16 %v1879
        %v1930 = vunpack.c.l.b16 %v1880
        %v1931 = vunpack.c.h.b16 %v1880
        %v1932 = vunpack.c.l.b16 %v1881
        %v1933 = vunpack.c.h.b16 %v1881
        %v1934 = vunpack.c.l.b16 %v1882
        %v1935 = vunpack.c.h.b16 %v1882
        %v1936 = vunpack.c.l.b16 %v1883
        %v1937 = vunpack.c.h.b16 %v1883
        %v1938 = vpack.c.b16 %v1908, %v1906
        %v1939 = vpack.c.b16 %v1909, %v1907
        %v1940 = vpack.c.b16 %v1912, %v1910
        %v1941 = vpack.c.b16 %v1913, %v1911
        %v1942 = vpack.c.b16 %v1916, %v1914
        %v1943 = vpack.c.b16 %v1917, %v1915
        %v1944 = vpack.c.b16 %v1920, %v1918
        %v1945 = vpack.c.b16 %v1921, %v1919
        %v1946 = vpack.c.b16 %v1924, %v1922
        %v1947 = vpack.c.b16 %v1925, %v1923
        %v1948 = vpack.c.b16 %v1928, %v1926
        %v1949 = vpack.c.b16 %v1929, %v1927
        %v1950 = vpack.c.b16 %v1932, %v1930
        %v1951 = vpack.c.b16 %v1933, %v1931
        %v1952 = vpack.c.b16 %v1936, %v1934
        %v1953 = vpack.c.b16 %v1937, %v1935
        %1970 = vmatpush.bf16.msra.mxu0 %v1952
        %1971 = vmatpush.bf16.msra.mxu0 %v1950
        %1972 = vmatpush.bf16.msra.mxu0 %v1948
        %1973 = vmatpush.bf16.msra.mxu0 %v1946
        %1974 = vmatpush.bf16.msra.mxu0 %v1944
        %1975 = vmatpush.bf16.msra.mxu0 %v1942
        %1976 = vmatpush.bf16.msra.mxu0 %v1940
        %1977 = vmatpush.bf16.msra.mxu0 %v1938
        %1978 = vmatmul.bf16.gmra.mxu0 %v1867
        %v1979 = vpop.f32.mrf.mxu0
        %v1980 = vadd.f32 %v1886, %v1979
        %v1981 = vpop.f32.mrf.mxu0
        %v1982 = vadd.f32 %v1886, %v1981
        %1983 = vdwg.mxu0
        %1984 = vmatpush.bf16.msra.mxu0 %v1953
        %1985 = vmatpush.bf16.msra.mxu0 %v1951
        %1986 = vmatpush.bf16.msra.mxu0 %v1949
        %1987 = vmatpush.bf16.msra.mxu0 %v1947
        %1988 = vmatpush.bf16.msra.mxu0 %v1945
        %1989 = vmatpush.bf16.msra.mxu0 %v1943
        %1990 = vmatpush.bf16.msra.mxu0 %v1941
        %1991 = vmatpush.bf16.msra.mxu0 %v1939
        %1992 = vmatmul.bf16.gmra.mxu0 %v1867
        %v1993 = vpop.f32.mrf.mxu0
        %v1994 = vadd.f32 %v1887, %v1993
        %v1995 = vpop.f32.mrf.mxu0
        %v1996 = vadd.f32 %v1887, %v1995
        %1997 = vdwg.mxu0
        %v1998 = vpack.c.bf16 %v1863, %v1863
        %v1999 = vpack.c.bf16 %v1865, %v1865
        %v2000 = vpack.c.bf16 %v1980, %v1980
        %v2001 = vpack.c.bf16 %v1982, %v1982
        %v2002 = vpack.c.bf16 %v1994, %v1994
        %v2003 = vpack.c.bf16 %v1996, %v1996
        %v2005 = vsel %vm1163, %v1998, 0
        %v2008 = vsel %vm1163, %v2000, 0
        %2010 = vmatpush.bf16.xpose.msra.mxu0 0
        %2011 = vmatpush.bf16.xpose.msra.mxu0 0
        %2012 = vmatpush.bf16.xpose.msra.mxu0 0
        %2013 = vmatpush.bf16.xpose.msra.mxu0 0
        %2014 = vmatpush.bf16.xpose.msra.mxu0 0
        %2015 = vmatpush.bf16.xpose.msra.mxu0 0
        %2016 = vmatpush.bf16.xpose.msra.mxu0 0
        %2017 = vmatpush.bf16.xpose.msra.mxu0 %v2008
        %2018 = vmatmul.bf16.gmra.mxu0 %v2005
        %v2019 = vpop.f32.mrf.mxu0
        %v2020 = vadd.f32 %v942, %v2019
        %v2021 = vpop.f32.mrf.mxu0
        %2022 = vdwg.mxu0
        %v2024 = vsel %vm1163, %v1999, 0
        %v2027 = vsel %vm1163, %v2001, 0
        %2029 = vmatpush.bf16.xpose.msra.mxu0 0
        %2030 = vmatpush.bf16.xpose.msra.mxu0 0
        %2031 = vmatpush.bf16.xpose.msra.mxu0 0
        %2032 = vmatpush.bf16.xpose.msra.mxu0 0
        %2033 = vmatpush.bf16.xpose.msra.mxu0 0
        %2034 = vmatpush.bf16.xpose.msra.mxu0 0
        %2035 = vmatpush.bf16.xpose.msra.mxu0 0
        %2036 = vmatpush.bf16.xpose.msra.mxu0 %v2027
        %2037 = vmatmul.bf16.gmra.mxu0 %v2024
        %v2038 = vpop.f32.mrf.mxu0
        %v2039 = vadd.f32 %v943, %v2038
        %v2040 = vpop.f32.mrf.mxu0
        %2041 = vdwg.mxu0
        %v2042 = vsel %vm1202, %v2020, -inf
        %2043 = vmax.xlane.f32.xlu0 %v2042
        %v2044 = vpop.xlane.xlu0 %2043
        %v2045 = vsel %vm1202, %v2039, -inf
        %2046 = vmax.xlane.f32.xlu0 %v2045
        %v2047 = vpop.xlane.xlu0 %2046
        %v2048 = vsub.f32 %v2020, %v2044
        %v2049 = vsub.f32 %v2039, %v2047
        %v2050 = vmul.f32 %v2048, 1.442695
        %v2051 = vpow.pop %v2050
        %v2052 = vmul.f32 %v2049, 1.442695
        %v2053 = vpow.pop %v2052
        %v2054 = vsel %vm1202, %v2051, 0.0
        %2055 = vadd.xlane.f32.xlu0 %v2054
        %v2056 = vpop.xlane.xlu0 %2055
        %v2057 = vsel %vm1202, %v2053, 0.0
        %2058 = vadd.xlane.f32.xlu0 %v2057
        %v2059 = vpop.xlane.xlu0 %2058
        %v2060 = vrcp.pop %v2056
        %v2061 = vrcp.pop %v2059
        %v2062 = vmul.f32 %v2051, %v2060
        %v2063 = vmul.f32 %v2053, %v2061
        %v2064 = vpack.c.bf16 %v2062, %v2062
        %v2065 = vpack.c.bf16 %v2063, %v2063
        %v2067 = vsel %vm1202, %v2064, 0
        %v2070 = vsel %vm1230, %v2002, 0
        %2072 = vmatpush.bf16.msra.mxu0 0
        %2073 = vmatpush.bf16.msra.mxu0 0
        %2074 = vmatpush.bf16.msra.mxu0 0
        %2075 = vmatpush.bf16.msra.mxu0 0
        %2076 = vmatpush.bf16.msra.mxu0 0
        %2077 = vmatpush.bf16.msra.mxu0 0
        %2078 = vmatpush.bf16.msra.mxu0 0
        %2079 = vmatpush.bf16.msra.mxu0 %v2070
        %2080 = vmatmul.bf16.gmra.mxu0 %v2067
        %v2081 = vpop.f32.mrf.mxu0
        %v2082 = vadd.f32 0.0, %v2081
        %v2083 = vpop.f32.mrf.mxu0
        %2084 = vdwg.mxu0
        %v2086 = vsel %vm1202, %v2065, 0
        %v2089 = vsel %vm1230, %v2003, 0
        %2091 = vmatpush.bf16.msra.mxu0 0
        %2092 = vmatpush.bf16.msra.mxu0 0
        %2093 = vmatpush.bf16.msra.mxu0 0
        %2094 = vmatpush.bf16.msra.mxu0 0
        %2095 = vmatpush.bf16.msra.mxu0 0
        %2096 = vmatpush.bf16.msra.mxu0 0
        %2097 = vmatpush.bf16.msra.mxu0 0
        %2098 = vmatpush.bf16.msra.mxu0 %v2089
        %2099 = vmatmul.bf16.gmra.mxu0 %v2086
        %v2100 = vpop.f32.mrf.mxu0
        %v2101 = vadd.f32 0.0, %v2100
        %v2102 = vpop.f32.mrf.mxu0
        %2103 = vdwg.mxu0
        %v2105 = vunpack.c.l.b16 %v1998
        %v2106 = vpack.c.b16 %v2105, %v2105
        %2107 = vrot.lane.b32.xlu0 %v2106, 96
        %v2108 = vpop.permute.xlu0 %2107
        %v2110 = vunpack.c.l.b16 %v2000
        %v2111 = vpack.c.b16 %v2110, %v2110
        %2112 = vrot.lane.b32.xlu0 %v2111, 96
        %v2113 = vpop.permute.xlu0 %2112
        %v2115 = vsel %vm1163, %v2108, 0
        %v2118 = vsel %vm1163, %v2113, 0
        %2120 = vmatpush.bf16.xpose.msra.mxu0 0
        %2121 = vmatpush.bf16.xpose.msra.mxu0 0
        %2122 = vmatpush.bf16.xpose.msra.mxu0 0
        %2123 = vmatpush.bf16.xpose.msra.mxu0 0
        %2124 = vmatpush.bf16.xpose.msra.mxu0 0
        %2125 = vmatpush.bf16.xpose.msra.mxu0 0
        %2126 = vmatpush.bf16.xpose.msra.mxu0 0
        %2127 = vmatpush.bf16.xpose.msra.mxu0 %v2118
        %2128 = vmatmul.bf16.gmra.mxu0 %v2115
        %v2129 = vpop.f32.mrf.mxu0
        %v2130 = vadd.f32 %v942, %v2129
        %v2131 = vpop.f32.mrf.mxu0
        %2132 = vdwg.mxu0
        %v2134 = vunpack.c.l.b16 %v1999
        %v2135 = vpack.c.b16 %v2134, %v2134
        %2136 = vrot.lane.b32.xlu0 %v2135, 96
        %v2137 = vpop.permute.xlu0 %2136
        %v2139 = vunpack.c.l.b16 %v2001
        %v2140 = vpack.c.b16 %v2139, %v2139
        %2141 = vrot.lane.b32.xlu0 %v2140, 96
        %v2142 = vpop.permute.xlu0 %2141
        %v2144 = vsel %vm1163, %v2137, 0
        %v2147 = vsel %vm1163, %v2142, 0
        %2149 = vmatpush.bf16.xpose.msra.mxu0 0
        %2150 = vmatpush.bf16.xpose.msra.mxu0 0
        %2151 = vmatpush.bf16.xpose.msra.mxu0 0
        %2152 = vmatpush.bf16.xpose.msra.mxu0 0
        %2153 = vmatpush.bf16.xpose.msra.mxu0 0
        %2154 = vmatpush.bf16.xpose.msra.mxu0 0
        %2155 = vmatpush.bf16.xpose.msra.mxu0 0
        %2156 = vmatpush.bf16.xpose.msra.mxu0 %v2147
        %2157 = vmatmul.bf16.gmra.mxu0 %v2144
        %v2158 = vpop.f32.mrf.mxu0
        %v2159 = vadd.f32 %v943, %v2158
        %v2160 = vpop.f32.mrf.mxu0
        %2161 = vdwg.mxu0
        %v2162 = vsel %vm1202, %v2130, -inf
        %2163 = vmax.xlane.f32.xlu0 %v2162
        %v2164 = vpop.xlane.xlu0 %2163
        %v2165 = vsel %vm1202, %v2159, -inf
        %2166 = vmax.xlane.f32.xlu0 %v2165
        %v2167 = vpop.xlane.xlu0 %2166
        %v2168 = vsub.f32 %v2130, %v2164
        %v2169 = vsub.f32 %v2159, %v2167
        %v2170 = vmul.f32 %v2168, 1.442695
        %v2171 = vpow.pop %v2170
        %v2172 = vmul.f32 %v2169, 1.442695
        %v2173 = vpow.pop %v2172
        %v2174 = vsel %vm1202, %v2171, 0.0
        %2175 = vadd.xlane.f32.xlu0 %v2174
        %v2176 = vpop.xlane.xlu0 %2175
        %v2177 = vsel %vm1202, %v2173, 0.0
        %2178 = vadd.xlane.f32.xlu0 %v2177
        %v2179 = vpop.xlane.xlu0 %2178
        %v2180 = vrcp.pop %v2176
        %v2181 = vrcp.pop %v2179
        %v2182 = vmul.f32 %v2171, %v2180
        %v2183 = vmul.f32 %v2173, %v2181
        %v2184 = vpack.c.bf16 %v2182, %v2182
        %v2185 = vpack.c.bf16 %v2183, %v2183
        %v2187 = vunpack.c.l.b16 %v2002
        %v2188 = vpack.c.b16 %v2187, %v2187
        %2189 = vrot.lane.b32.xlu0 %v2188, 96
        %v2190 = vpop.permute.xlu0 %2189
        %v2192 = vsel %vm1202, %v2184, 0
        %v2195 = vsel %vm1230, %v2190, 0
        %2197 = vmatpush.bf16.msra.mxu0 0
        %2198 = vmatpush.bf16.msra.mxu0 0
        %2199 = vmatpush.bf16.msra.mxu0 0
        %2200 = vmatpush.bf16.msra.mxu0 0
        %2201 = vmatpush.bf16.msra.mxu0 0
        %2202 = vmatpush.bf16.msra.mxu0 0
        %2203 = vmatpush.bf16.msra.mxu0 0
        %2204 = vmatpush.bf16.msra.mxu0 %v2195
        %2205 = vmatmul.bf16.gmra.mxu0 %v2192
        %v2206 = vpop.f32.mrf.mxu0
        %v2207 = vadd.f32 0.0, %v2206
        %v2208 = vpop.f32.mrf.mxu0
        %2209 = vdwg.mxu0
        %v2211 = vunpack.c.l.b16 %v2003
        %v2212 = vpack.c.b16 %v2211, %v2211
        %2213 = vrot.lane.b32.xlu0 %v2212, 96
        %v2214 = vpop.permute.xlu0 %2213
        %v2216 = vsel %vm1202, %v2185, 0
        %v2219 = vsel %vm1230, %v2214, 0
        %2221 = vmatpush.bf16.msra.mxu0 0
        %2222 = vmatpush.bf16.msra.mxu0 0
        %2223 = vmatpush.bf16.msra.mxu0 0
        %2224 = vmatpush.bf16.msra.mxu0 0
        %2225 = vmatpush.bf16.msra.mxu0 0
        %2226 = vmatpush.bf16.msra.mxu0 0
        %2227 = vmatpush.bf16.msra.mxu0 0
        %2228 = vmatpush.bf16.msra.mxu0 %v2219
        %2229 = vmatmul.bf16.gmra.mxu0 %v2216
        %v2230 = vpop.f32.mrf.mxu0
        %v2231 = vadd.f32 0.0, %v2230
        %v2232 = vpop.f32.mrf.mxu0
        %2233 = vdwg.mxu0
        %2234 = vrot.lane.b32.xlu0 %v2106, 64
        %v2235 = vpop.permute.xlu0 %2234
        %2236 = vrot.lane.b32.xlu0 %v2111, 64
        %v2237 = vpop.permute.xlu0 %2236
        %v2239 = vsel %vm1163, %v2235, 0
        %v2242 = vsel %vm1163, %v2237, 0
        %2244 = vmatpush.bf16.xpose.msra.mxu0 0
        %2245 = vmatpush.bf16.xpose.msra.mxu0 0
        %2246 = vmatpush.bf16.xpose.msra.mxu0 0
        %2247 = vmatpush.bf16.xpose.msra.mxu0 0
        %2248 = vmatpush.bf16.xpose.msra.mxu0 0
        %2249 = vmatpush.bf16.xpose.msra.mxu0 0
        %2250 = vmatpush.bf16.xpose.msra.mxu0 0
        %2251 = vmatpush.bf16.xpose.msra.mxu0 %v2242
        %2252 = vmatmul.bf16.gmra.mxu0 %v2239
        %v2253 = vpop.f32.mrf.mxu0
        %v2254 = vadd.f32 %v942, %v2253
        %v2255 = vpop.f32.mrf.mxu0
        %2256 = vdwg.mxu0
        %2257 = vrot.lane.b32.xlu0 %v2135, 64
        %v2258 = vpop.permute.xlu0 %2257
        %2259 = vrot.lane.b32.xlu0 %v2140, 64
        %v2260 = vpop.permute.xlu0 %2259
        %v2262 = vsel %vm1163, %v2258, 0
        %v2265 = vsel %vm1163, %v2260, 0
        %2267 = vmatpush.bf16.xpose.msra.mxu0 0
        %2268 = vmatpush.bf16.xpose.msra.mxu0 0
        %2269 = vmatpush.bf16.xpose.msra.mxu0 0
        %2270 = vmatpush.bf16.xpose.msra.mxu0 0
        %2271 = vmatpush.bf16.xpose.msra.mxu0 0
        %2272 = vmatpush.bf16.xpose.msra.mxu0 0
        %2273 = vmatpush.bf16.xpose.msra.mxu0 0
        %2274 = vmatpush.bf16.xpose.msra.mxu0 %v2265
        %2275 = vmatmul.bf16.gmra.mxu0 %v2262
        %v2276 = vpop.f32.mrf.mxu0
        %v2277 = vadd.f32 %v943, %v2276
        %v2278 = vpop.f32.mrf.mxu0
        %2279 = vdwg.mxu0
        %v2280 = vsel %vm1202, %v2254, -inf
        %2281 = vmax.xlane.f32.xlu0 %v2280
        %v2282 = vpop.xlane.xlu0 %2281
        %v2283 = vsel %vm1202, %v2277, -inf
        %2284 = vmax.xlane.f32.xlu0 %v2283
        %v2285 = vpop.xlane.xlu0 %2284
        %v2286 = vsub.f32 %v2254, %v2282
        %v2287 = vsub.f32 %v2277, %v2285
        %v2288 = vmul.f32 %v2286, 1.442695
        %v2289 = vpow.pop %v2288
        %v2290 = vmul.f32 %v2287, 1.442695
        %v2291 = vpow.pop %v2290
        %v2292 = vsel %vm1202, %v2289, 0.0
        %2293 = vadd.xlane.f32.xlu0 %v2292
        %v2294 = vpop.xlane.xlu0 %2293
        %v2295 = vsel %vm1202, %v2291, 0.0
        %2296 = vadd.xlane.f32.xlu0 %v2295
        %v2297 = vpop.xlane.xlu0 %2296
        %v2298 = vrcp.pop %v2294
        %v2299 = vrcp.pop %v2297
        %v2300 = vmul.f32 %v2289, %v2298
        %v2301 = vmul.f32 %v2291, %v2299
        %v2302 = vpack.c.bf16 %v2300, %v2300
        %v2303 = vpack.c.bf16 %v2301, %v2301
        %2304 = vrot.lane.b32.xlu0 %v2188, 64
        %v2305 = vpop.permute.xlu0 %2304
        %v2307 = vsel %vm1202, %v2302, 0
        %v2310 = vsel %vm1230, %v2305, 0
        %2312 = vmatpush.bf16.msra.mxu0 0
        %2313 = vmatpush.bf16.msra.mxu0 0
        %2314 = vmatpush.bf16.msra.mxu0 0
        %2315 = vmatpush.bf16.msra.mxu0 0
        %2316 = vmatpush.bf16.msra.mxu0 0
        %2317 = vmatpush.bf16.msra.mxu0 0
        %2318 = vmatpush.bf16.msra.mxu0 0
        %2319 = vmatpush.bf16.msra.mxu0 %v2310
        %2320 = vmatmul.bf16.gmra.mxu0 %v2307
        %v2321 = vpop.f32.mrf.mxu0
        %v2322 = vadd.f32 0.0, %v2321
        %v2323 = vpop.f32.mrf.mxu0
        %2324 = vdwg.mxu0
        %2325 = vrot.lane.b32.xlu0 %v2212, 64
        %v2326 = vpop.permute.xlu0 %2325
        %v2328 = vsel %vm1202, %v2303, 0
        %v2331 = vsel %vm1230, %v2326, 0
        %2333 = vmatpush.bf16.msra.mxu0 0
        %2334 = vmatpush.bf16.msra.mxu0 0
        %2335 = vmatpush.bf16.msra.mxu0 0
        %2336 = vmatpush.bf16.msra.mxu0 0
        %2337 = vmatpush.bf16.msra.mxu0 0
        %2338 = vmatpush.bf16.msra.mxu0 0
        %2339 = vmatpush.bf16.msra.mxu0 0
        %2340 = vmatpush.bf16.msra.mxu0 %v2331
        %2341 = vmatmul.bf16.gmra.mxu0 %v2328
        %v2342 = vpop.f32.mrf.mxu0
        %v2343 = vadd.f32 0.0, %v2342
        %v2344 = vpop.f32.mrf.mxu0
        %2345 = vdwg.mxu0
        %2346 = vrot.lane.b32.xlu0 %v2106, 32
        %v2347 = vpop.permute.xlu0 %2346
        %2348 = vrot.lane.b32.xlu0 %v2111, 32
        %v2349 = vpop.permute.xlu0 %2348
        %v2351 = vsel %vm1163, %v2347, 0
        %v2354 = vsel %vm1163, %v2349, 0
        %2356 = vmatpush.bf16.xpose.msra.mxu0 0
        %2357 = vmatpush.bf16.xpose.msra.mxu0 0
        %2358 = vmatpush.bf16.xpose.msra.mxu0 0
        %2359 = vmatpush.bf16.xpose.msra.mxu0 0
        %2360 = vmatpush.bf16.xpose.msra.mxu0 0
        %2361 = vmatpush.bf16.xpose.msra.mxu0 0
        %2362 = vmatpush.bf16.xpose.msra.mxu0 0
        %2363 = vmatpush.bf16.xpose.msra.mxu0 %v2354
        %2364 = vmatmul.bf16.gmra.mxu0 %v2351
        %v2365 = vpop.f32.mrf.mxu0
        %v2366 = vadd.f32 %v942, %v2365
        %v2367 = vpop.f32.mrf.mxu0
        %2368 = vdwg.mxu0
        %2369 = vrot.lane.b32.xlu0 %v2135, 32
        %v2370 = vpop.permute.xlu0 %2369
        %2371 = vrot.lane.b32.xlu0 %v2140, 32
        %v2372 = vpop.permute.xlu0 %2371
        %v2374 = vsel %vm1163, %v2370, 0
        %v2377 = vsel %vm1163, %v2372, 0
        %2379 = vmatpush.bf16.xpose.msra.mxu0 0
        %2380 = vmatpush.bf16.xpose.msra.mxu0 0
        %2381 = vmatpush.bf16.xpose.msra.mxu0 0
        %2382 = vmatpush.bf16.xpose.msra.mxu0 0
        %2383 = vmatpush.bf16.xpose.msra.mxu0 0
        %2384 = vmatpush.bf16.xpose.msra.mxu0 0
        %2385 = vmatpush.bf16.xpose.msra.mxu0 0
        %2386 = vmatpush.bf16.xpose.msra.mxu0 %v2377
        %2387 = vmatmul.bf16.gmra.mxu0 %v2374
        %v2388 = vpop.f32.mrf.mxu0
        %v2389 = vadd.f32 %v943, %v2388
        %v2390 = vpop.f32.mrf.mxu0
        %2391 = vdwg.mxu0
        %v2392 = vsel %vm1202, %v2366, -inf
        %2393 = vmax.xlane.f32.xlu0 %v2392
        %v2394 = vpop.xlane.xlu0 %2393
        %v2395 = vsel %vm1202, %v2389, -inf
        %2396 = vmax.xlane.f32.xlu0 %v2395
        %v2397 = vpop.xlane.xlu0 %2396
        %v2398 = vsub.f32 %v2366, %v2394
        %v2399 = vsub.f32 %v2389, %v2397
        %v2400 = vmul.f32 %v2398, 1.442695
        %v2401 = vpow.pop %v2400
        %v2402 = vmul.f32 %v2399, 1.442695
        %v2403 = vpow.pop %v2402
        %v2404 = vsel %vm1202, %v2401, 0.0
        %2405 = vadd.xlane.f32.xlu0 %v2404
        %v2406 = vpop.xlane.xlu0 %2405
        %v2407 = vsel %vm1202, %v2403, 0.0
        %2408 = vadd.xlane.f32.xlu0 %v2407
        %v2409 = vpop.xlane.xlu0 %2408
        %v2410 = vrcp.pop %v2406
        %v2411 = vrcp.pop %v2409
        %v2412 = vmul.f32 %v2401, %v2410
        %v2413 = vmul.f32 %v2403, %v2411
        %v2414 = vpack.c.bf16 %v2412, %v2412
        %v2415 = vpack.c.bf16 %v2413, %v2413
        %2416 = vrot.lane.b32.xlu0 %v2188, 32
        %v2417 = vpop.permute.xlu0 %2416
        %v2419 = vsel %vm1202, %v2414, 0
        %v2422 = vsel %vm1230, %v2417, 0
        %2424 = vmatpush.bf16.msra.mxu0 0
        %2425 = vmatpush.bf16.msra.mxu0 0
        %2426 = vmatpush.bf16.msra.mxu0 0
        %2427 = vmatpush.bf16.msra.mxu0 0
        %2428 = vmatpush.bf16.msra.mxu0 0
        %2429 = vmatpush.bf16.msra.mxu0 0
        %2430 = vmatpush.bf16.msra.mxu0 0
        %2431 = vmatpush.bf16.msra.mxu0 %v2422
        %2432 = vmatmul.bf16.gmra.mxu0 %v2419
        %v2433 = vpop.f32.mrf.mxu0
        %v2434 = vadd.f32 0.0, %v2433
        %v2435 = vpop.f32.mrf.mxu0
        %2436 = vdwg.mxu0
        %2437 = vrot.lane.b32.xlu0 %v2212, 32
        %v2438 = vpop.permute.xlu0 %2437
        %v2440 = vsel %vm1202, %v2415, 0
        %v2443 = vsel %vm1230, %v2438, 0
        %2445 = vmatpush.bf16.msra.mxu0 0
        %2446 = vmatpush.bf16.msra.mxu0 0
        %2447 = vmatpush.bf16.msra.mxu0 0
        %2448 = vmatpush.bf16.msra.mxu0 0
        %2449 = vmatpush.bf16.msra.mxu0 0
        %2450 = vmatpush.bf16.msra.mxu0 0
        %2451 = vmatpush.bf16.msra.mxu0 0
        %2452 = vmatpush.bf16.msra.mxu0 %v2443
        %2453 = vmatmul.bf16.gmra.mxu0 %v2440
        %v2454 = vpop.f32.mrf.mxu0
        %v2455 = vadd.f32 0.0, %v2454
        %v2456 = vpop.f32.mrf.mxu0
        %2457 = vdwg.mxu0
        %2460 = vrot.lane.b32.xlu0 %v2207, 32
        %v2461 = vpop.permute.xlu0 %2460
        %2462 = vrot.lane.b32.xlu0 %v2231, 32
        %v2463 = vpop.permute.xlu0 %2462
        %2468 = vrot.lane.b32.xlu0 %v2322, 64
        %v2469 = vpop.permute.xlu0 %2468
        %2470 = vrot.lane.b32.xlu0 %v2343, 64
        %v2471 = vpop.permute.xlu0 %2470
        %2476 = vrot.lane.b32.xlu0 %v2434, 96
        %v2477 = vpop.permute.xlu0 %2476
        %2478 = vrot.lane.b32.xlu0 %v2455, 96
        %v2479 = vpop.permute.xlu0 %2478
        %v2482 = vsel %vm1163, %v2082, %v2461
        %v2483 = vsel %vm1163, %v2101, %v2463
        %v2484 = vsel %vm1646, %v2482, %v2469
        %v2485 = vsel %vm1646, %v2483, %v2471
        %v2486 = vsel %vm1649, %v2484, %v2477
        %v2487 = vsel %vm1649, %v2485, %v2479
        %v2488 = vpack.c.bf16 %v2487, %v2486
        %v2489 = vld [vmem:[%s765] sm:$0xf]
        %v2490 = vld [vmem:[%s765 + $0x4] sm:$0xf]
        %v2491 = vld [vmem:[%s765 + $0x8] sm:$0xf]
        %v2492 = vld [vmem:[%s765 + $0xc] sm:$0xf]
        %v2493 = vld [vmem:[%s765 + $0x10] sm:$0xf]
        %v2494 = vld [vmem:[%s765 + $0x14] sm:$0xf]
        %v2495 = vld [vmem:[%s765 + $0x18] sm:$0xf]
        %v2496 = vld [vmem:[%s765 + $0x1c] sm:$0xf]
        %v2497 = vld [vmem:[%s765 + $0x20] sm:$0xf]
        %v2498 = vld [vmem:[%s765 + $0x24] sm:$0xf]
        %v2499 = vld [vmem:[%s765 + $0x28] sm:$0xf]
        %v2500 = vld [vmem:[%s765 + $0x2c] sm:$0xf]
        %v2501 = vld [vmem:[%s765 + $0x30] sm:$0xf]
        %v2502 = vld [vmem:[%s765 + $0x34] sm:$0xf]
        %v2503 = vld [vmem:[%s765 + $0x38] sm:$0xf]
        %v2504 = vld [vmem:[%s765 + $0x3c] sm:$0xf]
        %v2505 = vperm.slane %v944, 4
        %v2522 = vunpack.c.l.b16 %v2489
        %v2523 = vunpack.c.l.b16 %v2490
        %v2524 = vunpack.c.l.b16 %v2491
        %v2525 = vunpack.c.l.b16 %v2492
        %v2526 = vunpack.c.l.b16 %v2493
        %v2527 = vunpack.c.l.b16 %v2494
        %v2528 = vunpack.c.l.b16 %v2495
        %v2529 = vunpack.c.l.b16 %v2496
        %v2530 = vunpack.c.l.b16 %v2497
        %v2531 = vunpack.c.l.b16 %v2498
        %v2532 = vunpack.c.l.b16 %v2499
        %v2533 = vunpack.c.l.b16 %v2500
        %v2534 = vunpack.c.l.b16 %v2501
        %v2535 = vunpack.c.l.b16 %v2502
        %v2536 = vunpack.c.l.b16 %v2503
        %v2537 = vunpack.c.l.b16 %v2504
        %v2538 = vpack.c.b16 %v2523, %v2522
        %v2539 = vpack.c.b16 %v2525, %v2524
        %v2540 = vpack.c.b16 %v2527, %v2526
        %v2541 = vpack.c.b16 %v2529, %v2528
        %v2542 = vpack.c.b16 %v2531, %v2530
        %v2543 = vpack.c.b16 %v2533, %v2532
        %v2544 = vpack.c.b16 %v2535, %v2534
        %v2545 = vpack.c.b16 %v2537, %v2536
        %2554 = vmatpush.bf16.msra.mxu0 %v2545
        %2555 = vmatpush.bf16.msra.mxu0 %v2544
        %2556 = vmatpush.bf16.msra.mxu0 %v2543
        %2557 = vmatpush.bf16.msra.mxu0 %v2542
        %2558 = vmatpush.bf16.msra.mxu0 %v2541
        %2559 = vmatpush.bf16.msra.mxu0 %v2540
        %2560 = vmatpush.bf16.msra.mxu0 %v2539
        %2561 = vmatpush.bf16.msra.mxu0 %v2538
        %2562 = vmatmul.bf16.gmra.mxu0 %v2488
        %v2563 = vpop.f32.mrf.mxu0
        %v2564 = vadd.f32 %v2505, %v2563
        %v2565 = vpop.f32.mrf.mxu0
        %v2566 = vadd.f32 %v2505, %v2565
        %2567 = vdwg.mxu0
        %v2568 = vadd.f32 %v2564, %v1785
        %v2569 = vadd.f32 %v2566, %v1786
        %2570 = vadd.xlane.f32.xlu0 %v2568
        %v2571 = vpop.xlane.xlu0 %2570
        %2572 = vadd.xlane.f32.xlu0 %v2569
        %v2573 = vpop.xlane.xlu0 %2572
        %v2574 = vmul.f32 %v2571, %v1744
        %v2575 = vmul.f32 %v2573, %v1744
        %v2576 = vsub.f32 %v2568, %v2574
        %v2577 = vsub.f32 %v2569, %v2575
        %v2578 = vmul.f32 %v2576, %v2576
        %v2579 = vmul.f32 %v2577, %v2577
        %2580 = vadd.xlane.f32.xlu0 %v2578
        %v2581 = vpop.xlane.xlu0 %2580
        %2582 = vadd.xlane.f32.xlu0 %v2579
        %v2583 = vpop.xlane.xlu0 %2582
        %v2584 = vmul.f32 %v2581, %v1744
        %v2585 = vmul.f32 %v2583, %v1744
        %v2586 = vadd.f32 %v2584, 1e-12
        %v2587 = vadd.f32 %v2585, 1e-12
        %v2588 = vrsqrt.pop %v2586
        %v2589 = vmul.f32 %v2588, %v2586
        %v2590 = vmul.f32 %v2589, %v2588
        %v2591 = vmul.f32 0.5, %v2590
        %v2592 = vsub.f32 1.5, %v2591
        %v2593 = vmul.f32 %v2588, %v2592
        %vm2594 = vweird.f32 %v2586
        %vm2595 = vweird.f32 %v2588
        %vm2596 = vmor %vm2594, %vm2595
        %v2597 = vsel %vm2596, %v2588, %v2593
        %v2598 = vrsqrt.pop %v2587
        %v2599 = vmul.f32 %v2598, %v2587
        %v2600 = vmul.f32 %v2599, %v2598
        %v2601 = vmul.f32 0.5, %v2600
        %v2602 = vsub.f32 1.5, %v2601
        %v2603 = vmul.f32 %v2598, %v2602
        %vm2604 = vweird.f32 %v2587
        %vm2605 = vweird.f32 %v2598
        %vm2606 = vmor %vm2604, %vm2605
        %v2607 = vsel %vm2606, %v2598, %v2603
        %v2608 = vmul.f32 %v2576, %v2597
        %v2609 = vmul.f32 %v2577, %v2607
        %v2610 = vperm.slane %v944, 5
        %v2611 = vmul.f32 %v2610, %v2608
        %v2612 = vmul.f32 %v2610, %v2609
        %v2613 = vperm.slane %v944, 6
        %v2614 = vadd.f32 %v2611, %v2613
        %v2615 = vadd.f32 %v2612, %v2613
        %v2616 = vpack.c.bf16 %v2615, %v2614
        %v2617 = vld [vmem:[%s775] sm:$0xff]
        %v2618 = vld [vmem:[%s775 + $0x8] sm:$0xff]
        %v2619 = vld [vmem:[%s775 + $0x10] sm:$0xff]
        %v2620 = vld [vmem:[%s775 + $0x18] sm:$0xff]
        %v2621 = vld [vmem:[%s775 + $0x20] sm:$0xff]
        %v2622 = vld [vmem:[%s775 + $0x28] sm:$0xff]
        %v2623 = vld [vmem:[%s775 + $0x30] sm:$0xff]
        %v2624 = vld [vmem:[%s775 + $0x38] sm:$0xff]
        %v2625 = vld [vmem:[%s775 + $0x40] sm:$0xff]
        %v2626 = vld [vmem:[%s775 + $0x48] sm:$0xff]
        %v2627 = vld [vmem:[%s775 + $0x50] sm:$0xff]
        %v2628 = vld [vmem:[%s775 + $0x58] sm:$0xff]
        %v2629 = vld [vmem:[%s775 + $0x60] sm:$0xff]
        %v2630 = vld [vmem:[%s775 + $0x68] sm:$0xff]
        %v2631 = vld [vmem:[%s775 + $0x70] sm:$0xff]
        %v2632 = vld [vmem:[%s775 + $0x78] sm:$0xff]
        %v2633 = vld [vmem:[%s920] sm:$0x3]
        %v2635 = vperm.slane %v2633, 0
        %v2636 = vperm.slane %v2633, 1
        %v2655 = vunpack.c.l.b16 %v2617
        %v2656 = vunpack.c.h.b16 %v2617
        %v2657 = vunpack.c.l.b16 %v2618
        %v2658 = vunpack.c.h.b16 %v2618
        %v2659 = vunpack.c.l.b16 %v2619
        %v2660 = vunpack.c.h.b16 %v2619
        %v2661 = vunpack.c.l.b16 %v2620
        %v2662 = vunpack.c.h.b16 %v2620
        %v2663 = vunpack.c.l.b16 %v2621
        %v2664 = vunpack.c.h.b16 %v2621
        %v2665 = vunpack.c.l.b16 %v2622
        %v2666 = vunpack.c.h.b16 %v2622
        %v2667 = vunpack.c.l.b16 %v2623
        %v2668 = vunpack.c.h.b16 %v2623
        %v2669 = vunpack.c.l.b16 %v2624
        %v2670 = vunpack.c.h.b16 %v2624
        %v2671 = vunpack.c.l.b16 %v2625
        %v2672 = vunpack.c.h.b16 %v2625
        %v2673 = vunpack.c.l.b16 %v2626
        %v2674 = vunpack.c.h.b16 %v2626
        %v2675 = vunpack.c.l.b16 %v2627
        %v2676 = vunpack.c.h.b16 %v2627
        %v2677 = vunpack.c.l.b16 %v2628
        %v2678 = vunpack.c.h.b16 %v2628
        %v2679 = vunpack.c.l.b16 %v2629
        %v2680 = vunpack.c.h.b16 %v2629
        %v2681 = vunpack.c.l.b16 %v2630
        %v2682 = vunpack.c.h.b16 %v2630
        %v2683 = vunpack.c.l.b16 %v2631
        %v2684 = vunpack.c.h.b16 %v2631
        %v2685 = vunpack.c.l.b16 %v2632
        %v2686 = vunpack.c.h.b16 %v2632
        %v2687 = vpack.c.b16 %v2657, %v2655
        %v2688 = vpack.c.b16 %v2658, %v2656
        %v2689 = vpack.c.b16 %v2661, %v2659
        %v2690 = vpack.c.b16 %v2662, %v2660
        %v2691 = vpack.c.b16 %v2665, %v2663
        %v2692 = vpack.c.b16 %v2666, %v2664
        %v2693 = vpack.c.b16 %v2669, %v2667
        %v2694 = vpack.c.b16 %v2670, %v2668
        %v2695 = vpack.c.b16 %v2673, %v2671
        %v2696 = vpack.c.b16 %v2674, %v2672
        %v2697 = vpack.c.b16 %v2677, %v2675
        %v2698 = vpack.c.b16 %v2678, %v2676
        %v2699 = vpack.c.b16 %v2681, %v2679
        %v2700 = vpack.c.b16 %v2682, %v2680
        %v2701 = vpack.c.b16 %v2685, %v2683
        %v2702 = vpack.c.b16 %v2686, %v2684
        %2719 = vmatpush.bf16.msra.mxu0 %v2701
        %2720 = vmatpush.bf16.msra.mxu0 %v2699
        %2721 = vmatpush.bf16.msra.mxu0 %v2697
        %2722 = vmatpush.bf16.msra.mxu0 %v2695
        %2723 = vmatpush.bf16.msra.mxu0 %v2693
        %2724 = vmatpush.bf16.msra.mxu0 %v2691
        %2725 = vmatpush.bf16.msra.mxu0 %v2689
        %2726 = vmatpush.bf16.msra.mxu0 %v2687
        %2727 = vmatmul.bf16.gmra.mxu0 %v2616
        %v2728 = vpop.f32.mrf.mxu0
        %v2729 = vadd.f32 %v2635, %v2728
        %v2730 = vpop.f32.mrf.mxu0
        %v2731 = vadd.f32 %v2635, %v2730
        %2732 = vdwg.mxu0
        %2733 = vmatpush.bf16.msra.mxu0 %v2702
        %2734 = vmatpush.bf16.msra.mxu0 %v2700
        %2735 = vmatpush.bf16.msra.mxu0 %v2698
        %2736 = vmatpush.bf16.msra.mxu0 %v2696
        %2737 = vmatpush.bf16.msra.mxu0 %v2694
        %2738 = vmatpush.bf16.msra.mxu0 %v2692
        %2739 = vmatpush.bf16.msra.mxu0 %v2690
        %2740 = vmatpush.bf16.msra.mxu0 %v2688
        %2741 = vmatmul.bf16.gmra.mxu0 %v2616
        %v2742 = vpop.f32.mrf.mxu0
        %v2743 = vadd.f32 %v2636, %v2742
        %v2744 = vpop.f32.mrf.mxu0
        %v2745 = vadd.f32 %v2636, %v2744
        %2746 = vdwg.mxu0
        %v2747 = vmax.f32 %v2729, 0.0
        %v2748 = vmax.f32 %v2743, 0.0
        %v2749 = vmax.f32 %v2731, 0.0
        %v2750 = vmax.f32 %v2745, 0.0
        %v2751 = vpack.c.bf16 %v2749, %v2747
        %v2752 = vpack.c.bf16 %v2750, %v2748
        %v2753 = vld [vmem:[%s785] sm:$0xf]
        %v2754 = vld [vmem:[%s785 + $0x4] sm:$0xf]
        %v2755 = vld [vmem:[%s785 + $0x8] sm:$0xf]
        %v2756 = vld [vmem:[%s785 + $0xc] sm:$0xf]
        %v2757 = vld [vmem:[%s785 + $0x10] sm:$0xf]
        %v2758 = vld [vmem:[%s785 + $0x14] sm:$0xf]
        %v2759 = vld [vmem:[%s785 + $0x18] sm:$0xf]
        %v2760 = vld [vmem:[%s785 + $0x1c] sm:$0xf]
        %v2761 = vld [vmem:[%s785 + $0x20] sm:$0xf]
        %v2762 = vld [vmem:[%s785 + $0x24] sm:$0xf]
        %v2763 = vld [vmem:[%s785 + $0x28] sm:$0xf]
        %v2764 = vld [vmem:[%s785 + $0x2c] sm:$0xf]
        %v2765 = vld [vmem:[%s785 + $0x30] sm:$0xf]
        %v2766 = vld [vmem:[%s785 + $0x34] sm:$0xf]
        %v2767 = vld [vmem:[%s785 + $0x38] sm:$0xf]
        %v2768 = vld [vmem:[%s785 + $0x3c] sm:$0xf]
        %v2769 = vld [vmem:[%s785 + $0x40] sm:$0xf]
        %v2770 = vld [vmem:[%s785 + $0x44] sm:$0xf]
        %v2771 = vld [vmem:[%s785 + $0x48] sm:$0xf]
        %v2772 = vld [vmem:[%s785 + $0x4c] sm:$0xf]
        %v2773 = vld [vmem:[%s785 + $0x50] sm:$0xf]
        %v2774 = vld [vmem:[%s785 + $0x54] sm:$0xf]
        %v2775 = vld [vmem:[%s785 + $0x58] sm:$0xf]
        %v2776 = vld [vmem:[%s785 + $0x5c] sm:$0xf]
        %v2777 = vld [vmem:[%s785 + $0x60] sm:$0xf]
        %v2778 = vld [vmem:[%s785 + $0x64] sm:$0xf]
        %v2779 = vld [vmem:[%s785 + $0x68] sm:$0xf]
        %v2780 = vld [vmem:[%s785 + $0x6c] sm:$0xf]
        %v2781 = vld [vmem:[%s785 + $0x70] sm:$0xf]
        %v2782 = vld [vmem:[%s785 + $0x74] sm:$0xf]
        %v2783 = vld [vmem:[%s785 + $0x78] sm:$0xf]
        %v2784 = vld [vmem:[%s785 + $0x7c] sm:$0xf]
        %v2785 = vperm.slane %v944, 7
        %v2818 = vunpack.c.l.b16 %v2753
        %v2819 = vunpack.c.l.b16 %v2754
        %v2820 = vunpack.c.l.b16 %v2755
        %v2821 = vunpack.c.l.b16 %v2756
        %v2822 = vunpack.c.l.b16 %v2757
        %v2823 = vunpack.c.l.b16 %v2758
        %v2824 = vunpack.c.l.b16 %v2759
        %v2825 = vunpack.c.l.b16 %v2760
        %v2826 = vunpack.c.l.b16 %v2761
        %v2827 = vunpack.c.l.b16 %v2762
        %v2828 = vunpack.c.l.b16 %v2763
        %v2829 = vunpack.c.l.b16 %v2764
        %v2830 = vunpack.c.l.b16 %v2765
        %v2831 = vunpack.c.l.b16 %v2766
        %v2832 = vunpack.c.l.b16 %v2767
        %v2833 = vunpack.c.l.b16 %v2768
        %v2834 = vunpack.c.l.b16 %v2769
        %v2835 = vunpack.c.l.b16 %v2770
        %v2836 = vunpack.c.l.b16 %v2771
        %v2837 = vunpack.c.l.b16 %v2772
        %v2838 = vunpack.c.l.b16 %v2773
        %v2839 = vunpack.c.l.b16 %v2774
        %v2840 = vunpack.c.l.b16 %v2775
        %v2841 = vunpack.c.l.b16 %v2776
        %v2842 = vunpack.c.l.b16 %v2777
        %v2843 = vunpack.c.l.b16 %v2778
        %v2844 = vunpack.c.l.b16 %v2779
        %v2845 = vunpack.c.l.b16 %v2780
        %v2846 = vunpack.c.l.b16 %v2781
        %v2847 = vunpack.c.l.b16 %v2782
        %v2848 = vunpack.c.l.b16 %v2783
        %v2849 = vunpack.c.l.b16 %v2784
        %v2850 = vpack.c.b16 %v2819, %v2818
        %v2851 = vpack.c.b16 %v2821, %v2820
        %v2852 = vpack.c.b16 %v2823, %v2822
        %v2853 = vpack.c.b16 %v2825, %v2824
        %v2854 = vpack.c.b16 %v2827, %v2826
        %v2855 = vpack.c.b16 %v2829, %v2828
        %v2856 = vpack.c.b16 %v2831, %v2830
        %v2857 = vpack.c.b16 %v2833, %v2832
        %v2858 = vpack.c.b16 %v2835, %v2834
        %v2859 = vpack.c.b16 %v2837, %v2836
        %v2860 = vpack.c.b16 %v2839, %v2838
        %v2861 = vpack.c.b16 %v2841, %v2840
        %v2862 = vpack.c.b16 %v2843, %v2842
        %v2863 = vpack.c.b16 %v2845, %v2844
        %v2864 = vpack.c.b16 %v2847, %v2846
        %v2865 = vpack.c.b16 %v2849, %v2848
        %2882 = vmatpush.bf16.msra.mxu0 %v2857
        %2883 = vmatpush.bf16.msra.mxu0 %v2856
        %2884 = vmatpush.bf16.msra.mxu0 %v2855
        %2885 = vmatpush.bf16.msra.mxu0 %v2854
        %2886 = vmatpush.bf16.msra.mxu0 %v2853
        %2887 = vmatpush.bf16.msra.mxu0 %v2852
        %2888 = vmatpush.bf16.msra.mxu0 %v2851
        %2889 = vmatpush.bf16.msra.mxu0 %v2850
        %2890 = vmatmul.bf16.gmra.mxu0 %v2751
        %v2891 = vpop.f32.mrf.mxu0
        %v2892 = vadd.f32 %v2785, %v2891
        %v2893 = vpop.f32.mrf.mxu0
        %v2894 = vadd.f32 %v2785, %v2893
        %2895 = vdwg.mxu0
        %2896 = vmatpush.bf16.msra.mxu0 %v2865
        %2897 = vmatpush.bf16.msra.mxu0 %v2864
        %2898 = vmatpush.bf16.msra.mxu0 %v2863
        %2899 = vmatpush.bf16.msra.mxu0 %v2862
        %2900 = vmatpush.bf16.msra.mxu0 %v2861
        %2901 = vmatpush.bf16.msra.mxu0 %v2860
        %2902 = vmatpush.bf16.msra.mxu0 %v2859
        %2903 = vmatpush.bf16.msra.mxu0 %v2858
        %2904 = vmatmul.bf16.gmra.mxu0 %v2752
        %v2905 = vpop.f32.mrf.mxu0
        %v2906 = vadd.f32 %v2892, %v2905
        %v2907 = vpop.f32.mrf.mxu0
        %v2908 = vadd.f32 %v2894, %v2907
        %2909 = vdwg.mxu0
        %v2910 = vadd.f32 %v2906, %v2614
        %v2911 = vadd.f32 %v2908, %v2615
        %2912 = vadd.xlane.f32.xlu0 %v2910
        %v2913 = vpop.xlane.xlu0 %2912
        %2914 = vadd.xlane.f32.xlu0 %v2911
        %v2915 = vpop.xlane.xlu0 %2914
        %v2916 = vmul.f32 %v2913, %v1744
        %v2917 = vmul.f32 %v2915, %v1744
        %v2918 = vsub.f32 %v2910, %v2916
        %v2919 = vsub.f32 %v2911, %v2917
        %v2920 = vmul.f32 %v2918, %v2918
        %v2921 = vmul.f32 %v2919, %v2919
        %2922 = vadd.xlane.f32.xlu0 %v2920
        %v2923 = vpop.xlane.xlu0 %2922
        %2924 = vadd.xlane.f32.xlu0 %v2921
        %v2925 = vpop.xlane.xlu0 %2924
        %v2926 = vmul.f32 %v2923, %v1744
        %v2927 = vmul.f32 %v2925, %v1744
        %v2928 = vadd.f32 %v2926, 1e-12
        %v2929 = vadd.f32 %v2927, 1e-12
        %v2930 = vrsqrt.pop %v2928
        %v2931 = vmul.f32 %v2930, %v2928
        %v2932 = vmul.f32 %v2931, %v2930
        %v2933 = vmul.f32 0.5, %v2932
        %v2934 = vsub.f32 1.5, %v2933
        %v2935 = vmul.f32 %v2930, %v2934
        %vm2936 = vweird.f32 %v2928
        %vm2937 = vweird.f32 %v2930
        %vm2938 = vmor %vm2936, %vm2937
        %v2939 = vsel %vm2938, %v2930, %v2935
        %v2940 = vrsqrt.pop %v2929
        %v2941 = vmul.f32 %v2940, %v2929
        %v2942 = vmul.f32 %v2941, %v2940
        %v2943 = vmul.f32 0.5, %v2942
        %v2944 = vsub.f32 1.5, %v2943
        %v2945 = vmul.f32 %v2940, %v2944
        %vm2946 = vweird.f32 %v2929
        %vm2947 = vweird.f32 %v2940
        %vm2948 = vmor %vm2946, %vm2947
        %v2949 = vsel %vm2948, %v2940, %v2945
        %v2950 = vmul.f32 %v2918, %v2939
        %v2951 = vmul.f32 %v2919, %v2949
        %v2952 = vperm.slane %v945, 0
        %v2953 = vmul.f32 %v2952, %v2950
        %v2954 = vmul.f32 %v2952, %v2951
        %v2955 = vperm.slane %v945, 1
        %v2956 = vadd.f32 %v2953, %v2955
        %v2957 = vadd.f32 %v2954, %v2955
        %2958 = vst [vmem:[#allocation16] sm:$0xff] %v2956
        %2959 = vst [vmem:[#allocation16 + $0x8] sm:$0xff] %v2957
        // Predicated region
        $region117: #{tpu_custom_call.1} parent=79 // pred_check
          %p2960 = pneg %p460
        $region118: #{tpu_custom_call.1} parent=79 // pred_check_branch
          %2962 = sbr.rel (%p2960) target = $region120
        $region119: #{tpu_custom_call.1} parent=79 // pred_region
          %s2963 = smul.u32 2, %s44
          %2965 = vsyncadd [#allocation4], 0
          %s2966 = smul.addr %s2963, 8
          %s2967 = scalar_lea.hbm %s15, %s2966
          %s2968 = sshll.u32 [#allocation16], 4
          %s2969 = int_to_ptr.vmem [resolvable:$true] %s2968
          %s2970 = sshll.u32 %s2967, 4
          %s2971 = int_to_ptr.hbm [resolvable:$true] %s2970
          %2976 = dma.vmem_to_hbm [thread:$0]  %s2969, 256, %s2971, [#allocation4], 128, 128, 8
        $region120: #{tpu_custom_call.1} parent=79 // pred_fallthru
          _
        // Predicated region
        $region121: #{tpu_custom_call.1} parent=79 // pred_check
          %p2977 = pneg %p460
        $region122: #{tpu_custom_call.1} parent=79 // pred_check_branch
          %2979 = sbr.rel (%p2977) target = $region124
        $region123: #{tpu_custom_call.1} parent=79 // pred_region
          %2981 = dma.done [#allocation4], 256
        $region124: #{tpu_custom_call.1} parent=79 // pred_fallthru
          _
      $region80: #{tpu_custom_call.1} parent=5 // pred_fallthru
        _
      %p2982 = scmp.le.s32.totalorder 2, %s35
      // Predicated region
      $region125: #{tpu_custom_call.1} parent=5 // pred_check
        %p2983 = pneg %p2982
      $region126: #{tpu_custom_call.1} parent=5 // pred_check_branch
        %2985 = sbr.rel (%p2983) target = $region128
      $region127: #{tpu_custom_call.1} parent=5 // pred_region
        %s2986 = ssub.s32 %s35, 2
      $region128: #{tpu_custom_call.1} parent=5 // pred_fallthru
        _
    $region6: #{tpu_custom_call.1} parent=1 // loop_footer
      %s39 = sadd.s32 1, %s35
    $region7: #{tpu_custom_call.1} parent=1 // loop_footer_branch
      %34 = sbr.rel target = $region3
    $region8: #{tpu_custom_call.1} parent=1 // loop_exit
      _
    %2987 = vsyncpa [#allocation3], 1
    %s2988 = scalar_lea.sflag [#allocation3], 1
    %2989 = vsyncpa %s2988, 1
    %2990 = vsyncpa [#allocation6], 1
    %s2991 = scalar_lea.sflag [#allocation6], 1
    %2992 = vsyncpa %s2991, 1
    %2993 = vsyncpa [#allocation9], 1
    %s2994 = scalar_lea.sflag [#allocation9], 1
    %2995 = vsyncpa %s2994, 1
    %2996 = vsyncpa [#allocation12], 1
    %s2997 = scalar_lea.sflag [#allocation12], 1
    %2998 = vsyncpa %s2997, 1
    %2999 = vsyncpa [#allocation15], 1
    %s3000 = scalar_lea.sflag [#allocation15], 1
    %3001 = vsyncpa %s3000, 1
    %3002 = vsyncpa [#allocation4], 1
    %s3003 = scalar_lea.sflag [#allocation4], 1
    %3004 = vsyncpa %s3003, 1

</llo_original>
